<compile_context>
chip_gen: v6e
topology: v6e:2x2x1
jax: 0.10.0
libtpu: 0.0.40
codegen_flags: <defaults>
</compile_context>

<pallas_src>
import functools

import jax
import jax.numpy as jnp
from jax.experimental import pallas as pl
from jax.experimental.pallas import tpu as pltpu

EPS = 1e-5  # nn.BatchNorm2d default eps


# --------------------------- hardware-aware sizing ---------------------------

@functools.lru_cache(maxsize=None)
def _vmem_capacity_bytes():
    """Physical VMEM of the attached TPU generation (fallback: 64 MiB = v7x)."""
    try:
        cap = int(getattr(pltpu.get_tpu_info(), "vmem_capacity_bytes", 0))
    except Exception:
        cap = 0
    return cap if cap > 0 else 64 * 1024 * 1024


def _vmem_limit_bytes():
    # Generation-aware scoped-VMEM limit: ~3/4 of physical (96 MiB on
    # v5e/v6e's 128 MiB, 48 MiB on v7x's 64 MiB) instead of a fixed 32 MiB.
    return int(_vmem_capacity_bytes() * 3 // 4)


def _row_tile(rows, lanes, n_streams):
    """Row-block size for the lane-dense elementwise tail."""
    budget = _vmem_capacity_bytes() // 16          # ~4-8 MiB of live blocks
    per_row = lanes * 4 * n_streams * 2            # f32, double-buffered
    tr = max(8, (budget // max(per_row, 1)) // 8 * 8)
    return rows if tr >= rows else tr


# ------------------------------ Pallas kernels -------------------------------

def _conv_stats_kernel(*refs, kh, kw, stride, pad, relu, in_affine, in_stats,
                       cross, hi, wi):
    """Direct kh x kw conv of one image (taps folded into ONE MXU matmul) with
    BatchNorm batch statistics accumulated in the epilogue.

    Inputs  : x (1,Hp,Wp,Cin) f32, w (kh*kw*Cin,Cout) bf16, b (1,Cout) f32,
              [iscale, ishift (1,Cin) f32]  if in_affine,
              [s (1,Ho,Wo,Cout) f32]        if cross.
    Outputs : o (1,Ho,Wo,Cout) f32,
              sum, sq (1,1,Cout)   per-channel sum / sum-sq of o,
              [sh (1,1,Cout)]      per-channel sum of s*o          if cross,
              [xsum, xsq (1,1,Cin)] per-channel sum / sum-sq of x  if in_stats.
    Stat blocks are resident across grid axis 1 ("arbitrary") and kept per
    group along grid axis 0 ("parallel") so both v7x TensorCores contribute.
    """
    it = iter(refs)
    x_ref, w_ref, b_ref = next(it), next(it), next(it)
    iscale_ref = ishift_ref = s_ref = None
    if in_affine:
        iscale_ref, ishift_ref = next(it), next(it)
    if cross:
        s_ref = next(it)
    o_ref, sum_ref, sq_ref = next(it), next(it), next(it)
    sh_ref = next(it) if cross else None
    xsum_ref = xsq_ref = None
    if in_stats:
        xsum_ref, xsq_ref = next(it), next(it)

    @pl.when(pl.program_id(1) == 0)
    def _():
        sum_ref[...] = jnp.zeros_like(sum_ref)
        sq_ref[...] = jnp.zeros_like(sq_ref)
        if cross:
            sh_ref[...] = jnp.zeros_like(sh_ref)
        if in_stats:
            xsum_ref[...] = jnp.zeros_like(xsum_ref)
            xsq_ref[...] = jnp.zeros_like(xsq_ref)

    _, Ho, Wo, Cout = o_ref.shape
    x = x_ref[0]                                   # (Hp, Wp, Cin) f32
    Hp, Wp, Cin = x.shape

    if in_stats:
        # Per-channel sums of the (identity-)shortcut input; zero halo adds 0.
        xs = jnp.sum(x, axis=0)                    # (Wp, Cin)
        xq = jnp.sum(x * x, axis=0)
        xsum_ref[0] += jnp.sum(xs, axis=0, keepdims=True)
        xsq_ref[0] += jnp.sum(xq, axis=0, keepdims=True)

    if in_affine:
        # Fused BN-apply + ReLU of the producing layer.  An iota-generated
        # interior mask re-zeroes the halo (relu(shift) != 0 there) so the
        # conv still sees exact zero padding; no HBM mask array needed.
        y_aff = jnp.maximum(x * iscale_ref[0] + ishift_ref[0], 0.0)
        if pad > 0:
            r = jax.lax.broadcasted_iota(jnp.int32, (Hp, Wp, 1), 0)
            c = jax.lax.broadcasted_iota(jnp.int32, (Hp, Wp, 1), 1)
            inside = ((r >= pad) & (r < pad + hi) &
                      (c >= pad) & (c < pad + wi))
            y_aff = jnp.where(inside, y_aff, 0.0)
        x = y_aff

    if stride == 1:
        def tap(ky, kx):
            return x[ky:ky + Ho, kx:kx + Wo, :]
    else:
        # Extract the stride x stride parity planes once (4 strided slices
        # instead of one per tap); every tap is then a stride-1 slice.
        planes = [[jax.lax.slice(x, (p, q, 0), (Hp, Wp, Cin),
                                 (stride, stride, 1))
                   for q in range(stride)] for p in range(stride)]

        def tap(ky, kx):
            pp = planes[ky % stride][kx % stride]
            return pp[ky // stride:ky // stride + Ho,
                      kx // stride:kx // stride + Wo, :]

    taps = [tap(t // kw, t % kw) for t in range(kh * kw)]   # (Ho, Wo, Cin) each
    patch = taps[0] if len(taps) == 1 else jnp.concatenate(taps, axis=-1)
    patch = patch.reshape(Ho * Wo, kh * kw * Cin).astype(jnp.bfloat16)

    # One MXU matmul with K = kh*kw*Cin; bf16 inputs, f32 accumulation.
    acc = jnp.dot(patch, w_ref[...], preferred_element_type=jnp.float32)
    y = acc + b_ref[...]                                     # (Ho*Wo, Cout)
    if relu:
        y = jnp.maximum(y, 0.0)

    sum_ref[0] += jnp.sum(y, axis=0, keepdims=True)
    sq_ref[0] += jnp.sum(y * y, axis=0, keepdims=True)
    if cross:
        s = s_ref[0].reshape(Ho * Wo, Cout)
        sh_ref[0] += jnp.sum(s * y, axis=0, keepdims=True)

    # NOTE: with the toy Cout=8 the channel (lane) dim is sparse; at real
    # SatelliteNet channel counts (>=128) this store is already lane-dense.
    o_ref[0] = y.reshape(Ho, Wo, Cout)


def _res_apply_kernel(s_ref, h_ref, a_ref, g_ref, t_ref, o_ref):
    # out = relu((sc_scale*s + sc_shift + h) * scale3 + shift3), with the
    # per-channel affines pre-folded and tiled to the lane-dense Wo*C layout.
    o_ref[...] = jnp.maximum(
        s_ref[...] * a_ref[...] + h_ref[...] * g_ref[...] + t_ref[...], 0.0)


# -------------------------------- wrappers -----------------------------------

def conv_bn_stats(x4d, w, b, *, kh, kw, stride, pad, relu,
                  in_scale=None, in_shift=None, s4d=None, input_stats=False):
    """relu?(conv(x) + b) (NHWC) with fused BN statistics in the epilogue.

    w is PyTorch layout [Cout, Cin, kh, kw].  If in_scale/in_shift are given,
    the input is first mapped through relu(x*in_scale + in_shift) (fused
    BN-apply + ReLU of the producing layer).  If s4d is given, the cross term
    sum(s*out) per channel is also accumulated (BN of the residual sum).  If
    input_stats, per-channel sum / sum-sq of x itself are also returned.
    """
    N, Hi, Wi, Cin = x4d.shape
    Cout = w.shape[0]
    Ho = (Hi + 2 * pad - kh) // stride + 1
    Wo = (Wi + 2 * pad - kw) // stride + 1
    Hp, Wp = Hi + 2 * pad, Wi + 2 * pad

    if pad > 0:
        x4d = jnp.pad(x4d, ((0, 0), (pad, pad), (pad, pad), (0, 0)))

    # (Cout, Cin, kh, kw) -> (kh*kw*Cin, Cout), tap-major / cin-minor, bf16.
    w_flat = jnp.transpose(w, (2, 3, 1, 0)).reshape(kh * kw * Cin, Cout)
    w_flat = w_flat.astype(jnp.bfloat16)
    b2 = b.reshape(1, Cout).astype(jnp.float32)

    in_affine = in_scale is not None
    cross = s4d is not None

    # Per-group partial stats: leading "parallel" grid axis (2-way when the
    # batch allows) keeps both v7x TensorCores busy; wrapper sums partials.
    G = 2 if (N >= 2 and N % 2 == 0) else 1
    nb = N // G

    args = [x4d, w_flat, b2]
    in_specs = [
        pl.BlockSpec((1, Hp, Wp, Cin), lambda g, n, nb=nb: (g * nb + n, 0, 0, 0)),
        pl.BlockSpec((kh * kw * Cin, Cout), lambda g, n: (0, 0)),
        pl.BlockSpec((1, Cout), lambda g, n: (0, 0)),
    ]
    if in_affine:
        args += [in_scale.reshape(1, Cin).astype(jnp.float32),
                 in_shift.reshape(1, Cin).astype(jnp.float32)]
        in_specs += [pl.BlockSpec((1, Cin), lambda g, n: (0, 0)),
                     pl.BlockSpec((1, Cin), lambda g, n: (0, 0))]
    if cross:
        args.append(s4d)
        in_specs.append(pl.BlockSpec((1, Ho, Wo, Cout),
                                     lambda g, n, nb=nb: (g * nb + n, 0, 0, 0)))

    stat_c = pl.BlockSpec((1, 1, Cout), lambda g, n: (g, 0, 0))
    out_shapes = [jax.ShapeDtypeStruct((N, Ho, Wo, Cout), jnp.float32),
                  jax.ShapeDtypeStruct((G, 1, Cout), jnp.float32),
                  jax.ShapeDtypeStruct((G, 1, Cout), jnp.float32)]
    out_specs = [pl.BlockSpec((1, Ho, Wo, Cout),
                              lambda g, n, nb=nb: (g * nb + n, 0, 0, 0)),
                 stat_c, stat_c]
    if cross:
        out_shapes.append(jax.ShapeDtypeStruct((G, 1, Cout), jnp.float32))
        out_specs.append(stat_c)
    if input_stats:
        stat_i = pl.BlockSpec((1, 1, Cin), lambda g, n: (g, 0, 0))
        out_shapes += [jax.ShapeDtypeStruct((G, 1, Cin), jnp.float32)] * 2
        out_specs += [stat_i, stat_i]

    kern = functools.partial(_conv_stats_kernel, kh=kh, kw=kw, stride=stride,
                             pad=pad, relu=relu, in_affine=in_affine,
                             in_stats=input_stats, cross=cross, hi=Hi, wi=Wi)
    outs = pl.pallas_call(
        kern,
        out_shape=tuple(out_shapes),
        grid=(G, nb),
        in_specs=in_specs,
        out_specs=tuple(out_specs),
        compiler_params=pltpu.CompilerParams(
            dimension_semantics=("parallel", "arbitrary"),
            vmem_limit_bytes=_vmem_limit_bytes()),
    )(*args)

    out = outs[0]
    stats = {"sum": jnp.sum(outs[1], axis=0),      # (1, Cout)
             "sq": jnp.sum(outs[2], axis=0)}
    i = 3
    if cross:
        stats["sh"] = jnp.sum(outs[i], axis=0)
        i += 1
    if input_stats:
        stats["xsum"] = jnp.sum(outs[i], axis=0)
        stats["xsq"] = jnp.sum(outs[i + 1], axis=0)
    return out, stats


def residual_tail(s2d, h2d, a_row, g_row, t_row):
    """Lane-dense fused tail: relu(s*a + h*g + t) over (rows, Wo*C) blocks."""
    R, L = s2d.shape
    tr = _row_tile(R, L, n_streams=3)
    img = pl.BlockSpec((tr, L), lambda i: (i, 0))
    vec = pl.BlockSpec((1, L), lambda i: (0, 0))
    return pl.pallas_call(
        _res_apply_kernel,
        out_shape=jax.ShapeDtypeStruct((R, L), jnp.float32),
        grid=(pl.cdiv(R, tr),),
        in_specs=[img, img, vec, vec, vec],
        out_specs=img,
        compiler_params=pltpu.CompilerParams(
            dimension_semantics=("parallel",),
            vmem_limit_bytes=_vmem_limit_bytes()),
    )(s2d, h2d, a_row, g_row, t_row)


def _bn_scale_shift(s, q, count, gamma, beta):
    """Train-mode BN: batch mean / biased variance -> per-channel scale/shift."""
    mean = s / count
    var = jnp.maximum(q / count - mean * mean, 0.0)
    scale = gamma.reshape(1, -1) * jax.lax.rsqrt(var + EPS)
    shift = beta.reshape(1, -1) - mean * scale
    return scale.astype(jnp.float32), shift.astype(jnp.float32)


# ---------------------------- ResidualBlock forward --------------------------

def residual_block_forward(x_nchw, params, *, in_channels, out_channels,
                           downsample):
    x = jnp.transpose(x_nchw, (0, 2, 3, 1)).astype(jnp.float32)  # NCHW -> NHWC
    N, H, W, _ = x.shape
    stride = 2 if downsample else 1
    Ho = (H + 2 - 3) // stride + 1
    Wo = (W + 2 - 3) // stride + 1
    M = N * Ho * Wo
    C = out_channels
    conv_shortcut = downsample or (in_channels != out_channels)

    # conv1 -> ReLU; BN1 stats on the post-ReLU output; for the identity
    # shortcut also accumulate sum/sq of x itself (needed for BN3).
    a1, st1 = conv_bn_stats(x, params["conv1_w"], params["conv1_b"],
                            kh=3, kw=3, stride=stride, pad=1, relu=True,
                            input_stats=not conv_shortcut)
    scale1, shift1 = _bn_scale_shift(st1["sum"], st1["sq"], M,
                                     params["bn1_g"], params["bn1_b"])

    # shortcut branch (raw conv output; its BN is folded into the tail)
    if conv_shortcut:
        sraw, sts = conv_bn_stats(x, params["sc_w"], params["sc_b"],
                                  kh=1, kw=1, stride=stride, pad=0, relu=False)
        sc_scale, sc_shift = _bn_scale_shift(sts["sum"], sts["sq"], M,
                                             params["sc_bn_g"],
                                             params["sc_bn_b"])
        ssum, ssq = sts["sum"], sts["sq"]
    else:
        sraw = x
        sc_scale = jnp.ones((1, C), jnp.float32)
        sc_shift = jnp.zeros((1, C), jnp.float32)
        ssum, ssq = st1["xsum"], st1["xsq"]

    # conv2 with fused BN1-apply + ReLU on its input, ReLU on its output, and
    # the BN3 cross-term statistics (h, h^2, s*h) accumulated in the epilogue
    # -> no separate HBM stats pass over the residual sum.
    h2, st2 = conv_bn_stats(a1, params["conv2_w"], params["conv2_b"],
                            kh=3, kw=3, stride=1, pad=1, relu=True,
                            in_scale=scale1, in_shift=shift1, s4d=sraw)

    # BN3 statistics of z = a*s + b + h, recovered algebraically.
    a, bsh = sc_scale, sc_shift
    hsum, hsq, shsum = st2["sum"], st2["sq"], st2["sh"]
    zsum = a * ssum + bsh * M + hsum
    zsq = (a * a * ssq + bsh * bsh * M + hsq
           + 2.0 * a * bsh * ssum + 2.0 * a * shsum + 2.0 * bsh * hsum)
    scale3, shift3 = _bn_scale_shift(zsum, zsq, M,
                                     params["bn3_g"], params["bn3_b"])

    # Fused tail relu((a*s + b + h)*scale3 + shift3) in a lane-dense
    # (N*Ho, Wo*C) layout; per-channel affines pre-folded and tiled to Wo*C.
    L = Wo * C
    s2d = sraw.reshape(N * Ho, L)
    h2d = h2.reshape(N * Ho, L)
    a_row = jnp.tile(a * scale3, (1, Wo))
    g_row = jnp.tile(scale3, (1, Wo))
    t_row = jnp.tile(bsh * scale3 + shift3, (1, Wo))
    out2d = residual_tail(s2d, h2d, a_row, g_row, t_row)
    out = out2d.reshape(N, Ho, Wo, C)
    return jnp.transpose(out, (0, 3, 1, 2))                     # NHWC -> NCHW


# ------------------------- pure-JAX reference (checking) ---------------------

def _reference_forward(x_nchw, params, *, in_channels, out_channels,
                       downsample):
    x = jnp.transpose(x_nchw, (0, 2, 3, 1)).astype(jnp.float32)
    strides = (2, 2) if downsample else (1, 1)

    def conv(inp, w, b, st, padding):
        wt = jnp.transpose(w, (2, 3, 1, 0)).astype(jnp.bfloat16)   # HWIO
        y = jax.lax.conv_general_dilated(
            inp.astype(jnp.bfloat16), wt, window_strides=st, padding=padding,
            dimension_numbers=("NHWC", "HWIO", "NHWC"),
            preferred_element_type=jnp.float32)
        return y + b.reshape(1, 1, 1, -1)

    def bn(y, gamma, beta):
        mean = jnp.mean(y, axis=(0, 1, 2), keepdims=True)
        var = jnp.mean(y * y, axis=(0, 1, 2), keepdims=True) - mean * mean
        return (gamma.reshape(1, 1, 1, -1) * (y - mean)
                * jax.lax.rsqrt(var + EPS) + beta.reshape(1, 1, 1, -1))

    a1 = jax.nn.relu(conv(x, params["conv1_w"], params["conv1_b"],
                          strides, ((1, 1), (1, 1))))
    a1n = jax.nn.relu(bn(a1, params["bn1_g"], params["bn1_b"]))
    h = jax.nn.relu(conv(a1n, params["conv2_w"], params["conv2_b"],
                         (1, 1), ((1, 1), (1, 1))))
    if downsample or in_channels != out_channels:
        s = conv(x, params["sc_w"], params["sc_b"], strides, ((0, 0), (0, 0)))
        s = bn(s, params["sc_bn_g"], params["sc_bn_b"])
    else:
        s = x
    out = jax.nn.relu(bn(s + h, params["bn3_g"], params["bn3_b"]))
    return jnp.transpose(out, (0, 3, 1, 2))


# ------------------------------------ demo -----------------------------------

def init_params(key, in_channels, out_channels):
    ks = jax.random.split(key, 12)
    f32 = jnp.float32
    return {
        "conv1_w": 0.1 * jax.random.normal(ks[0], (out_channels, in_channels, 3, 3), f32),
        "conv1_b": 0.05 * jax.random.normal(ks[1], (out_channels,), f32),
        "conv2_w": 0.1 * jax.random.normal(ks[2], (out_channels, out_channels, 3, 3), f32),
        "conv2_b": 0.05 * jax.random.normal(ks[3], (out_channels,), f32),
        "sc_w":    0.1 * jax.random.normal(ks[4], (out_channels, in_channels, 1, 1), f32),
        "sc_b":    0.05 * jax.random.normal(ks[5], (out_channels,), f32),
        "bn1_g":   1.0 + 0.1 * jax.random.normal(ks[6], (out_channels,), f32),
        "bn1_b":   0.1 * jax.random.normal(ks[7], (out_channels,), f32),
        "sc_bn_g": 1.0 + 0.1 * jax.random.normal(ks[8], (out_channels,), f32),
        "sc_bn_b": 0.1 * jax.random.normal(ks[9], (out_channels,), f32),
        "bn3_g":   1.0 + 0.1 * jax.random.normal(ks[10], (out_channels,), f32),
        "bn3_b":   0.1 * jax.random.normal(ks[11], (out_channels,), f32),
    }


if __name__ == "__main__":
    IN_C, OUT_C, DOWNSAMPLE = 4, 8, False   # shortcut = Conv1x1 + BN branch
    N, H, W = 2, 16, 16

    key = jax.random.PRNGKey(0)
    kx, kp = jax.random.split(key)
    x = jax.random.normal(kx, (N, IN_C, H, W), jnp.float32)
    params = init_params(kp, IN_C, OUT_C)

    fwd = jax.jit(functools.partial(residual_block_forward,
                                    in_channels=IN_C, out_channels=OUT_C,
                                    downsample=DOWNSAMPLE))
    out = jax.block_until_ready(fwd(x, params))
    assert out.shape == (N, OUT_C, H, W), out.shape
    assert bool(jnp.all(out >= 0.0))        # final ReLU

    ref = _reference_forward(x, params, in_channels=IN_C, out_channels=OUT_C,
                             downsample=DOWNSAMPLE)
    err = float(jnp.max(jnp.abs(out - ref)))
    assert err < 5e-2, f"max |pallas - reference| = {err}"
    print("KERNEL_OK")
</pallas_src>

<mosaic_0001>
module attributes {stable_mosaic.version = 11 : i64} {
  func.func @_conv_stats_kernel(%arg0: i32, %arg1: i32, %arg2: memref<1x16x16x4xf32, #tpu.memory_space<vmem>>, %arg3: memref<4x8xbf16, #tpu.memory_space<vmem>>, %arg4: memref<1x8xf32, #tpu.memory_space<vmem>>, %arg5: memref<1x16x16x8xf32, #tpu.memory_space<vmem>>, %arg6: memref<1x1x8xf32, #tpu.memory_space<vmem>>, %arg7: memref<1x1x8xf32, #tpu.memory_space<vmem>>) attributes {dimension_semantics = [#tpu.dimension_semantics<parallel>, #tpu.dimension_semantics<arbitrary>], iteration_bounds = array<i64: 2, 1>, scalar_prefetch = 0 : i64, scratch_operands = 0 : i64, tpu.core_type = #tpu.core_type<tc>, window_params = [{transform_indices = @transform_0, window_bounds = array<i64: 1, 16, 16, 4>}, {pipeline_mode = #tpu.pipeline_mode<synchronous>, transform_indices = @transform_1, window_bounds = array<i64: 4, 8>}, {pipeline_mode = #tpu.pipeline_mode<synchronous>, transform_indices = @transform_2, window_bounds = array<i64: 1, 8>}, {transform_indices = @transform_3, window_bounds = array<i64: 1, 16, 16, 8>}, {transform_indices = @transform_4, window_bounds = array<i64: 1, 1, 8>}, {transform_indices = @transform_5, window_bounds = array<i64: 1, 1, 8>}]} {
    %c0_i32 = arith.constant 0 : i32
    %0 = arith.cmpi eq, %arg1, %c0_i32 : i32
    %1 = arith.extui %0 : i1 to i32
    %c0_i32_0 = arith.constant 0 : i32
    %2 = arith.cmpi ne, %1, %c0_i32_0 : i32
    scf.if %2 {
      %cst_26 = arith.constant 0.000000e+00 : f32
      %33 = vector.broadcast %cst_26 : f32 to vector<1x1x8xf32>
      %c0_27 = arith.constant 0 : index
      %c0_28 = arith.constant 0 : index
      %c0_29 = arith.constant 0 : index
      %34 = vector.load %arg6[%c0_27, %c0_28, %c0_29] : memref<1x1x8xf32, #tpu.memory_space<vmem>>, vector<1x1x8xf32>
      tpu.vector_store %arg6[%c0_27, %c0_28, %c0_29], %33 {strides = array<i32>} : memref<1x1x8xf32, #tpu.memory_space<vmem>>, vector<1x1x8xf32>,
      %cst_30 = arith.constant 0.000000e+00 : f32
      %35 = vector.broadcast %cst_30 : f32 to vector<1x1x8xf32>
      %c0_31 = arith.constant 0 : index
      %c0_32 = arith.constant 0 : index
      %c0_33 = arith.constant 0 : index
      %36 = vector.load %arg7[%c0_31, %c0_32, %c0_33] : memref<1x1x8xf32, #tpu.memory_space<vmem>>, vector<1x1x8xf32>
      tpu.vector_store %arg7[%c0_31, %c0_32, %c0_33], %35 {strides = array<i32>} : memref<1x1x8xf32, #tpu.memory_space<vmem>>, vector<1x1x8xf32>,
    } else {
    }
    %c0 = arith.constant 0 : index
    %c0_1 = arith.constant 0 : index
    %c0_2 = arith.constant 0 : index
    %c0_3 = arith.constant 0 : index
    %3 = vector.load %arg2[%c0, %c0_1, %c0_2, %c0_3] : memref<1x16x16x4xf32, #tpu.memory_space<vmem>>, vector<1x16x16x4xf32>
    %4 = vector.shape_cast %3 : vector<1x16x16x4xf32> to vector<16x16x4xf32>
    %5 = vector.shape_cast %4 : vector<16x16x4xf32> to vector<256x4xf32>
    %6 = arith.truncf %5 : vector<256x4xf32> to vector<256x4xbf16>
    %c0_4 = arith.constant 0 : index
    %c0_5 = arith.constant 0 : index
    %7 = vector.load %arg3[%c0_4, %c0_5] : memref<4x8xbf16, #tpu.memory_space<vmem>>, vector<4x8xbf16>
    %cst = arith.constant dense<0.000000e+00> : vector<256x8xf32>
    %8 = tpu.matmul %6, %7, %cst {dimension_numbers = #tpu.dot_dimension_numbers<[1], [0], [0], [1], [0, 0, 1, 1], [], []>} : vector<256x4xbf16>, vector<4x8xbf16>, vector<256x8xf32> -> vector<256x8xf32>
    %c0_6 = arith.constant 0 : index
    %c0_7 = arith.constant 0 : index
    %9 = vector.load %arg4[%c0_6, %c0_7] : memref<1x8xf32, #tpu.memory_space<vmem>>, vector<1x8xf32>
    %10 = vector.broadcast %9 : vector<1x8xf32> to vector<256x8xf32>
    %11 = arith.addf %8, %10 : vector<256x8xf32>
    %c0_8 = arith.constant 0 : index
    %c0_9 = arith.constant 0 : index
    %c0_10 = arith.constant 0 : index
    %12 = vector.load %arg6[%c0_8, %c0_9, %c0_10] : memref<1x1x8xf32, #tpu.memory_space<vmem>>, vector<1x1x8xf32>
    %13 = vector.shape_cast %12 : vector<1x1x8xf32> to vector<1x8xf32>
    %cst_11 = arith.constant dense<0.000000e+00> : vector<8xf32>
    %14 = vector.multi_reduction <add>, %11, %cst_11 [0] : vector<256x8xf32> to vector<8xf32>
    %15 = vector.shape_cast %14 : vector<8xf32> to vector<1x8xf32>
    %16 = arith.addf %13, %15 : vector<1x8xf32>
    %c0_12 = arith.constant 0 : index
    %c0_13 = arith.constant 0 : index
    %c0_14 = arith.constant 0 : index
    %17 = vector.load %arg6[%c0_12, %c0_13, %c0_14] : memref<1x1x8xf32, #tpu.memory_space<vmem>>, vector<1x1x8xf32>
    %18 = vector.shape_cast %17 : vector<1x1x8xf32> to vector<1x8xf32>
    %19 = vector.shape_cast %16 : vector<1x8xf32> to vector<1x1x8xf32>
    tpu.vector_store %arg6[%c0_12, %c0_13, %c0_14], %19 {strides = array<i32>} : memref<1x1x8xf32, #tpu.memory_space<vmem>>, vector<1x1x8xf32>,
    %c0_15 = arith.constant 0 : index
    %c0_16 = arith.constant 0 : index
    %c0_17 = arith.constant 0 : index
    %20 = vector.load %arg7[%c0_15, %c0_16, %c0_17] : memref<1x1x8xf32, #tpu.memory_space<vmem>>, vector<1x1x8xf32>
    %21 = vector.shape_cast %20 : vector<1x1x8xf32> to vector<1x8xf32>
    %22 = arith.mulf %11, %11 : vector<256x8xf32>
    %cst_18 = arith.constant dense<0.000000e+00> : vector<8xf32>
    %23 = vector.multi_reduction <add>, %22, %cst_18 [0] : vector<256x8xf32> to vector<8xf32>
    %24 = vector.shape_cast %23 : vector<8xf32> to vector<1x8xf32>
    %25 = arith.addf %21, %24 : vector<1x8xf32>
    %c0_19 = arith.constant 0 : index
    %c0_20 = arith.constant 0 : index
    %c0_21 = arith.constant 0 : index
    %26 = vector.load %arg7[%c0_19, %c0_20, %c0_21] : memref<1x1x8xf32, #tpu.memory_space<vmem>>, vector<1x1x8xf32>
    %27 = vector.shape_cast %26 : vector<1x1x8xf32> to vector<1x8xf32>
    %28 = vector.shape_cast %25 : vector<1x8xf32> to vector<1x1x8xf32>
    tpu.vector_store %arg7[%c0_19, %c0_20, %c0_21], %28 {strides = array<i32>} : memref<1x1x8xf32, #tpu.memory_space<vmem>>, vector<1x1x8xf32>,
    %29 = vector.shape_cast %11 : vector<256x8xf32> to vector<16x16x8xf32>
    %c0_22 = arith.constant 0 : index
    %c0_23 = arith.constant 0 : index
    %c0_24 = arith.constant 0 : index
    %c0_25 = arith.constant 0 : index
    %30 = vector.load %arg5[%c0_22, %c0_23, %c0_24, %c0_25] : memref<1x16x16x8xf32, #tpu.memory_space<vmem>>, vector<1x16x16x8xf32>
    %31 = vector.shape_cast %30 : vector<1x16x16x8xf32> to vector<16x16x8xf32>
    %32 = vector.shape_cast %29 : vector<16x16x8xf32> to vector<1x16x16x8xf32>
    tpu.vector_store %arg5[%c0_22, %c0_23, %c0_24, %c0_25], %32 {strides = array<i32>} : memref<1x16x16x8xf32, #tpu.memory_space<vmem>>, vector<1x16x16x8xf32>,
    return
  }
  func.func @transform_0(%arg0: i32, %arg1: i32) -> (i32, i32, i32, i32) {
    %c1_i32 = arith.constant 1 : i32
    %0 = arith.muli %arg0, %c1_i32 : i32
    %1 = arith.addi %0, %arg1 : i32
    %c0_i32 = arith.constant 0 : i32
    %c0_i32_0 = arith.constant 0 : i32
    %c0_i32_1 = arith.constant 0 : i32
    %c0_i32_2 = arith.constant 0 : i32
    return %1, %c0_i32, %c0_i32_0, %c0_i32_1 : i32, i32, i32, i32
  }
  func.func @transform_1(%arg0: i32, %arg1: i32) -> (i32, i32) {
    %c0_i32 = arith.constant 0 : i32
    %c0_i32_0 = arith.constant 0 : i32
    %c0_i32_1 = arith.constant 0 : i32
    return %c0_i32, %c0_i32_0 : i32, i32
  }
  func.func @transform_2(%arg0: i32, %arg1: i32) -> (i32, i32) {
    %c0_i32 = arith.constant 0 : i32
    %c0_i32_0 = arith.constant 0 : i32
    %c0_i32_1 = arith.constant 0 : i32
    return %c0_i32, %c0_i32_0 : i32, i32
  }
  func.func @transform_3(%arg0: i32, %arg1: i32) -> (i32, i32, i32, i32) {
    %c1_i32 = arith.constant 1 : i32
    %0 = arith.muli %arg0, %c1_i32 : i32
    %1 = arith.addi %0, %arg1 : i32
    %c0_i32 = arith.constant 0 : i32
    %c0_i32_0 = arith.constant 0 : i32
    %c0_i32_1 = arith.constant 0 : i32
    %c0_i32_2 = arith.constant 0 : i32
    return %1, %c0_i32, %c0_i32_0, %c0_i32_1 : i32, i32, i32, i32
  }
  func.func @transform_4(%arg0: i32, %arg1: i32) -> (i32, i32, i32) {
    %c0_i32 = arith.constant 0 : i32
    %c0_i32_0 = arith.constant 0 : i32
    %c0_i32_1 = arith.constant 0 : i32
    return %arg0, %c0_i32, %c0_i32_0 : i32, i32, i32
  }
  func.func @transform_5(%arg0: i32, %arg1: i32) -> (i32, i32, i32) {
    %c0_i32 = arith.constant 0 : i32
    %c0_i32_0 = arith.constant 0 : i32
    %c0_i32_1 = arith.constant 0 : i32
    return %arg0, %c0_i32, %c0_i32_0 : i32, i32, i32
  }
}

module attributes {stable_mosaic.version = 11 : i64} {
  func.func @_conv_stats_kernel(%arg0: i32, %arg1: i32, %arg2: memref<1x18x18x4xf32, #tpu.memory_space<vmem>>, %arg3: memref<36x8xbf16, #tpu.memory_space<vmem>>, %arg4: memref<1x8xf32, #tpu.memory_space<vmem>>, %arg5: memref<1x16x16x8xf32, #tpu.memory_space<vmem>>, %arg6: memref<1x1x8xf32, #tpu.memory_space<vmem>>, %arg7: memref<1x1x8xf32, #tpu.memory_space<vmem>>) attributes {dimension_semantics = [#tpu.dimension_semantics<parallel>, #tpu.dimension_semantics<arbitrary>], iteration_bounds = array<i64: 2, 1>, scalar_prefetch = 0 : i64, scratch_operands = 0 : i64, tpu.core_type = #tpu.core_type<tc>, window_params = [{transform_indices = @transform_0, window_bounds = array<i64: 1, 18, 18, 4>}, {pipeline_mode = #tpu.pipeline_mode<synchronous>, transform_indices = @transform_1, window_bounds = array<i64: 36, 8>}, {pipeline_mode = #tpu.pipeline_mode<synchronous>, transform_indices = @transform_2, window_bounds = array<i64: 1, 8>}, {transform_indices = @transform_3, window_bounds = array<i64: 1, 16, 16, 8>}, {transform_indices = @transform_4, window_bounds = array<i64: 1, 1, 8>}, {transform_indices = @transform_5, window_bounds = array<i64: 1, 1, 8>}]} {
    %c0_i32 = arith.constant 0 : i32
    %0 = arith.cmpi eq, %arg1, %c0_i32 : i32
    %1 = arith.extui %0 : i1 to i32
    %c0_i32_0 = arith.constant 0 : i32
    %2 = arith.cmpi ne, %1, %c0_i32_0 : i32
    scf.if %2 {
      %cst_27 = arith.constant 0.000000e+00 : f32
      %45 = vector.broadcast %cst_27 : f32 to vector<1x1x8xf32>
      %c0_28 = arith.constant 0 : index
      %c0_29 = arith.constant 0 : index
      %c0_30 = arith.constant 0 : index
      %46 = vector.load %arg6[%c0_28, %c0_29, %c0_30] : memref<1x1x8xf32, #tpu.memory_space<vmem>>, vector<1x1x8xf32>
      tpu.vector_store %arg6[%c0_28, %c0_29, %c0_30], %45 {strides = array<i32>} : memref<1x1x8xf32, #tpu.memory_space<vmem>>, vector<1x1x8xf32>,
      %cst_31 = arith.constant 0.000000e+00 : f32
      %47 = vector.broadcast %cst_31 : f32 to vector<1x1x8xf32>
      %c0_32 = arith.constant 0 : index
      %c0_33 = arith.constant 0 : index
      %c0_34 = arith.constant 0 : index
      %48 = vector.load %arg7[%c0_32, %c0_33, %c0_34] : memref<1x1x8xf32, #tpu.memory_space<vmem>>, vector<1x1x8xf32>
      tpu.vector_store %arg7[%c0_32, %c0_33, %c0_34], %47 {strides = array<i32>} : memref<1x1x8xf32, #tpu.memory_space<vmem>>, vector<1x1x8xf32>,
    } else {
    }
    %c0 = arith.constant 0 : index
    %c0_1 = arith.constant 0 : index
    %c0_2 = arith.constant 0 : index
    %c0_3 = arith.constant 0 : index
    %3 = vector.load %arg2[%c0, %c0_1, %c0_2, %c0_3] : memref<1x18x18x4xf32, #tpu.memory_space<vmem>>, vector<1x18x18x4xf32>
    %4 = vector.shape_cast %3 : vector<1x18x18x4xf32> to vector<18x18x4xf32>
    %5 = vector.extract_strided_slice %4 {offsets = [0, 0, 0], sizes = [16, 16, 4], strides = [1, 1, 1]} : vector<18x18x4xf32> to vector<16x16x4xf32>
    %6 = vector.extract_strided_slice %4 {offsets = [0, 1, 0], sizes = [16, 16, 4], strides = [1, 1, 1]} : vector<18x18x4xf32> to vector<16x16x4xf32>
    %7 = vector.extract_strided_slice %4 {offsets = [0, 2, 0], sizes = [16, 16, 4], strides = [1, 1, 1]} : vector<18x18x4xf32> to vector<16x16x4xf32>
    %8 = vector.extract_strided_slice %4 {offsets = [1, 0, 0], sizes = [16, 16, 4], strides = [1, 1, 1]} : vector<18x18x4xf32> to vector<16x16x4xf32>
    %9 = vector.extract_strided_slice %4 {offsets = [1, 1, 0], sizes = [16, 16, 4], strides = [1, 1, 1]} : vector<18x18x4xf32> to vector<16x16x4xf32>
    %10 = vector.extract_strided_slice %4 {offsets = [1, 2, 0], sizes = [16, 16, 4], strides = [1, 1, 1]} : vector<18x18x4xf32> to vector<16x16x4xf32>
    %11 = vector.extract_strided_slice %4 {offsets = [2, 0, 0], sizes = [16, 16, 4], strides = [1, 1, 1]} : vector<18x18x4xf32> to vector<16x16x4xf32>
    %12 = vector.extract_strided_slice %4 {offsets = [2, 1, 0], sizes = [16, 16, 4], strides = [1, 1, 1]} : vector<18x18x4xf32> to vector<16x16x4xf32>
    %13 = vector.extract_strided_slice %4 {offsets = [2, 2, 0], sizes = [16, 16, 4], strides = [1, 1, 1]} : vector<18x18x4xf32> to vector<16x16x4xf32>
    %14 = tpu.concatenate %5, %6, %7, %8, %9, %10, %11, %12, %13 in 2 : vector<16x16x4xf32>, vector<16x16x4xf32>, vector<16x16x4xf32>, vector<16x16x4xf32>, vector<16x16x4xf32>, vector<16x16x4xf32>, vector<16x16x4xf32>, vector<16x16x4xf32>, vector<16x16x4xf32> -> vector<16x16x36xf32>
    %15 = vector.shape_cast %14 : vector<16x16x36xf32> to vector<256x36xf32>
    %16 = arith.truncf %15 : vector<256x36xf32> to vector<256x36xbf16>
    %c0_4 = arith.constant 0 : index
    %c0_5 = arith.constant 0 : index
    %17 = vector.load %arg3[%c0_4, %c0_5] : memref<36x8xbf16, #tpu.memory_space<vmem>>, vector<36x8xbf16>
    %cst = arith.constant dense<0.000000e+00> : vector<256x8xf32>
    %18 = tpu.matmul %16, %17, %cst {dimension_numbers = #tpu.dot_dimension_numbers<[1], [0], [0], [1], [0, 0, 1, 1], [], []>} : vector<256x36xbf16>, vector<36x8xbf16>, vector<256x8xf32> -> vector<256x8xf32>
    %c0_6 = arith.constant 0 : index
    %c0_7 = arith.constant 0 : index
    %19 = vector.load %arg4[%c0_6, %c0_7] : memref<1x8xf32, #tpu.memory_space<vmem>>, vector<1x8xf32>
    %20 = vector.broadcast %19 : vector<1x8xf32> to vector<256x8xf32>
    %21 = arith.addf %18, %20 : vector<256x8xf32>
    %cst_8 = arith.constant 0.000000e+00 : f32
    %22 = vector.broadcast %cst_8 : f32 to vector<256x8xf32>
    %23 = arith.maximumf %21, %22 : vector<256x8xf32>
    %c0_9 = arith.constant 0 : index
    %c0_10 = arith.constant 0 : index
    %c0_11 = arith.constant 0 : index
    %24 = vector.load %arg6[%c0_9, %c0_10, %c0_11] : memref<1x1x8xf32, #tpu.memory_space<vmem>>, vector<1x1x8xf32>
    %25 = vector.shape_cast %24 : vector<1x1x8xf32> to vector<1x8xf32>
    %cst_12 = arith.constant dense<0.000000e+00> : vector<8xf32>
    %26 = vector.multi_reduction <add>, %23, %cst_12 [0] : vector<256x8xf32> to vector<8xf32>
    %27 = vector.shape_cast %26 : vector<8xf32> to vector<1x8xf32>
    %28 = arith.addf %25, %27 : vector<1x8xf32>
    %c0_13 = arith.constant 0 : index
    %c0_14 = arith.constant 0 : index
    %c0_15 = arith.constant 0 : index
    %29 = vector.load %arg6[%c0_13, %c0_14, %c0_15] : memref<1x1x8xf32, #tpu.memory_space<vmem>>, vector<1x1x8xf32>
    %30 = vector.shape_cast %29 : vector<1x1x8xf32> to vector<1x8xf32>
    %31 = vector.shape_cast %28 : vector<1x8xf32> to vector<1x1x8xf32>
    tpu.vector_store %arg6[%c0_13, %c0_14, %c0_15], %31 {strides = array<i32>} : memref<1x1x8xf32, #tpu.memory_space<vmem>>, vector<1x1x8xf32>,
    %c0_16 = arith.constant 0 : index
    %c0_17 = arith.constant 0 : index
    %c0_18 = arith.constant 0 : index
    %32 = vector.load %arg7[%c0_16, %c0_17, %c0_18] : memref<1x1x8xf32, #tpu.memory_space<vmem>>, vector<1x1x8xf32>
    %33 = vector.shape_cast %32 : vector<1x1x8xf32> to vector<1x8xf32>
    %34 = arith.mulf %23, %23 : vector<256x8xf32>
    %cst_19 = arith.constant dense<0.000000e+00> : vector<8xf32>
    %35 = vector.multi_reduction <add>, %34, %cst_19 [0] : vector<256x8xf32> to vector<8xf32>
    %36 = vector.shape_cast %35 : vector<8xf32> to vector<1x8xf32>
    %37 = arith.addf %33, %36 : vector<1x8xf32>
    %c0_20 = arith.constant 0 : index
    %c0_21 = arith.constant 0 : index
    %c0_22 = arith.constant 0 : index
    %38 = vector.load %arg7[%c0_20, %c0_21, %c0_22] : memref<1x1x8xf32, #tpu.memory_space<vmem>>, vector<1x1x8xf32>
    %39 = vector.shape_cast %38 : vector<1x1x8xf32> to vector<1x8xf32>
    %40 = vector.shape_cast %37 : vector<1x8xf32> to vector<1x1x8xf32>
    tpu.vector_store %arg7[%c0_20, %c0_21, %c0_22], %40 {strides = array<i32>} : memref<1x1x8xf32, #tpu.memory_space<vmem>>, vector<1x1x8xf32>,
    %41 = vector.shape_cast %23 : vector<256x8xf32> to vector<16x16x8xf32>
    %c0_23 = arith.constant 0 : index
    %c0_24 = arith.constant 0 : index
    %c0_25 = arith.constant 0 : index
    %c0_26 = arith.constant 0 : index
    %42 = vector.load %arg5[%c0_23, %c0_24, %c0_25, %c0_26] : memref<1x16x16x8xf32, #tpu.memory_space<vmem>>, vector<1x16x16x8xf32>
    %43 = vector.shape_cast %42 : vector<1x16x16x8xf32> to vector<16x16x8xf32>
    %44 = vector.shape_cast %41 : vector<16x16x8xf32> to vector<1x16x16x8xf32>
    tpu.vector_store %arg5[%c0_23, %c0_24, %c0_25, %c0_26], %44 {strides = array<i32>} : memref<1x16x16x8xf32, #tpu.memory_space<vmem>>, vector<1x16x16x8xf32>,
    return
  }
  func.func @transform_0(%arg0: i32, %arg1: i32) -> (i32, i32, i32, i32) {
    %c1_i32 = arith.constant 1 : i32
    %0 = arith.muli %arg0, %c1_i32 : i32
    %1 = arith.addi %0, %arg1 : i32
    %c0_i32 = arith.constant 0 : i32
    %c0_i32_0 = arith.constant 0 : i32
    %c0_i32_1 = arith.constant 0 : i32
    %c0_i32_2 = arith.constant 0 : i32
    return %1, %c0_i32, %c0_i32_0, %c0_i32_1 : i32, i32, i32, i32
  }
  func.func @transform_1(%arg0: i32, %arg1: i32) -> (i32, i32) {
    %c0_i32 = arith.constant 0 : i32
    %c0_i32_0 = arith.constant 0 : i32
    %c0_i32_1 = arith.constant 0 : i32
    return %c0_i32, %c0_i32_0 : i32, i32
  }
  func.func @transform_2(%arg0: i32, %arg1: i32) -> (i32, i32) {
    %c0_i32 = arith.constant 0 : i32
    %c0_i32_0 = arith.constant 0 : i32
    %c0_i32_1 = arith.constant 0 : i32
    return %c0_i32, %c0_i32_0 : i32, i32
  }
  func.func @transform_3(%arg0: i32, %arg1: i32) -> (i32, i32, i32, i32) {
    %c1_i32 = arith.constant 1 : i32
    %0 = arith.muli %arg0, %c1_i32 : i32
    %1 = arith.addi %0, %arg1 : i32
    %c0_i32 = arith.constant 0 : i32
    %c0_i32_0 = arith.constant 0 : i32
    %c0_i32_1 = arith.constant 0 : i32
    %c0_i32_2 = arith.constant 0 : i32
    return %1, %c0_i32, %c0_i32_0, %c0_i32_1 : i32, i32, i32, i32
  }
  func.func @transform_4(%arg0: i32, %arg1: i32) -> (i32, i32, i32) {
    %c0_i32 = arith.constant 0 : i32
    %c0_i32_0 = arith.constant 0 : i32
    %c0_i32_1 = arith.constant 0 : i32
    return %arg0, %c0_i32, %c0_i32_0 : i32, i32, i32
  }
  func.func @transform_5(%arg0: i32, %arg1: i32) -> (i32, i32, i32) {
    %c0_i32 = arith.constant 0 : i32
    %c0_i32_0 = arith.constant 0 : i32
    %c0_i32_1 = arith.constant 0 : i32
    return %arg0, %c0_i32, %c0_i32_0 : i32, i32, i32
  }
}

module attributes {stable_mosaic.version = 11 : i64} {
  func.func @_conv_stats_kernel(%arg0: i32, %arg1: i32, %arg2: memref<1x18x18x8xf32, #tpu.memory_space<vmem>>, %arg3: memref<72x8xbf16, #tpu.memory_space<vmem>>, %arg4: memref<1x8xf32, #tpu.memory_space<vmem>>, %arg5: memref<1x8xf32, #tpu.memory_space<vmem>>, %arg6: memref<1x8xf32, #tpu.memory_space<vmem>>, %arg7: memref<1x16x16x8xf32, #tpu.memory_space<vmem>>, %arg8: memref<1x16x16x8xf32, #tpu.memory_space<vmem>>, %arg9: memref<1x1x8xf32, #tpu.memory_space<vmem>>, %arg10: memref<1x1x8xf32, #tpu.memory_space<vmem>>, %arg11: memref<1x1x8xf32, #tpu.memory_space<vmem>>) attributes {dimension_semantics = [#tpu.dimension_semantics<parallel>, #tpu.dimension_semantics<arbitrary>], iteration_bounds = array<i64: 2, 1>, scalar_prefetch = 0 : i64, scratch_operands = 0 : i64, tpu.core_type = #tpu.core_type<tc>, window_params = [{transform_indices = @transform_0, window_bounds = array<i64: 1, 18, 18, 8>}, {pipeline_mode = #tpu.pipeline_mode<synchronous>, transform_indices = @transform_1, window_bounds = array<i64: 72, 8>}, {pipeline_mode = #tpu.pipeline_mode<synchronous>, transform_indices = @transform_2, window_bounds = array<i64: 1, 8>}, {pipeline_mode = #tpu.pipeline_mode<synchronous>, transform_indices = @transform_3, window_bounds = array<i64: 1, 8>}, {pipeline_mode = #tpu.pipeline_mode<synchronous>, transform_indices = @transform_4, window_bounds = array<i64: 1, 8>}, {transform_indices = @transform_5, window_bounds = array<i64: 1, 16, 16, 8>}, {transform_indices = @transform_6, window_bounds = array<i64: 1, 16, 16, 8>}, {transform_indices = @transform_7, window_bounds = array<i64: 1, 1, 8>}, {transform_indices = @transform_8, window_bounds = array<i64: 1, 1, 8>}, {transform_indices = @transform_9, window_bounds = array<i64: 1, 1, 8>}]} {
    %c0_i32 = arith.constant 0 : i32
    %0 = arith.cmpi eq, %arg1, %c0_i32 : i32
    %1 = arith.extui %0 : i1 to i32
    %c0_i32_0 = arith.constant 0 : i32
    %2 = arith.cmpi ne, %1, %c0_i32_0 : i32
    scf.if %2 {
      %cst_46 = arith.constant 0.000000e+00 : f32
      %86 = vector.broadcast %cst_46 : f32 to vector<1x1x8xf32>
      %c0_47 = arith.constant 0 : index
      %c0_48 = arith.constant 0 : index
      %c0_49 = arith.constant 0 : index
      %87 = vector.load %arg9[%c0_47, %c0_48, %c0_49] : memref<1x1x8xf32, #tpu.memory_space<vmem>>, vector<1x1x8xf32>
      tpu.vector_store %arg9[%c0_47, %c0_48, %c0_49], %86 {strides = array<i32>} : memref<1x1x8xf32, #tpu.memory_space<vmem>>, vector<1x1x8xf32>,
      %cst_50 = arith.constant 0.000000e+00 : f32
      %88 = vector.broadcast %cst_50 : f32 to vector<1x1x8xf32>
      %c0_51 = arith.constant 0 : index
      %c0_52 = arith.constant 0 : index
      %c0_53 = arith.constant 0 : index
      %89 = vector.load %arg10[%c0_51, %c0_52, %c0_53] : memref<1x1x8xf32, #tpu.memory_space<vmem>>, vector<1x1x8xf32>
      tpu.vector_store %arg10[%c0_51, %c0_52, %c0_53], %88 {strides = array<i32>} : memref<1x1x8xf32, #tpu.memory_space<vmem>>, vector<1x1x8xf32>,
      %cst_54 = arith.constant 0.000000e+00 : f32
      %90 = vector.broadcast %cst_54 : f32 to vector<1x1x8xf32>
      %c0_55 = arith.constant 0 : index
      %c0_56 = arith.constant 0 : index
      %c0_57 = arith.constant 0 : index
      %91 = vector.load %arg11[%c0_55, %c0_56, %c0_57] : memref<1x1x8xf32, #tpu.memory_space<vmem>>, vector<1x1x8xf32>
      tpu.vector_store %arg11[%c0_55, %c0_56, %c0_57], %90 {strides = array<i32>} : memref<1x1x8xf32, #tpu.memory_space<vmem>>, vector<1x1x8xf32>,
    } else {
    }
    %c0 = arith.constant 0 : index
    %c0_1 = arith.constant 0 : index
    %c0_2 = arith.constant 0 : index
    %c0_3 = arith.constant 0 : index
    %3 = vector.load %arg2[%c0, %c0_1, %c0_2, %c0_3] : memref<1x18x18x8xf32, #tpu.memory_space<vmem>>, vector<1x18x18x8xf32>
    %4 = vector.shape_cast %3 : vector<1x18x18x8xf32> to vector<18x18x8xf32>
    %c0_4 = arith.constant 0 : index
    %c0_5 = arith.constant 0 : index
    %5 = vector.load %arg5[%c0_4, %c0_5] : memref<1x8xf32, #tpu.memory_space<vmem>>, vector<1x8xf32>
    %6 = vector.shape_cast %5 : vector<1x8xf32> to vector<8xf32>
    %7 = vector.shape_cast %6 : vector<8xf32> to vector<1x1x8xf32>
    %8 = vector.broadcast %7 : vector<1x1x8xf32> to vector<18x18x8xf32>
    %9 = arith.mulf %4, %8 : vector<18x18x8xf32>
    %c0_6 = arith.constant 0 : index
    %c0_7 = arith.constant 0 : index
    %10 = vector.load %arg6[%c0_6, %c0_7] : memref<1x8xf32, #tpu.memory_space<vmem>>, vector<1x8xf32>
    %11 = vector.shape_cast %10 : vector<1x8xf32> to vector<8xf32>
    %12 = vector.shape_cast %11 : vector<8xf32> to vector<1x1x8xf32>
    %13 = vector.broadcast %12 : vector<1x1x8xf32> to vector<18x18x8xf32>
    %14 = arith.addf %9, %13 : vector<18x18x8xf32>
    %cst = arith.constant 0.000000e+00 : f32
    %15 = vector.broadcast %cst : f32 to vector<18x18x8xf32>
    %16 = arith.maximumf %14, %15 : vector<18x18x8xf32>
    %17 = tpu.iota {dimensions = array<i32: 0>} : vector<18x18x1xi32>
    %18 = tpu.iota {dimensions = array<i32: 1>} : vector<18x18x1xi32>
    %c1_i32 = arith.constant 1 : i32
    %19 = vector.broadcast %c1_i32 : i32 to vector<18x18x1xi32>
    %20 = arith.cmpi sge, %17, %19 : vector<18x18x1xi32>
    %c17_i32 = arith.constant 17 : i32
    %21 = vector.broadcast %c17_i32 : i32 to vector<18x18x1xi32>
    %22 = arith.cmpi slt, %17, %21 : vector<18x18x1xi32>
    %23 = arith.andi %20, %22 : vector<18x18x1xi1>
    %c1_i32_8 = arith.constant 1 : i32
    %24 = vector.broadcast %c1_i32_8 : i32 to vector<18x18x1xi32>
    %25 = arith.cmpi sge, %18, %24 : vector<18x18x1xi32>
    %26 = arith.andi %23, %25 : vector<18x18x1xi1>
    %c17_i32_9 = arith.constant 17 : i32
    %27 = vector.broadcast %c17_i32_9 : i32 to vector<18x18x1xi32>
    %28 = arith.cmpi slt, %18, %27 : vector<18x18x1xi32>
    %29 = arith.andi %26, %28 : vector<18x18x1xi1>
    %cst_10 = arith.constant 0.000000e+00 : f32
    %30 = vector.shape_cast %29 : vector<18x18x1xi1> to vector<18x18x1xi1>
    %31 = vector.broadcast %30 : vector<18x18x1xi1> to vector<18x18x8xi1>
    %32 = vector.broadcast %cst_10 : f32 to vector<18x18x8xf32>
    %33 = arith.select %31, %16, %32 : vector<18x18x8xi1>, vector<18x18x8xf32>
    %34 = vector.extract_strided_slice %33 {offsets = [0, 0, 0], sizes = [16, 16, 8], strides = [1, 1, 1]} : vector<18x18x8xf32> to vector<16x16x8xf32>
    %35 = vector.extract_strided_slice %33 {offsets = [0, 1, 0], sizes = [16, 16, 8], strides = [1, 1, 1]} : vector<18x18x8xf32> to vector<16x16x8xf32>
    %36 = vector.extract_strided_slice %33 {offsets = [0, 2, 0], sizes = [16, 16, 8], strides = [1, 1, 1]} : vector<18x18x8xf32> to vector<16x16x8xf32>
    %37 = vector.extract_strided_slice %33 {offsets = [1, 0, 0], sizes = [16, 16, 8], strides = [1, 1, 1]} : vector<18x18x8xf32> to vector<16x16x8xf32>
    %38 = vector.extract_strided_slice %33 {offsets = [1, 1, 0], sizes = [16, 16, 8], strides = [1, 1, 1]} : vector<18x18x8xf32> to vector<16x16x8xf32>
    %39 = vector.extract_strided_slice %33 {offsets = [1, 2, 0], sizes = [16, 16, 8], strides = [1, 1, 1]} : vector<18x18x8xf32> to vector<16x16x8xf32>
    %40 = vector.extract_strided_slice %33 {offsets = [2, 0, 0], sizes = [16, 16, 8], strides = [1, 1, 1]} : vector<18x18x8xf32> to vector<16x16x8xf32>
    %41 = vector.extract_strided_slice %33 {offsets = [2, 1, 0], sizes = [16, 16, 8], strides = [1, 1, 1]} : vector<18x18x8xf32> to vector<16x16x8xf32>
    %42 = vector.extract_strided_slice %33 {offsets = [2, 2, 0], sizes = [16, 16, 8], strides = [1, 1, 1]} : vector<18x18x8xf32> to vector<16x16x8xf32>
    %43 = tpu.concatenate %34, %35, %36, %37, %38, %39, %40, %41, %42 in 2 : vector<16x16x8xf32>, vector<16x16x8xf32>, vector<16x16x8xf32>, vector<16x16x8xf32>, vector<16x16x8xf32>, vector<16x16x8xf32>, vector<16x16x8xf32>, vector<16x16x8xf32>, vector<16x16x8xf32> -> vector<16x16x72xf32>
    %44 = vector.shape_cast %43 : vector<16x16x72xf32> to vector<256x72xf32>
    %45 = arith.truncf %44 : vector<256x72xf32> to vector<256x72xbf16>
    %c0_11 = arith.constant 0 : index
    %c0_12 = arith.constant 0 : index
    %46 = vector.load %arg3[%c0_11, %c0_12] : memref<72x8xbf16, #tpu.memory_space<vmem>>, vector<72x8xbf16>
    %cst_13 = arith.constant dense<0.000000e+00> : vector<256x8xf32>
    %47 = tpu.matmul %45, %46, %cst_13 {dimension_numbers = #tpu.dot_dimension_numbers<[1], [0], [0], [1], [0, 0, 1, 1], [], []>} : vector<256x72xbf16>, vector<72x8xbf16>, vector<256x8xf32> -> vector<256x8xf32>
    %c0_14 = arith.constant 0 : index
    %c0_15 = arith.constant 0 : index
    %48 = vector.load %arg4[%c0_14, %c0_15] : memref<1x8xf32, #tpu.memory_space<vmem>>, vector<1x8xf32>
    %49 = vector.broadcast %48 : vector<1x8xf32> to vector<256x8xf32>
    %50 = arith.addf %47, %49 : vector<256x8xf32>
    %cst_16 = arith.constant 0.000000e+00 : f32
    %51 = vector.broadcast %cst_16 : f32 to vector<256x8xf32>
    %52 = arith.maximumf %50, %51 : vector<256x8xf32>
    %c0_17 = arith.constant 0 : index
    %c0_18 = arith.constant 0 : index
    %c0_19 = arith.constant 0 : index
    %53 = vector.load %arg9[%c0_17, %c0_18, %c0_19] : memref<1x1x8xf32, #tpu.memory_space<vmem>>, vector<1x1x8xf32>
    %54 = vector.shape_cast %53 : vector<1x1x8xf32> to vector<1x8xf32>
    %cst_20 = arith.constant dense<0.000000e+00> : vector<8xf32>
    %55 = vector.multi_reduction <add>, %52, %cst_20 [0] : vector<256x8xf32> to vector<8xf32>
    %56 = vector.shape_cast %55 : vector<8xf32> to vector<1x8xf32>
    %57 = arith.addf %54, %56 : vector<1x8xf32>
    %c0_21 = arith.constant 0 : index
    %c0_22 = arith.constant 0 : index
    %c0_23 = arith.constant 0 : index
    %58 = vector.load %arg9[%c0_21, %c0_22, %c0_23] : memref<1x1x8xf32, #tpu.memory_space<vmem>>, vector<1x1x8xf32>
    %59 = vector.shape_cast %58 : vector<1x1x8xf32> to vector<1x8xf32>
    %60 = vector.shape_cast %57 : vector<1x8xf32> to vector<1x1x8xf32>
    tpu.vector_store %arg9[%c0_21, %c0_22, %c0_23], %60 {strides = array<i32>} : memref<1x1x8xf32, #tpu.memory_space<vmem>>, vector<1x1x8xf32>,
    %c0_24 = arith.constant 0 : index
    %c0_25 = arith.constant 0 : index
    %c0_26 = arith.constant 0 : index
    %61 = vector.load %arg10[%c0_24, %c0_25, %c0_26] : memref<1x1x8xf32, #tpu.memory_space<vmem>>, vector<1x1x8xf32>
    %62 = vector.shape_cast %61 : vector<1x1x8xf32> to vector<1x8xf32>
    %63 = arith.mulf %52, %52 : vector<256x8xf32>
    %cst_27 = arith.constant dense<0.000000e+00> : vector<8xf32>
    %64 = vector.multi_reduction <add>, %63, %cst_27 [0] : vector<256x8xf32> to vector<8xf32>
    %65 = vector.shape_cast %64 : vector<8xf32> to vector<1x8xf32>
    %66 = arith.addf %62, %65 : vector<1x8xf32>
    %c0_28 = arith.constant 0 : index
    %c0_29 = arith.constant 0 : index
    %c0_30 = arith.constant 0 : index
    %67 = vector.load %arg10[%c0_28, %c0_29, %c0_30] : memref<1x1x8xf32, #tpu.memory_space<vmem>>, vector<1x1x8xf32>
    %68 = vector.shape_cast %67 : vector<1x1x8xf32> to vector<1x8xf32>
    %69 = vector.shape_cast %66 : vector<1x8xf32> to vector<1x1x8xf32>
    tpu.vector_store %arg10[%c0_28, %c0_29, %c0_30], %69 {strides = array<i32>} : memref<1x1x8xf32, #tpu.memory_space<vmem>>, vector<1x1x8xf32>,
    %c0_31 = arith.constant 0 : index
    %c0_32 = arith.constant 0 : index
    %c0_33 = arith.constant 0 : index
    %c0_34 = arith.constant 0 : index
    %70 = vector.load %arg7[%c0_31, %c0_32, %c0_33, %c0_34] : memref<1x16x16x8xf32, #tpu.memory_space<vmem>>, vector<1x16x16x8xf32>
    %71 = vector.shape_cast %70 : vector<1x16x16x8xf32> to vector<16x16x8xf32>
    %72 = vector.shape_cast %71 : vector<16x16x8xf32> to vector<256x8xf32>
    %c0_35 = arith.constant 0 : index
    %c0_36 = arith.constant 0 : index
    %c0_37 = arith.constant 0 : index
    %73 = vector.load %arg11[%c0_35, %c0_36, %c0_37] : memref<1x1x8xf32, #tpu.memory_space<vmem>>, vector<1x1x8xf32>
    %74 = vector.shape_cast %73 : vector<1x1x8xf32> to vector<1x8xf32>
    %75 = arith.mulf %72, %52 : vector<256x8xf32>
    %cst_38 = arith.constant dense<0.000000e+00> : vector<8xf32>
    %76 = vector.multi_reduction <add>, %75, %cst_38 [0] : vector<256x8xf32> to vector<8xf32>
    %77 = vector.shape_cast %76 : vector<8xf32> to vector<1x8xf32>
    %78 = arith.addf %74, %77 : vector<1x8xf32>
    %c0_39 = arith.constant 0 : index
    %c0_40 = arith.constant 0 : index
    %c0_41 = arith.constant 0 : index
    %79 = vector.load %arg11[%c0_39, %c0_40, %c0_41] : memref<1x1x8xf32, #tpu.memory_space<vmem>>, vector<1x1x8xf32>
    %80 = vector.shape_cast %79 : vector<1x1x8xf32> to vector<1x8xf32>
    %81 = vector.shape_cast %78 : vector<1x8xf32> to vector<1x1x8xf32>
    tpu.vector_store %arg11[%c0_39, %c0_40, %c0_41], %81 {strides = array<i32>} : memref<1x1x8xf32, #tpu.memory_space<vmem>>, vector<1x1x8xf32>,
    %82 = vector.shape_cast %52 : vector<256x8xf32> to vector<16x16x8xf32>
    %c0_42 = arith.constant 0 : index
    %c0_43 = arith.constant 0 : index
    %c0_44 = arith.constant 0 : index
    %c0_45 = arith.constant 0 : index
    %83 = vector.load %arg8[%c0_42, %c0_43, %c0_44, %c0_45] : memref<1x16x16x8xf32, #tpu.memory_space<vmem>>, vector<1x16x16x8xf32>
    %84 = vector.shape_cast %83 : vector<1x16x16x8xf32> to vector<16x16x8xf32>
    %85 = vector.shape_cast %82 : vector<16x16x8xf32> to vector<1x16x16x8xf32>
    tpu.vector_store %arg8[%c0_42, %c0_43, %c0_44, %c0_45], %85 {strides = array<i32>} : memref<1x16x16x8xf32, #tpu.memory_space<vmem>>, vector<1x16x16x8xf32>,
    return
  }
  func.func @transform_0(%arg0: i32, %arg1: i32) -> (i32, i32, i32, i32) {
    %c1_i32 = arith.constant 1 : i32
    %0 = arith.muli %arg0, %c1_i32 : i32
    %1 = arith.addi %0, %arg1 : i32
    %c0_i32 = arith.constant 0 : i32
    %c0_i32_0 = arith.constant 0 : i32
    %c0_i32_1 = arith.constant 0 : i32
    %c0_i32_2 = arith.constant 0 : i32
    return %1, %c0_i32, %c0_i32_0, %c0_i32_1 : i32, i32, i32, i32
  }
  func.func @transform_1(%arg0: i32, %arg1: i32) -> (i32, i32) {
    %c0_i32 = arith.constant 0 : i32
    %c0_i32_0 = arith.constant 0 : i32
    %c0_i32_1 = arith.constant 0 : i32
    return %c0_i32, %c0_i32_0 : i32, i32
  }
  func.func @transform_2(%arg0: i32, %arg1: i32) -> (i32, i32) {
    %c0_i32 = arith.constant 0 : i32
    %c0_i32_0 = arith.constant 0 : i32
    %c0_i32_1 = arith.constant 0 : i32
    return %c0_i32, %c0_i32_0 : i32, i32
  }
  func.func @transform_3(%arg0: i32, %arg1: i32) -> (i32, i32) {
    %c0_i32 = arith.constant 0 : i32
    %c0_i32_0 = arith.constant 0 : i32
    %c0_i32_1 = arith.constant 0 : i32
    return %c0_i32, %c0_i32_0 : i32, i32
  }
  func.func @transform_4(%arg0: i32, %arg1: i32) -> (i32, i32) {
    %c0_i32 = arith.constant 0 : i32
    %c0_i32_0 = arith.constant 0 : i32
    %c0_i32_1 = arith.constant 0 : i32
    return %c0_i32, %c0_i32_0 : i32, i32
  }
  func.func @transform_5(%arg0: i32, %arg1: i32) -> (i32, i32, i32, i32) {
    %c1_i32 = arith.constant 1 : i32
    %0 = arith.muli %arg0, %c1_i32 : i32
    %1 = arith.addi %0, %arg1 : i32
    %c0_i32 = arith.constant 0 : i32
    %c0_i32_0 = arith.constant 0 : i32
    %c0_i32_1 = arith.constant 0 : i32
    %c0_i32_2 = arith.constant 0 : i32
    return %1, %c0_i32, %c0_i32_0, %c0_i32_1 : i32, i32, i32, i32
  }
  func.func @transform_6(%arg0: i32, %arg1: i32) -> (i32, i32, i32, i32) {
    %c1_i32 = arith.constant 1 : i32
    %0 = arith.muli %arg0, %c1_i32 : i32
    %1 = arith.addi %0, %arg1 : i32
    %c0_i32 = arith.constant 0 : i32
    %c0_i32_0 = arith.constant 0 : i32
    %c0_i32_1 = arith.constant 0 : i32
    %c0_i32_2 = arith.constant 0 : i32
    return %1, %c0_i32, %c0_i32_0, %c0_i32_1 : i32, i32, i32, i32
  }
  func.func @transform_7(%arg0: i32, %arg1: i32) -> (i32, i32, i32) {
    %c0_i32 = arith.constant 0 : i32
    %c0_i32_0 = arith.constant 0 : i32
    %c0_i32_1 = arith.constant 0 : i32
    return %arg0, %c0_i32, %c0_i32_0 : i32, i32, i32
  }
  func.func @transform_8(%arg0: i32, %arg1: i32) -> (i32, i32, i32) {
    %c0_i32 = arith.constant 0 : i32
    %c0_i32_0 = arith.constant 0 : i32
    %c0_i32_1 = arith.constant 0 : i32
    return %arg0, %c0_i32, %c0_i32_0 : i32, i32, i32
  }
  func.func @transform_9(%arg0: i32, %arg1: i32) -> (i32, i32, i32) {
    %c0_i32 = arith.constant 0 : i32
    %c0_i32_0 = arith.constant 0 : i32
    %c0_i32_1 = arith.constant 0 : i32
    return %arg0, %c0_i32, %c0_i32_0 : i32, i32, i32
  }
}

module attributes {stable_mosaic.version = 11 : i64} {
  func.func @_res_apply_kernel(%arg0: i32, %arg1: memref<32x128xf32, #tpu.memory_space<vmem>>, %arg2: memref<32x128xf32, #tpu.memory_space<vmem>>, %arg3: memref<1x128xf32, #tpu.memory_space<vmem>>, %arg4: memref<1x128xf32, #tpu.memory_space<vmem>>, %arg5: memref<1x128xf32, #tpu.memory_space<vmem>>, %arg6: memref<32x128xf32, #tpu.memory_space<vmem>>) attributes {dimension_semantics = [#tpu.dimension_semantics<parallel>], iteration_bounds = array<i64: 1>, scalar_prefetch = 0 : i64, scratch_operands = 0 : i64, tpu.core_type = #tpu.core_type<tc>, window_params = [{transform_indices = @transform_0, window_bounds = array<i64: 32, 128>}, {transform_indices = @transform_1, window_bounds = array<i64: 32, 128>}, {pipeline_mode = #tpu.pipeline_mode<synchronous>, transform_indices = @transform_2, window_bounds = array<i64: 1, 128>}, {pipeline_mode = #tpu.pipeline_mode<synchronous>, transform_indices = @transform_3, window_bounds = array<i64: 1, 128>}, {pipeline_mode = #tpu.pipeline_mode<synchronous>, transform_indices = @transform_4, window_bounds = array<i64: 1, 128>}, {transform_indices = @transform_5, window_bounds = array<i64: 32, 128>}]} {
    %c0 = arith.constant 0 : index
    %c0_0 = arith.constant 0 : index
    %0 = vector.load %arg1[%c0, %c0_0] : memref<32x128xf32, #tpu.memory_space<vmem>>, vector<32x128xf32>
    %c0_1 = arith.constant 0 : index
    %c0_2 = arith.constant 0 : index
    %1 = vector.load %arg3[%c0_1, %c0_2] : memref<1x128xf32, #tpu.memory_space<vmem>>, vector<1x128xf32>
    %2 = vector.broadcast %1 : vector<1x128xf32> to vector<32x128xf32>
    %3 = arith.mulf %0, %2 : vector<32x128xf32>
    %c0_3 = arith.constant 0 : index
    %c0_4 = arith.constant 0 : index
    %4 = vector.load %arg2[%c0_3, %c0_4] : memref<32x128xf32, #tpu.memory_space<vmem>>, vector<32x128xf32>
    %c0_5 = arith.constant 0 : index
    %c0_6 = arith.constant 0 : index
    %5 = vector.load %arg4[%c0_5, %c0_6] : memref<1x128xf32, #tpu.memory_space<vmem>>, vector<1x128xf32>
    %6 = vector.broadcast %5 : vector<1x128xf32> to vector<32x128xf32>
    %7 = arith.mulf %4, %6 : vector<32x128xf32>
    %8 = arith.addf %3, %7 : vector<32x128xf32>
    %c0_7 = arith.constant 0 : index
    %c0_8 = arith.constant 0 : index
    %9 = vector.load %arg5[%c0_7, %c0_8] : memref<1x128xf32, #tpu.memory_space<vmem>>, vector<1x128xf32>
    %10 = vector.broadcast %9 : vector<1x128xf32> to vector<32x128xf32>
    %11 = arith.addf %8, %10 : vector<32x128xf32>
    %cst = arith.constant 0.000000e+00 : f32
    %12 = vector.broadcast %cst : f32 to vector<32x128xf32>
    %13 = arith.maximumf %11, %12 : vector<32x128xf32>
    %c0_9 = arith.constant 0 : index
    %c0_10 = arith.constant 0 : index
    %14 = vector.load %arg6[%c0_9, %c0_10] : memref<32x128xf32, #tpu.memory_space<vmem>>, vector<32x128xf32>
    tpu.vector_store %arg6[%c0_9, %c0_10], %13 {strides = array<i32>} : memref<32x128xf32, #tpu.memory_space<vmem>>, vector<32x128xf32>,
    return
  }
  func.func @transform_0(%arg0: i32) -> (i32, i32) {
    %c0_i32 = arith.constant 0 : i32
    %c0_i32_0 = arith.constant 0 : i32
    return %arg0, %c0_i32 : i32, i32
  }
  func.func @transform_1(%arg0: i32) -> (i32, i32) {
    %c0_i32 = arith.constant 0 : i32
    %c0_i32_0 = arith.constant 0 : i32
    return %arg0, %c0_i32 : i32, i32
  }
  func.func @transform_2(%arg0: i32) -> (i32, i32) {
    %c0_i32 = arith.constant 0 : i32
    %c0_i32_0 = arith.constant 0 : i32
    %c0_i32_1 = arith.constant 0 : i32
    return %c0_i32, %c0_i32_0 : i32, i32
  }
  func.func @transform_3(%arg0: i32) -> (i32, i32) {
    %c0_i32 = arith.constant 0 : i32
    %c0_i32_0 = arith.constant 0 : i32
    %c0_i32_1 = arith.constant 0 : i32
    return %c0_i32, %c0_i32_0 : i32, i32
  }
  func.func @transform_4(%arg0: i32) -> (i32, i32) {
    %c0_i32 = arith.constant 0 : i32
    %c0_i32_0 = arith.constant 0 : i32
    %c0_i32_1 = arith.constant 0 : i32
    return %c0_i32, %c0_i32_0 : i32, i32
  }
  func.func @transform_5(%arg0: i32) -> (i32, i32) {
    %c0_i32 = arith.constant 0 : i32
    %c0_i32_0 = arith.constant 0 : i32
    return %arg0, %c0_i32 : i32, i32
  }
}

</mosaic_0001>

<llo_original>
// kernel: residual_block_forward.5
$region0: #{residual_block_forward.5}
  #allocation0 [shape = 'u32[]', space=smem, size = 0x4, offset = 0x4, fixed_abs, tag = 'smem constant byte address 0x4 - core index']
  #allocation1 [shape = 'u32[144,128]{1,0:T(1,128)}', space=vmem, size = 0x12000, scoped, tag = 'internal scratch']
  %s0 = inlined_call_operand.vmem [shape: f32[2,16,16,4], index: 0, kind: input, shape index: {}]
  %s1 = inlined_call_operand.vmem [shape: bf16[4,8], index: 1, kind: input, shape index: {}]
  %s2 = inlined_call_operand.vmem [shape: f32[1,8], index: 2, kind: input, shape index: {}]
  %s3 = inlined_call_operand.vmem [shape: f32[2,16,16,8], index: 3, kind: output, shape index: {0}]
  %s4 = inlined_call_operand.vmem [shape: f32[2,1,8], index: 4, kind: output, shape index: {1}]
  %s5 = inlined_call_operand.vmem [shape: f32[2,1,8], index: 5, kind: output, shape index: {2}]
  %6 = xla_tuple %s3, %s4, %s5
  %s7 = sld [smem:[#allocation0]]
  $region65: #{residual_block_forward.5} parent=0
    _
  %s9 = ssub.s32 1, %s7
  %s10 = scalar_select 0, %s9, %s7
  loop: start=0, step=1, limit=4
  $region2: #{residual_block_forward.5} parent=0 // loop_pre_header
    _
  $region3: #{residual_block_forward.5} parent=0 // loop_header
    %s12 = sphi 0, %s16
    %p13 = scmp.ge.s32.totalorder %s12, 4
    %s19 = sphi 0, %s31
    %s20 = sphi 0, %s27
    %s21 = sphi 0, %s19
    %s22 = sphi 0, %s20
    %s23 = sphi 0, %s21
    %s24 = sphi 0, %s22
    %s36 = sphi 0, %s38
    %s39 = sphi 0, %s36
    %s40 = sphi 0, %s39
    %s56 = sphi 0, %s40
    %s60 = sphi 0, %s60
    %s62 = sphi 0, %s60
    %s63 = sphi 0, %s62
    %s77 = sphi 0, %s63
    %s81 = sphi 0, %s81
    %s83 = sphi 0, %s81
    %s84 = sphi 0, %s83
    %s98 = sphi 0, %s84
    %s106 = sphi 0, %s108
    %s109 = sphi 0, %s106
    %s110 = sphi 0, %s109
    %s126 = sphi 0, %s110
    %s132 = sphi 0, %s134
    %s135 = sphi 0, %s132
    %s136 = sphi 0, %s135
    %s152 = sphi 0, %s136
    %s158 = sphi 0, %s160
    %s161 = sphi 0, %s158
    %s162 = sphi 0, %s161
    %s178 = sphi 0, %s162
  $region4: #{residual_block_forward.5} parent=0 // loop_header_branch
    %15 = sbr.rel (%p13) target = $region8
  $region5: #{residual_block_forward.5} parent=0 // loop_body
    %s17 = ssub.s32 %s12, 1
    %s18 = ssub.s32 %s12, 2
    %s25 = sadd.s32 1, %s20
    %p26 = scmp.ge.s32.totalorder %s25, 1
    %s27 = scalar_select %p26, 0, %s25
    %s28 = sadd.s32 1, %s19
    %s29 = scalar_select %p26, %s28, %s19
    %p30 = scmp.ge.s32.totalorder %s29, 2
    %s31 = scalar_select %p30, 0, %s29
    %s32 = sadd.s32 %s19, %s20
    %s33 = sadd.s32 %s31, %s27
    %s34 = ssub.s32 %s32, %s33
    %p35 = scmp.eq.s32.totalorder %s34, 0
    %s37 = sadd.s32 %s36, 1
    %s38 = scalar_select %p35, %s36, %s37
    %p41 = pneg %p35
    %p42 = scmp.eq.s32.totalorder %s12, 1
    %p43 = por %p41, %p42
    %p44 = scmp.ne.s32.totalorder %s36, %s39
    %p45 = scmp.eq.s32.totalorder %s12, 0
    %p46 = por %p44, %p45
    %p47 = scmp.ne.s32.totalorder %s36, %s39
    %p48 = scmp.eq.s32.totalorder %s17, 1
    %p49 = por %p47, %p48
    %p50 = scmp.ne.s32.totalorder %s39, %s40
    %p51 = scmp.eq.s32.totalorder %s17, 0
    %p52 = por %p50, %p51
    %p53 = scmp.ne.s32.totalorder %s39, %s40
    %p54 = scmp.eq.s32.totalorder %s18, 1
    %p55 = por %p53, %p54
    %p57 = scmp.ne.s32.totalorder %s40, %s56
    %p58 = scmp.eq.s32.totalorder %s18, 0
    %p59 = por %p57, %p58
    %s61 = sadd.s32 %s60, 1
    %p64 = scmp.eq.s32.totalorder %s12, 1
    %p65 = scmp.ne.s32.totalorder %s60, %s62
    %p66 = scmp.eq.s32.totalorder %s12, 0
    %p67 = por %p65, %p66
    %p68 = scmp.ne.s32.totalorder %s60, %s62
    %p69 = scmp.eq.s32.totalorder %s17, 1
    %p70 = por %p68, %p69
    %p71 = scmp.ne.s32.totalorder %s62, %s63
    %p72 = scmp.eq.s32.totalorder %s17, 0
    %p73 = por %p71, %p72
    %p74 = scmp.ne.s32.totalorder %s62, %s63
    %p75 = scmp.eq.s32.totalorder %s18, 1
    %p76 = por %p74, %p75
    %p78 = scmp.ne.s32.totalorder %s63, %s77
    %p79 = scmp.eq.s32.totalorder %s18, 0
    %p80 = por %p78, %p79
    %s82 = sadd.s32 %s81, 1
    %p85 = scmp.eq.s32.totalorder %s12, 1
    %p86 = scmp.ne.s32.totalorder %s81, %s83
    %p87 = scmp.eq.s32.totalorder %s12, 0
    %p88 = por %p86, %p87
    %p89 = scmp.ne.s32.totalorder %s81, %s83
    %p90 = scmp.eq.s32.totalorder %s17, 1
    %p91 = por %p89, %p90
    %p92 = scmp.ne.s32.totalorder %s83, %s84
    %p93 = scmp.eq.s32.totalorder %s17, 0
    %p94 = por %p92, %p93
    %p95 = scmp.ne.s32.totalorder %s83, %s84
    %p96 = scmp.eq.s32.totalorder %s18, 1
    %p97 = por %p95, %p96
    %p99 = scmp.ne.s32.totalorder %s84, %s98
    %p100 = scmp.eq.s32.totalorder %s18, 0
    %p101 = por %p99, %p100
    %s102 = sadd.s32 %s19, %s20
    %s103 = sadd.s32 %s31, %s27
    %s104 = ssub.s32 %s102, %s103
    %p105 = scmp.eq.s32.totalorder %s104, 0
    %s107 = sadd.s32 %s106, 1
    %s108 = scalar_select %p105, %s106, %s107
    %p111 = pneg %p105
    %p112 = scmp.eq.s32.totalorder %s12, 1
    %p113 = por %p111, %p112
    %p114 = scmp.ne.s32.totalorder %s106, %s109
    %p115 = scmp.eq.s32.totalorder %s12, 0
    %p116 = por %p114, %p115
    %p117 = scmp.ne.s32.totalorder %s106, %s109
    %p118 = scmp.eq.s32.totalorder %s17, 1
    %p119 = por %p117, %p118
    %p120 = scmp.ne.s32.totalorder %s109, %s110
    %p121 = scmp.eq.s32.totalorder %s17, 0
    %p122 = por %p120, %p121
    %p123 = scmp.ne.s32.totalorder %s109, %s110
    %p124 = scmp.eq.s32.totalorder %s18, 1
    %p125 = por %p123, %p124
    %p127 = scmp.ne.s32.totalorder %s110, %s126
    %p128 = scmp.eq.s32.totalorder %s18, 0
    %p129 = por %p127, %p128
    %s130 = ssub.s32 %s19, %s31
    %p131 = scmp.eq.s32.totalorder %s130, 0
    %s133 = sadd.s32 %s132, 1
    %s134 = scalar_select %p131, %s132, %s133
    %p137 = pneg %p131
    %p138 = scmp.eq.s32.totalorder %s12, 1
    %p139 = por %p137, %p138
    %p140 = scmp.ne.s32.totalorder %s132, %s135
    %p141 = scmp.eq.s32.totalorder %s12, 0
    %p142 = por %p140, %p141
    %p143 = scmp.ne.s32.totalorder %s132, %s135
    %p144 = scmp.eq.s32.totalorder %s17, 1
    %p145 = por %p143, %p144
    %p146 = scmp.ne.s32.totalorder %s135, %s136
    %p147 = scmp.eq.s32.totalorder %s17, 0
    %p148 = por %p146, %p147
    %p149 = scmp.ne.s32.totalorder %s135, %s136
    %p150 = scmp.eq.s32.totalorder %s18, 1
    %p151 = por %p149, %p150
    %p153 = scmp.ne.s32.totalorder %s136, %s152
    %p154 = scmp.eq.s32.totalorder %s18, 0
    %p155 = por %p153, %p154
    %s156 = ssub.s32 %s19, %s31
    %p157 = scmp.eq.s32.totalorder %s156, 0
    %s159 = sadd.s32 %s158, 1
    %s160 = scalar_select %p157, %s158, %s159
    %p163 = pneg %p157
    %p164 = scmp.eq.s32.totalorder %s12, 1
    %p165 = por %p163, %p164
    %p166 = scmp.ne.s32.totalorder %s158, %s161
    %p167 = scmp.eq.s32.totalorder %s12, 0
    %p168 = por %p166, %p167
    %p169 = scmp.ne.s32.totalorder %s158, %s161
    %p170 = scmp.eq.s32.totalorder %s17, 1
    %p171 = por %p169, %p170
    %p172 = scmp.ne.s32.totalorder %s161, %s162
    %p173 = scmp.eq.s32.totalorder %s17, 0
    %p174 = por %p172, %p173
    %p175 = scmp.ne.s32.totalorder %s161, %s162
    %p176 = scmp.eq.s32.totalorder %s18, 1
    %p177 = por %p175, %p176
    %p179 = scmp.ne.s32.totalorder %s162, %s178
    %p180 = scmp.eq.s32.totalorder %s18, 0
    %p181 = por %p179, %p180
    %p182 = scmp.le.s32.totalorder 1, %s12
    %p183 = scmp.lt.s32.totalorder %s12, 3
    %p184 = pnand %p182, %p183
    %p185 = pneg %p184
    // Predicated region
    $region9: #{residual_block_forward.5} parent=5 // pred_check
      _
    $region10: #{residual_block_forward.5} parent=5 // pred_check_branch
      %187 = sbr.rel (%p184) target = $region12
    $region11: #{residual_block_forward.5} parent=5 // pred_region
      %s188 = ssub.s32 %s12, 1
      // Predicated region
      $region13: #{residual_block_forward.5} parent=11 // pred_check
        %p189 = pneg %p73
      $region14: #{residual_block_forward.5} parent=11 // pred_check_branch
        %191 = sbr.rel (%p189) target = $region16
      $region15: #{residual_block_forward.5} parent=11 // pred_region
        _
      $region16: #{residual_block_forward.5} parent=11 // pred_fallthru
        _
      // Predicated region
      $region17: #{residual_block_forward.5} parent=11 // pred_check
        %p192 = pneg %p94
      $region18: #{residual_block_forward.5} parent=11 // pred_check_branch
        %194 = sbr.rel (%p192) target = $region20
      $region19: #{residual_block_forward.5} parent=11 // pred_region
        _
      $region20: #{residual_block_forward.5} parent=11 // pred_fallthru
        _
    $region12: #{residual_block_forward.5} parent=5 // pred_fallthru
      _
    %p195 = scmp.lt.s32.totalorder %s12, 2
    // Predicated region
    $region21: #{residual_block_forward.5} parent=5 // pred_check
      %p196 = pneg %p195
    $region22: #{residual_block_forward.5} parent=5 // pred_check_branch
      %198 = sbr.rel (%p196) target = $region24
    $region23: #{residual_block_forward.5} parent=5 // pred_region
      // Predicated region
      $region25: #{residual_block_forward.5} parent=23 // pred_check
        %p199 = pneg %p46
      $region26: #{residual_block_forward.5} parent=23 // pred_check_branch
        %201 = sbr.rel (%p199) target = $region28
      $region27: #{residual_block_forward.5} parent=23 // pred_region
        %s202 = sadd.s32 %s19, %s20
        %p203 = scmp.lt.s32.totalorder %s202, 1
        %s204 = scalar_select %p203, %s202, 1
        %s205 = smul.addr %s204, 32
        %s206 = smul.addr %s205, 8
        %s207 = scalar_lea.vmem %s0, %s206
        %s208 = sadd.s32 %s19, %s20
      $region28: #{residual_block_forward.5} parent=23 // pred_fallthru
        _
    $region24: #{residual_block_forward.5} parent=5 // pred_fallthru
      _
    %p209 = scmp.le.s32.totalorder 1, %s12
    %p210 = scmp.lt.s32.totalorder %s12, 3
    %p211 = pnand %p209, %p210
    %p212 = pneg %p211
    // Predicated region
    $region29: #{residual_block_forward.5} parent=5 // pred_check
      _
    $region30: #{residual_block_forward.5} parent=5 // pred_check_branch
      %214 = sbr.rel (%p211) target = $region32
    $region31: #{residual_block_forward.5} parent=5 // pred_region
      %s215 = ssub.s32 %s12, 1
      %s216 = sadd.s32 %s21, %s22
      %p217 = scmp.lt.s32.totalorder %s216, 1
      %s218 = scalar_select %p217, %s216, 1
      %s219 = smul.addr %s218, 32
      %s220 = smul.addr %s219, 8
      %s221 = scalar_lea.vmem %s0, %s220
      %p222 = pneg %p52
      %p223 = pneg %p49
      %p224 = pneg %p73
      %p225 = pneg %p70
      %p226 = pneg %p94
      %p227 = pneg %p91
      %p228 = pneg %p122
      %p229 = pneg %p119
      %s230 = sadd.s32 %s21, %s22
      %p231 = scmp.lt.s32.totalorder %s230, 1
      %s232 = scalar_select %p231, %s230, 1
      %s233 = smul.addr %s232, 32
      %s234 = smul.addr %s233, 8
      %s235 = scalar_lea.vmem %s3, %s234
      %p236 = pneg %p148
      %p237 = pneg %p145
      %p238 = scmp.lt.s32.totalorder %s21, 1
      %s239 = scalar_select %p238, %s21, 1
      %s240 = scalar_lea.vmem %s4, %s239
      %p241 = pneg %p174
      %p242 = pneg %p171
      %p243 = scmp.lt.s32.totalorder %s21, 1
      %s244 = scalar_select %p243, %s21, 1
      %s245 = scalar_lea.vmem %s5, %s244
      %s246 = sadd.s32 %s21, %s22
      %p247 = scmp.lt.s32.totalorder %s246, 1
      %s248 = scalar_select %p247, %s246, 1
      %s249 = smul.addr %s248, 32
      %s250 = smul.addr %s249, 8
      %s251 = scalar_lea.vmem %s0, %s250
      %s252 = sadd.s32 %s21, %s22
      %s253 = sadd.s32 %s21, %s22
      %p254 = scmp.lt.s32.totalorder %s253, 1
      %s255 = scalar_select %p254, %s253, 1
      %s256 = smul.addr %s255, 32
      %s257 = smul.addr %s256, 8
      %s258 = scalar_lea.vmem %s3, %s257
      %s259 = sadd.s32 %s21, %s22
      %p260 = scmp.lt.s32.totalorder %s21, 1
      %s261 = scalar_select %p260, %s21, 1
      %s262 = scalar_lea.vmem %s4, %s261
      %p263 = scmp.lt.s32.totalorder %s21, 1
      %s264 = scalar_select %p263, %s21, 1
      %s265 = scalar_lea.vmem %s5, %s264
      %p267 = scmp.eq.s32.totalorder %s22, 0
      // Predicated region
      $region33: #{residual_block_forward.5} parent=31 // pred_check
        %p268 = pneg %p267
      $region34: #{residual_block_forward.5} parent=31 // pred_check_branch
        %270 = sbr.rel (%p268) target = $region36
      $region35: #{residual_block_forward.5} parent=31 // pred_region
        %vm271 = vcmask 57344
        %272 = vst.msk [vmem:[%s262] sm:$0x1] %vm271, 0.0
        %273 = vst.msk [vmem:[%s265] sm:$0x1] %vm271, 0.0
      $region36: #{residual_block_forward.5} parent=31 // pred_fallthru
        _
      %v274 = vld [vmem:[%s251] sm:$0xff]
      %v275 = vld [vmem:[%s251 + $0x8] sm:$0xff]
      %v276 = vld [vmem:[%s251 + $0x10] sm:$0xff]
      %v277 = vld [vmem:[%s251 + $0x18] sm:$0xff]
      %v278 = vld [vmem:[%s251 + $0x20] sm:$0xff]
      %v279 = vld [vmem:[%s251 + $0x28] sm:$0xff]
      %v280 = vld [vmem:[%s251 + $0x30] sm:$0xff]
      %v281 = vld [vmem:[%s251 + $0x38] sm:$0xff]
      %v282 = vld [vmem:[%s251 + $0x40] sm:$0xff]
      %v283 = vld [vmem:[%s251 + $0x48] sm:$0xff]
      %v284 = vld [vmem:[%s251 + $0x50] sm:$0xff]
      %v285 = vld [vmem:[%s251 + $0x58] sm:$0xff]
      %v286 = vld [vmem:[%s251 + $0x60] sm:$0xff]
      %v287 = vld [vmem:[%s251 + $0x68] sm:$0xff]
      %v288 = vld [vmem:[%s251 + $0x70] sm:$0xff]
      %v289 = vld [vmem:[%s251 + $0x78] sm:$0xff]
      %v290 = vld [vmem:[%s251 + $0x80] sm:$0xff]
      %v291 = vld [vmem:[%s251 + $0x88] sm:$0xff]
      %v292 = vld [vmem:[%s251 + $0x90] sm:$0xff]
      %v293 = vld [vmem:[%s251 + $0x98] sm:$0xff]
      %v294 = vld [vmem:[%s251 + $0xa0] sm:$0xff]
      %v295 = vld [vmem:[%s251 + $0xa8] sm:$0xff]
      %v296 = vld [vmem:[%s251 + $0xb0] sm:$0xff]
      %v297 = vld [vmem:[%s251 + $0xb8] sm:$0xff]
      %v298 = vld [vmem:[%s251 + $0xc0] sm:$0xff]
      %v299 = vld [vmem:[%s251 + $0xc8] sm:$0xff]
      %v300 = vld [vmem:[%s251 + $0xd0] sm:$0xff]
      %v301 = vld [vmem:[%s251 + $0xd8] sm:$0xff]
      %v302 = vld [vmem:[%s251 + $0xe0] sm:$0xff]
      %v303 = vld [vmem:[%s251 + $0xe8] sm:$0xff]
      %v304 = vld [vmem:[%s251 + $0xf0] sm:$0xff]
      %v305 = vld [vmem:[%s251 + $0xf8] sm:$0xff]
      %v306 = vpack.c.bf16 %v275, %v274
      %v307 = vpack.c.bf16 %v277, %v276
      %v308 = vpack.c.bf16 %v279, %v278
      %v309 = vpack.c.bf16 %v281, %v280
      %v310 = vpack.c.bf16 %v283, %v282
      %v311 = vpack.c.bf16 %v285, %v284
      %v312 = vpack.c.bf16 %v287, %v286
      %v313 = vpack.c.bf16 %v289, %v288
      %v314 = vpack.c.bf16 %v291, %v290
      %v315 = vpack.c.bf16 %v293, %v292
      %v316 = vpack.c.bf16 %v295, %v294
      %v317 = vpack.c.bf16 %v297, %v296
      %v318 = vpack.c.bf16 %v299, %v298
      %v319 = vpack.c.bf16 %v301, %v300
      %v320 = vpack.c.bf16 %v303, %v302
      %v321 = vpack.c.bf16 %v305, %v304
      %v322 = vld [vmem:[%s1] sm:$0x3]
      %v323 = vld [vmem:[%s2] sm:$0x1]
      %v325 = vlaneseq
      %v326 = vshrl.u32 %v325, 7
      %v327 = vsub.s32 0, %v326
      %v328 = vrot.slane %v323, %v327
      %vm330 = vcmask 31744
      %v332 = vsel %vm330, %v306, 0
      %v335 = vsel %vm330, %v307, 0
      %v338 = vsel %vm330, %v308, 0
      %v341 = vsel %vm330, %v309, 0
      %v344 = vsel %vm330, %v310, 0
      %v347 = vsel %vm330, %v311, 0
      %v350 = vsel %vm330, %v312, 0
      %v353 = vsel %vm330, %v313, 0
      %v356 = vsel %vm330, %v314, 0
      %v359 = vsel %vm330, %v315, 0
      %v362 = vsel %vm330, %v316, 0
      %v365 = vsel %vm330, %v317, 0
      %v368 = vsel %vm330, %v318, 0
      %v371 = vsel %vm330, %v319, 0
      %v374 = vsel %vm330, %v320, 0
      %v377 = vsel %vm330, %v321, 0
      %vm379 = vcmask 1041408
      %v381 = vsel %vm379, %v322, 0
      %383 = vmatprep.subr.bf16.mxu0 0
      %384 = vmatpush1.bf16.msra.mxu0 0
      %385 = vmatprep.subr.bf16.mxu0 0
      %386 = vmatpush1.bf16.msra.mxu0 0
      %387 = vmatprep.subr.bf16.mxu0 0
      %388 = vmatpush1.bf16.msra.mxu0 0
      %389 = vmatprep.subr.bf16.mxu0 0
      %390 = vmatpush1.bf16.msra.mxu0 0
      %391 = vmatprep.subr.bf16.mxu0 0
      %392 = vmatpush1.bf16.msra.mxu0 0
      %393 = vmatprep.subr.bf16.mxu0 0
      %394 = vmatpush1.bf16.msra.mxu0 0
      %395 = vmatprep.subr.bf16.mxu0 0
      %396 = vmatpush1.bf16.msra.mxu0 0
      %397 = vmatprep.subr.bf16.mxu0 0
      %398 = vmatpush1.bf16.msra.mxu0 %v381
      %399 = vmatprep.subr.bf16.mxu0 0
      %400 = vmatpush2.bf16.msra.mxu0 0
      %401 = vmatprep.subr.bf16.mxu0 0
      %402 = vmatpush2.bf16.msra.mxu0 0
      %403 = vmatprep.subr.bf16.mxu0 0
      %404 = vmatpush2.bf16.msra.mxu0 0
      %405 = vmatprep.subr.bf16.mxu0 0
      %406 = vmatpush2.bf16.msra.mxu0 0
      %407 = vmatprep.subr.bf16.mxu0 0
      %408 = vmatpush2.bf16.msra.mxu0 0
      %409 = vmatprep.subr.bf16.mxu0 0
      %410 = vmatpush2.bf16.msra.mxu0 0
      %411 = vmatprep.subr.bf16.mxu0 0
      %412 = vmatpush2.bf16.msra.mxu0 0
      %413 = vmatprep.subr.bf16.mxu0 0
      %414 = vmatpush2.bf16.msra.mxu0 0
      %415 = vmatprep.mubr.bf16.mxu0 0
      %416 = vmatmul.mubr.bf16.gmra.mxu0 %v332
      %v417 = vpop.f32.mrf.mxu0
      %v418 = vadd.f32 %v328, %v417
      %v419 = vpop.f32.mrf.mxu0
      %v420 = vpop.f32.mrf.mxu0
      %v421 = vadd.f32 %v328, %v420
      %v422 = vpop.f32.mrf.mxu0
      %423 = vmatprep.mubr.bf16.mxu0 0
      %424 = vmatmul.mubr.bf16.gmra.mxu0 %v335
      %v425 = vpop.f32.mrf.mxu0
      %v426 = vadd.f32 %v328, %v425
      %v427 = vpop.f32.mrf.mxu0
      %v428 = vpop.f32.mrf.mxu0
      %v429 = vadd.f32 %v328, %v428
      %v430 = vpop.f32.mrf.mxu0
      %431 = vmatprep.mubr.bf16.mxu0 0
      %432 = vmatmul.mubr.bf16.gmra.mxu0 %v338
      %v433 = vpop.f32.mrf.mxu0
      %v434 = vadd.f32 %v328, %v433
      %v435 = vpop.f32.mrf.mxu0
      %v436 = vpop.f32.mrf.mxu0
      %v437 = vadd.f32 %v328, %v436
      %v438 = vpop.f32.mrf.mxu0
      %439 = vmatprep.mubr.bf16.mxu0 0
      %440 = vmatmul.mubr.bf16.gmra.mxu0 %v341
      %v441 = vpop.f32.mrf.mxu0
      %v442 = vadd.f32 %v328, %v441
      %v443 = vpop.f32.mrf.mxu0
      %v444 = vpop.f32.mrf.mxu0
      %v445 = vadd.f32 %v328, %v444
      %v446 = vpop.f32.mrf.mxu0
      %447 = vmatprep.mubr.bf16.mxu0 0
      %448 = vmatmul.mubr.bf16.gmra.mxu0 %v344
      %v449 = vpop.f32.mrf.mxu0
      %v450 = vadd.f32 %v328, %v449
      %v451 = vpop.f32.mrf.mxu0
      %v452 = vpop.f32.mrf.mxu0
      %v453 = vadd.f32 %v328, %v452
      %v454 = vpop.f32.mrf.mxu0
      %455 = vmatprep.mubr.bf16.mxu0 0
      %456 = vmatmul.mubr.bf16.gmra.mxu0 %v347
      %v457 = vpop.f32.mrf.mxu0
      %v458 = vadd.f32 %v328, %v457
      %v459 = vpop.f32.mrf.mxu0
      %v460 = vpop.f32.mrf.mxu0
      %v461 = vadd.f32 %v328, %v460
      %v462 = vpop.f32.mrf.mxu0
      %463 = vmatprep.mubr.bf16.mxu0 0
      %464 = vmatmul.mubr.bf16.gmra.mxu0 %v350
      %v465 = vpop.f32.mrf.mxu0
      %v466 = vadd.f32 %v328, %v465
      %v467 = vpop.f32.mrf.mxu0
      %v468 = vpop.f32.mrf.mxu0
      %v469 = vadd.f32 %v328, %v468
      %v470 = vpop.f32.mrf.mxu0
      %471 = vmatprep.mubr.bf16.mxu0 0
      %472 = vmatmul.mubr.bf16.gmra.mxu0 %v353
      %v473 = vpop.f32.mrf.mxu0
      %v474 = vadd.f32 %v328, %v473
      %v475 = vpop.f32.mrf.mxu0
      %v476 = vpop.f32.mrf.mxu0
      %v477 = vadd.f32 %v328, %v476
      %v478 = vpop.f32.mrf.mxu0
      %479 = vmatprep.mubr.bf16.mxu0 0
      %480 = vmatmul.mubr.bf16.gmra.mxu0 %v356
      %v481 = vpop.f32.mrf.mxu0
      %v482 = vadd.f32 %v328, %v481
      %v483 = vpop.f32.mrf.mxu0
      %v484 = vpop.f32.mrf.mxu0
      %v485 = vadd.f32 %v328, %v484
      %v486 = vpop.f32.mrf.mxu0
      %487 = vmatprep.mubr.bf16.mxu0 0
      %488 = vmatmul.mubr.bf16.gmra.mxu0 %v359
      %v489 = vpop.f32.mrf.mxu0
      %v490 = vadd.f32 %v328, %v489
      %v491 = vpop.f32.mrf.mxu0
      %v492 = vpop.f32.mrf.mxu0
      %v493 = vadd.f32 %v328, %v492
      %v494 = vpop.f32.mrf.mxu0
      %495 = vmatprep.mubr.bf16.mxu0 0
      %496 = vmatmul.mubr.bf16.gmra.mxu0 %v362
      %v497 = vpop.f32.mrf.mxu0
      %v498 = vadd.f32 %v328, %v497
      %v499 = vpop.f32.mrf.mxu0
      %v500 = vpop.f32.mrf.mxu0
      %v501 = vadd.f32 %v328, %v500
      %v502 = vpop.f32.mrf.mxu0
      %503 = vmatprep.mubr.bf16.mxu0 0
      %504 = vmatmul.mubr.bf16.gmra.mxu0 %v365
      %v505 = vpop.f32.mrf.mxu0
      %v506 = vadd.f32 %v328, %v505
      %v507 = vpop.f32.mrf.mxu0
      %v508 = vpop.f32.mrf.mxu0
      %v509 = vadd.f32 %v328, %v508
      %v510 = vpop.f32.mrf.mxu0
      %511 = vmatprep.mubr.bf16.mxu0 0
      %512 = vmatmul.mubr.bf16.gmra.mxu0 %v368
      %v513 = vpop.f32.mrf.mxu0
      %v514 = vadd.f32 %v328, %v513
      %v515 = vpop.f32.mrf.mxu0
      %v516 = vpop.f32.mrf.mxu0
      %v517 = vadd.f32 %v328, %v516
      %v518 = vpop.f32.mrf.mxu0
      %519 = vmatprep.mubr.bf16.mxu0 0
      %520 = vmatmul.mubr.bf16.gmra.mxu0 %v371
      %v521 = vpop.f32.mrf.mxu0
      %v522 = vadd.f32 %v328, %v521
      %v523 = vpop.f32.mrf.mxu0
      %v524 = vpop.f32.mrf.mxu0
      %v525 = vadd.f32 %v328, %v524
      %v526 = vpop.f32.mrf.mxu0
      %527 = vmatprep.mubr.bf16.mxu0 0
      %528 = vmatmul.mubr.bf16.gmra.mxu0 %v374
      %v529 = vpop.f32.mrf.mxu0
      %v530 = vadd.f32 %v328, %v529
      %v531 = vpop.f32.mrf.mxu0
      %v532 = vpop.f32.mrf.mxu0
      %v533 = vadd.f32 %v328, %v532
      %v534 = vpop.f32.mrf.mxu0
      %535 = vmatprep.mubr.bf16.mxu0 0
      %536 = vmatmul.mubr.bf16.gmra.mxu0 %v377
      %v537 = vpop.f32.mrf.mxu0
      %v538 = vadd.f32 %v328, %v537
      %v539 = vpop.f32.mrf.mxu0
      %v540 = vpop.f32.mrf.mxu0
      %v541 = vadd.f32 %v328, %v540
      %v542 = vpop.f32.mrf.mxu0
      %543 = vdwg.mxu0
      %v544 = vld [vmem:[%s262] sm:$0x1]
      %vm545 = vcmask 64512
      %v546 = vsel %vm545, %v418, 0.0
      %v547 = vsel %vm545, %v421, 0.0
      %v548 = vadd.f32 %v546, %v547
      %v549 = vsel %vm545, %v426, 0.0
      %v550 = vadd.f32 %v548, %v549
      %v551 = vsel %vm545, %v429, 0.0
      %v552 = vadd.f32 %v550, %v551
      %v553 = vsel %vm545, %v434, 0.0
      %v554 = vadd.f32 %v552, %v553
      %v555 = vsel %vm545, %v437, 0.0
      %v556 = vadd.f32 %v554, %v555
      %v557 = vsel %vm545, %v442, 0.0
      %v558 = vadd.f32 %v556, %v557
      %v559 = vsel %vm545, %v445, 0.0
      %v560 = vadd.f32 %v558, %v559
      %v561 = vsel %vm545, %v450, 0.0
      %v562 = vadd.f32 %v560, %v561
      %v563 = vsel %vm545, %v453, 0.0
      %v564 = vadd.f32 %v562, %v563
      %v565 = vsel %vm545, %v458, 0.0
      %v566 = vadd.f32 %v564, %v565
      %v567 = vsel %vm545, %v461, 0.0
      %v568 = vadd.f32 %v566, %v567
      %v569 = vsel %vm545, %v466, 0.0
      %v570 = vadd.f32 %v568, %v569
      %v571 = vsel %vm545, %v469, 0.0
      %v572 = vadd.f32 %v570, %v571
      %v573 = vsel %vm545, %v474, 0.0
      %v574 = vadd.f32 %v572, %v573
      %v575 = vsel %vm545, %v477, 0.0
      %v576 = vadd.f32 %v574, %v575
      %v577 = vsel %vm545, %v482, 0.0
      %v578 = vadd.f32 %v576, %v577
      %v579 = vsel %vm545, %v485, 0.0
      %v580 = vadd.f32 %v578, %v579
      %v581 = vsel %vm545, %v490, 0.0
      %v582 = vadd.f32 %v580, %v581
      %v583 = vsel %vm545, %v493, 0.0
      %v584 = vadd.f32 %v582, %v583
      %v585 = vsel %vm545, %v498, 0.0
      %v586 = vadd.f32 %v584, %v585
      %v587 = vsel %vm545, %v501, 0.0
      %v588 = vadd.f32 %v586, %v587
      %v589 = vsel %vm545, %v506, 0.0
      %v590 = vadd.f32 %v588, %v589
      %v591 = vsel %vm545, %v509, 0.0
      %v592 = vadd.f32 %v590, %v591
      %v593 = vsel %vm545, %v514, 0.0
      %v594 = vadd.f32 %v592, %v593
      %v595 = vsel %vm545, %v517, 0.0
      %v596 = vadd.f32 %v594, %v595
      %v597 = vsel %vm545, %v522, 0.0
      %v598 = vadd.f32 %v596, %v597
      %v599 = vsel %vm545, %v525, 0.0
      %v600 = vadd.f32 %v598, %v599
      %v601 = vsel %vm545, %v530, 0.0
      %v602 = vadd.f32 %v600, %v601
      %v603 = vsel %vm545, %v533, 0.0
      %v604 = vadd.f32 %v602, %v603
      %v605 = vsel %vm545, %v538, 0.0
      %v606 = vadd.f32 %v604, %v605
      %v607 = vsel %vm545, %v541, 0.0
      %v608 = vadd.f32 %v606, %v607
      %v609 = vrot.slane %v608, 4
      %v610 = vadd.f32 %v608, %v609
      %v611 = vrot.slane %v610, 2
      %v612 = vadd.f32 %v610, %v611
      %v613 = vrot.slane %v612, 1
      %v614 = vadd.f32 %v612, %v613
      %v615 = vadd.f32 %v544, %v614
      %vm616 = vcmask 57344
      %617 = vst.msk [vmem:[%s262] sm:$0x1] %vm616, %v615
      %v618 = vld [vmem:[%s265] sm:$0x1]
      %v619 = vmul.f32 %v418, %v418
      %v620 = vmul.f32 %v421, %v421
      %v621 = vmul.f32 %v426, %v426
      %v622 = vmul.f32 %v429, %v429
      %v623 = vmul.f32 %v434, %v434
      %v624 = vmul.f32 %v437, %v437
      %v625 = vmul.f32 %v442, %v442
      %v626 = vmul.f32 %v445, %v445
      %v627 = vmul.f32 %v450, %v450
      %v628 = vmul.f32 %v453, %v453
      %v629 = vmul.f32 %v458, %v458
      %v630 = vmul.f32 %v461, %v461
      %v631 = vmul.f32 %v466, %v466
      %v632 = vmul.f32 %v469, %v469
      %v633 = vmul.f32 %v474, %v474
      %v634 = vmul.f32 %v477, %v477
      %v635 = vmul.f32 %v482, %v482
      %v636 = vmul.f32 %v485, %v485
      %v637 = vmul.f32 %v490, %v490
      %v638 = vmul.f32 %v493, %v493
      %v639 = vmul.f32 %v498, %v498
      %v640 = vmul.f32 %v501, %v501
      %v641 = vmul.f32 %v506, %v506
      %v642 = vmul.f32 %v509, %v509
      %v643 = vmul.f32 %v514, %v514
      %v644 = vmul.f32 %v517, %v517
      %v645 = vmul.f32 %v522, %v522
      %v646 = vmul.f32 %v525, %v525
      %v647 = vmul.f32 %v530, %v530
      %v648 = vmul.f32 %v533, %v533
      %v649 = vmul.f32 %v538, %v538
      %v650 = vmul.f32 %v541, %v541
      %v651 = vsel %vm545, %v619, 0.0
      %v652 = vsel %vm545, %v620, 0.0
      %v653 = vadd.f32 %v651, %v652
      %v654 = vsel %vm545, %v621, 0.0
      %v655 = vadd.f32 %v653, %v654
      %v656 = vsel %vm545, %v622, 0.0
      %v657 = vadd.f32 %v655, %v656
      %v658 = vsel %vm545, %v623, 0.0
      %v659 = vadd.f32 %v657, %v658
      %v660 = vsel %vm545, %v624, 0.0
      %v661 = vadd.f32 %v659, %v660
      %v662 = vsel %vm545, %v625, 0.0
      %v663 = vadd.f32 %v661, %v662
      %v664 = vsel %vm545, %v626, 0.0
      %v665 = vadd.f32 %v663, %v664
      %v666 = vsel %vm545, %v627, 0.0
      %v667 = vadd.f32 %v665, %v666
      %v668 = vsel %vm545, %v628, 0.0
      %v669 = vadd.f32 %v667, %v668
      %v670 = vsel %vm545, %v629, 0.0
      %v671 = vadd.f32 %v669, %v670
      %v672 = vsel %vm545, %v630, 0.0
      %v673 = vadd.f32 %v671, %v672
      %v674 = vsel %vm545, %v631, 0.0
      %v675 = vadd.f32 %v673, %v674
      %v676 = vsel %vm545, %v632, 0.0
      %v677 = vadd.f32 %v675, %v676
      %v678 = vsel %vm545, %v633, 0.0
      %v679 = vadd.f32 %v677, %v678
      %v680 = vsel %vm545, %v634, 0.0
      %v681 = vadd.f32 %v679, %v680
      %v682 = vsel %vm545, %v635, 0.0
      %v683 = vadd.f32 %v681, %v682
      %v684 = vsel %vm545, %v636, 0.0
      %v685 = vadd.f32 %v683, %v684
      %v686 = vsel %vm545, %v637, 0.0
      %v687 = vadd.f32 %v685, %v686
      %v688 = vsel %vm545, %v638, 0.0
      %v689 = vadd.f32 %v687, %v688
      %v690 = vsel %vm545, %v639, 0.0
      %v691 = vadd.f32 %v689, %v690
      %v692 = vsel %vm545, %v640, 0.0
      %v693 = vadd.f32 %v691, %v692
      %v694 = vsel %vm545, %v641, 0.0
      %v695 = vadd.f32 %v693, %v694
      %v696 = vsel %vm545, %v642, 0.0
      %v697 = vadd.f32 %v695, %v696
      %v698 = vsel %vm545, %v643, 0.0
      %v699 = vadd.f32 %v697, %v698
      %v700 = vsel %vm545, %v644, 0.0
      %v701 = vadd.f32 %v699, %v700
      %v702 = vsel %vm545, %v645, 0.0
      %v703 = vadd.f32 %v701, %v702
      %v704 = vsel %vm545, %v646, 0.0
      %v705 = vadd.f32 %v703, %v704
      %v706 = vsel %vm545, %v647, 0.0
      %v707 = vadd.f32 %v705, %v706
      %v708 = vsel %vm545, %v648, 0.0
      %v709 = vadd.f32 %v707, %v708
      %v710 = vsel %vm545, %v649, 0.0
      %v711 = vadd.f32 %v709, %v710
      %v712 = vsel %vm545, %v650, 0.0
      %v713 = vadd.f32 %v711, %v712
      %v714 = vrot.slane %v713, 4
      %v715 = vadd.f32 %v713, %v714
      %v716 = vrot.slane %v715, 2
      %v717 = vadd.f32 %v715, %v716
      %v718 = vrot.slane %v717, 1
      %v719 = vadd.f32 %v717, %v718
      %v720 = vadd.f32 %v618, %v719
      %721 = vst.msk [vmem:[%s265] sm:$0x1] %vm616, %v720
      %722 = vst.msk [vmem:[%s258] sm:$0xff] %vm545, %v418
      %723 = vst.msk [vmem:[%s258 + $0x8] sm:$0xff] %vm545, %v421
      %724 = vst.msk [vmem:[%s258 + $0x10] sm:$0xff] %vm545, %v426
      %725 = vst.msk [vmem:[%s258 + $0x18] sm:$0xff] %vm545, %v429
      %726 = vst.msk [vmem:[%s258 + $0x20] sm:$0xff] %vm545, %v434
      %727 = vst.msk [vmem:[%s258 + $0x28] sm:$0xff] %vm545, %v437
      %728 = vst.msk [vmem:[%s258 + $0x30] sm:$0xff] %vm545, %v442
      %729 = vst.msk [vmem:[%s258 + $0x38] sm:$0xff] %vm545, %v445
      %730 = vst.msk [vmem:[%s258 + $0x40] sm:$0xff] %vm545, %v450
      %731 = vst.msk [vmem:[%s258 + $0x48] sm:$0xff] %vm545, %v453
      %732 = vst.msk [vmem:[%s258 + $0x50] sm:$0xff] %vm545, %v458
      %733 = vst.msk [vmem:[%s258 + $0x58] sm:$0xff] %vm545, %v461
      %734 = vst.msk [vmem:[%s258 + $0x60] sm:$0xff] %vm545, %v466
      %735 = vst.msk [vmem:[%s258 + $0x68] sm:$0xff] %vm545, %v469
      %736 = vst.msk [vmem:[%s258 + $0x70] sm:$0xff] %vm545, %v474
      %737 = vst.msk [vmem:[%s258 + $0x78] sm:$0xff] %vm545, %v477
      %738 = vst.msk [vmem:[%s258 + $0x80] sm:$0xff] %vm545, %v482
      %739 = vst.msk [vmem:[%s258 + $0x88] sm:$0xff] %vm545, %v485
      %740 = vst.msk [vmem:[%s258 + $0x90] sm:$0xff] %vm545, %v490
      %741 = vst.msk [vmem:[%s258 + $0x98] sm:$0xff] %vm545, %v493
      %742 = vst.msk [vmem:[%s258 + $0xa0] sm:$0xff] %vm545, %v498
      %743 = vst.msk [vmem:[%s258 + $0xa8] sm:$0xff] %vm545, %v501
      %744 = vst.msk [vmem:[%s258 + $0xb0] sm:$0xff] %vm545, %v506
      %745 = vst.msk [vmem:[%s258 + $0xb8] sm:$0xff] %vm545, %v509
      %746 = vst.msk [vmem:[%s258 + $0xc0] sm:$0xff] %vm545, %v514
      %747 = vst.msk [vmem:[%s258 + $0xc8] sm:$0xff] %vm545, %v517
      %748 = vst.msk [vmem:[%s258 + $0xd0] sm:$0xff] %vm545, %v522
      %749 = vst.msk [vmem:[%s258 + $0xd8] sm:$0xff] %vm545, %v525
      %750 = vst.msk [vmem:[%s258 + $0xe0] sm:$0xff] %vm545, %v530
      %751 = vst.msk [vmem:[%s258 + $0xe8] sm:$0xff] %vm545, %v533
      %752 = vst.msk [vmem:[%s258 + $0xf0] sm:$0xff] %vm545, %v538
      %753 = vst.msk [vmem:[%s258 + $0xf8] sm:$0xff] %vm545, %v541
      %s754 = sadd.s32 %s21, %s22
      %p755 = scmp.lt.s32.totalorder %s754, 1
      %s756 = scalar_select %p755, %s754, 1
      %s757 = smul.addr %s756, 32
      %s758 = smul.addr %s757, 8
      %s759 = scalar_lea.vmem %s3, %s758
      %p760 = scmp.lt.s32.totalorder %s21, 1
      %s761 = scalar_select %p760, %s21, 1
      %s762 = scalar_lea.vmem %s4, %s761
      %p763 = scmp.lt.s32.totalorder %s21, 1
      %s764 = scalar_select %p763, %s21, 1
      %s765 = scalar_lea.vmem %s5, %s764
      // Predicated region
      $region37: #{residual_block_forward.5} parent=31 // pred_check
        %p766 = pneg %p119
      $region38: #{residual_block_forward.5} parent=31 // pred_check_branch
        %768 = sbr.rel (%p766) target = $region40
      $region39: #{residual_block_forward.5} parent=31 // pred_region
        %s769 = sadd.s32 %s21, %s22
      $region40: #{residual_block_forward.5} parent=31 // pred_fallthru
        _
      // Predicated region
      $region41: #{residual_block_forward.5} parent=31 // pred_check
        %p770 = pneg %p145
      $region42: #{residual_block_forward.5} parent=31 // pred_check_branch
        %772 = sbr.rel (%p770) target = $region44
      $region43: #{residual_block_forward.5} parent=31 // pred_region
        _
      $region44: #{residual_block_forward.5} parent=31 // pred_fallthru
        _
      // Predicated region
      $region45: #{residual_block_forward.5} parent=31 // pred_check
        %p773 = pneg %p171
      $region46: #{residual_block_forward.5} parent=31 // pred_check_branch
        %775 = sbr.rel (%p773) target = $region48
      $region47: #{residual_block_forward.5} parent=31 // pred_region
        _
      $region48: #{residual_block_forward.5} parent=31 // pred_fallthru
        _
    $region32: #{residual_block_forward.5} parent=5 // pred_fallthru
      _
    %p776 = scmp.le.s32.totalorder 2, %s12
    // Predicated region
    $region49: #{residual_block_forward.5} parent=5 // pred_check
      %p777 = pneg %p776
    $region50: #{residual_block_forward.5} parent=5 // pred_check_branch
      %779 = sbr.rel (%p777) target = $region52
    $region51: #{residual_block_forward.5} parent=5 // pred_region
      %s780 = ssub.s32 %s12, 2
      // Predicated region
      $region53: #{residual_block_forward.5} parent=51 // pred_check
        %p781 = pneg %p125
      $region54: #{residual_block_forward.5} parent=51 // pred_check_branch
        %783 = sbr.rel (%p781) target = $region56
      $region55: #{residual_block_forward.5} parent=51 // pred_region
        %s784 = sadd.s32 %s23, %s24
        %p785 = scmp.lt.s32.totalorder %s784, 1
        %s786 = scalar_select %p785, %s784, 1
        %s787 = smul.addr %s786, 32
        %s788 = smul.addr %s787, 8
        %s789 = scalar_lea.vmem %s3, %s788
      $region56: #{residual_block_forward.5} parent=51 // pred_fallthru
        _
      // Predicated region
      $region57: #{residual_block_forward.5} parent=51 // pred_check
        %p790 = pneg %p151
      $region58: #{residual_block_forward.5} parent=51 // pred_check_branch
        %792 = sbr.rel (%p790) target = $region60
      $region59: #{residual_block_forward.5} parent=51 // pred_region
        %p793 = scmp.lt.s32.totalorder %s23, 1
        %s794 = scalar_select %p793, %s23, 1
        %s795 = scalar_lea.vmem %s4, %s794
      $region60: #{residual_block_forward.5} parent=51 // pred_fallthru
        _
      // Predicated region
      $region61: #{residual_block_forward.5} parent=51 // pred_check
        %p796 = pneg %p177
      $region62: #{residual_block_forward.5} parent=51 // pred_check_branch
        %798 = sbr.rel (%p796) target = $region64
      $region63: #{residual_block_forward.5} parent=51 // pred_region
        %p799 = scmp.lt.s32.totalorder %s23, 1
        %s800 = scalar_select %p799, %s23, 1
        %s801 = scalar_lea.vmem %s5, %s800
      $region64: #{residual_block_forward.5} parent=51 // pred_fallthru
        _
    $region52: #{residual_block_forward.5} parent=5 // pred_fallthru
      _
  $region6: #{residual_block_forward.5} parent=0 // loop_footer
    %s16 = sadd.s32 1, %s12
  $region7: #{residual_block_forward.5} parent=0 // loop_footer_branch
    %11 = sbr.rel target = $region3
  $region8: #{residual_block_forward.5} parent=0 // loop_exit
    _

// kernel: residual_block_forward.7
$region0: #{residual_block_forward.7}
  #allocation0 [shape = 'u32[]', space=smem, size = 0x4, offset = 0x4, fixed_abs, tag = 'smem constant byte address 0x4 - core index']
  #allocation1 [shape = 'u32[144,128]{1,0:T(1,128)}', space=vmem, size = 0x12000, scoped, tag = 'internal scratch']
  %s0 = inlined_call_operand.vmem [shape: f32[32,128], index: 0, kind: input, shape index: {}]
  %s1 = inlined_call_operand.vmem [shape: f32[32,128], index: 1, kind: input, shape index: {}]
  %s2 = inlined_call_operand.vmem [shape: f32[1,128], index: 2, kind: input, shape index: {}]
  %s3 = inlined_call_operand.vmem [shape: f32[1,128], index: 3, kind: input, shape index: {}]
  %s4 = inlined_call_operand.vmem [shape: f32[1,128], index: 4, kind: input, shape index: {}]
  %s5 = inlined_call_operand.vmem [shape: f32[32,128], index: 5, kind: output, shape index: {}]
  %s6 = sld [smem:[#allocation0]]
  $region30: #{residual_block_forward.7} parent=0
    _
  %s8 = ssub.s32 1, %s6
  %s9 = scalar_select 0, %s8, %s6
  // Predicated region
  $region2: #{residual_block_forward.7} parent=0 // pred_check
    _
  $region3: #{residual_block_forward.7} parent=0 // pred_check_branch
    %11 = sbr.rel (0) target = $region5
  $region4: #{residual_block_forward.7} parent=0 // pred_region
    _
  $region5: #{residual_block_forward.7} parent=0 // pred_fallthru
    _
  // Predicated region
  $region6: #{residual_block_forward.7} parent=0 // pred_check
    _
  $region7: #{residual_block_forward.7} parent=0 // pred_check_branch
    %13 = sbr.rel (0) target = $region9
  $region8: #{residual_block_forward.7} parent=0 // pred_region
    _
  $region9: #{residual_block_forward.7} parent=0 // pred_fallthru
    _
  // Predicated region
  $region10: #{residual_block_forward.7} parent=0 // pred_check
    _
  $region11: #{residual_block_forward.7} parent=0 // pred_check_branch
    %15 = sbr.rel (0) target = $region13
  $region12: #{residual_block_forward.7} parent=0 // pred_region
    _
  $region13: #{residual_block_forward.7} parent=0 // pred_fallthru
    _
  // Predicated region
  $region14: #{residual_block_forward.7} parent=0 // pred_check
    _
  $region15: #{residual_block_forward.7} parent=0 // pred_check_branch
    %17 = sbr.rel (0) target = $region17
  $region16: #{residual_block_forward.7} parent=0 // pred_region
    _
  $region17: #{residual_block_forward.7} parent=0 // pred_fallthru
    _
  // Predicated region
  $region18: #{residual_block_forward.7} parent=0 // pred_check
    _
  $region19: #{residual_block_forward.7} parent=0 // pred_check_branch
    %19 = sbr.rel (0) target = $region21
  $region20: #{residual_block_forward.7} parent=0 // pred_region
    _
  $region21: #{residual_block_forward.7} parent=0 // pred_fallthru
    _
  %v20 = vld [vmem:[%s0] sm:$0xff]
  %v21 = vld [vmem:[%s0 + $0x8] sm:$0xff]
  %v22 = vld [vmem:[%s0 + $0x10] sm:$0xff]
  %v23 = vld [vmem:[%s0 + $0x18] sm:$0xff]
  %v24 = vld [vmem:[%s2] sm:$0x1]
  %v26 = vlaneseq
  %v27 = vshrl.u32 %v26, 7
  %v28 = vsub.s32 0, %v27
  %v29 = vrot.slane %v24, %v28
  %v31 = vmul.f32 %v20, %v29
  %v32 = vmul.f32 %v21, %v29
  %v33 = vmul.f32 %v22, %v29
  %v34 = vmul.f32 %v23, %v29
  %v35 = vld [vmem:[%s1] sm:$0xff]
  %v36 = vld [vmem:[%s1 + $0x8] sm:$0xff]
  %v37 = vld [vmem:[%s1 + $0x10] sm:$0xff]
  %v38 = vld [vmem:[%s1 + $0x18] sm:$0xff]
  %v39 = vld [vmem:[%s3] sm:$0x1]
  %v41 = vlaneseq
  %v42 = vshrl.u32 %v41, 7
  %v43 = vsub.s32 0, %v42
  %v44 = vrot.slane %v39, %v43
  %v46 = vmul.f32 %v35, %v44
  %v47 = vmul.f32 %v36, %v44
  %v48 = vmul.f32 %v37, %v44
  %v49 = vmul.f32 %v38, %v44
  %v50 = vadd.f32 %v31, %v46
  %v51 = vadd.f32 %v32, %v47
  %v52 = vadd.f32 %v33, %v48
  %v53 = vadd.f32 %v34, %v49
  %v54 = vld [vmem:[%s4] sm:$0x1]
  %v56 = vlaneseq
  %v57 = vshrl.u32 %v56, 7
  %v58 = vsub.s32 0, %v57
  %v59 = vrot.slane %v54, %v58
  %v61 = vadd.f32 %v50, %v59
  %v62 = vadd.f32 %v51, %v59
  %v63 = vadd.f32 %v52, %v59
  %v64 = vadd.f32 %v53, %v59
  %v65 = vmax.f32 %v61, 0.0
  %v66 = vmax.f32 %v62, 0.0
  %v67 = vmax.f32 %v63, 0.0
  %v68 = vmax.f32 %v64, 0.0
  %69 = vst [vmem:[%s5] sm:$0xff] %v65
  %70 = vst [vmem:[%s5 + $0x8] sm:$0xff] %v66
  %71 = vst [vmem:[%s5 + $0x10] sm:$0xff] %v67
  %72 = vst [vmem:[%s5 + $0x18] sm:$0xff] %v68
  // Predicated region
  $region22: #{residual_block_forward.7} parent=0 // pred_check
    _
  $region23: #{residual_block_forward.7} parent=0 // pred_check_branch
    %74 = sbr.rel (0) target = $region25
  $region24: #{residual_block_forward.7} parent=0 // pred_region
    _
  $region25: #{residual_block_forward.7} parent=0 // pred_fallthru
    _
  // Predicated region
  $region26: #{residual_block_forward.7} parent=0 // pred_check
    _
  $region27: #{residual_block_forward.7} parent=0 // pred_check_branch
    %76 = sbr.rel (0) target = $region29
  $region28: #{residual_block_forward.7} parent=0 // pred_region
    _
  $region29: #{residual_block_forward.7} parent=0 // pred_fallthru
    _

// kernel: residual_block_forward.4
$region0: #{residual_block_forward.4}
  #allocation0 [shape = 'u32[]', space=smem, size = 0x4, offset = 0x4, fixed_abs, tag = 'smem constant byte address 0x4 - core index']
  #allocation1 [shape = 'u32[144,128]{1,0:T(1,128)}', space=vmem, size = 0x12000, scoped, tag = 'internal scratch']
  %s0 = inlined_call_operand.vmem [shape: f32[2,18,18,4], index: 0, kind: input, shape index: {}]
  %s1 = inlined_call_operand.vmem [shape: bf16[36,8], index: 1, kind: input, shape index: {}]
  %s2 = inlined_call_operand.vmem [shape: f32[1,8], index: 2, kind: input, shape index: {}]
  %s3 = inlined_call_operand.vmem [shape: f32[2,16,16,8], index: 3, kind: output, shape index: {0}]
  %s4 = inlined_call_operand.vmem [shape: f32[2,1,8], index: 4, kind: output, shape index: {1}]
  %s5 = inlined_call_operand.vmem [shape: f32[2,1,8], index: 5, kind: output, shape index: {2}]
  %6 = xla_tuple %s3, %s4, %s5
  %s7 = sld [smem:[#allocation0]]
  $region65: #{residual_block_forward.4} parent=0
    _
  %s9 = ssub.s32 1, %s7
  %s10 = scalar_select 0, %s9, %s7
  loop: start=0, step=1, limit=4
  $region2: #{residual_block_forward.4} parent=0 // loop_pre_header
    _
  $region3: #{residual_block_forward.4} parent=0 // loop_header
    %s12 = sphi 0, %s16
    %p13 = scmp.ge.s32.totalorder %s12, 4
    %s19 = sphi 0, %s31
    %s20 = sphi 0, %s27
    %s21 = sphi 0, %s19
    %s22 = sphi 0, %s20
    %s23 = sphi 0, %s21
    %s24 = sphi 0, %s22
    %s36 = sphi 0, %s38
    %s39 = sphi 0, %s36
    %s40 = sphi 0, %s39
    %s56 = sphi 0, %s40
    %s60 = sphi 0, %s60
    %s62 = sphi 0, %s60
    %s63 = sphi 0, %s62
    %s77 = sphi 0, %s63
    %s81 = sphi 0, %s81
    %s83 = sphi 0, %s81
    %s84 = sphi 0, %s83
    %s98 = sphi 0, %s84
    %s106 = sphi 0, %s108
    %s109 = sphi 0, %s106
    %s110 = sphi 0, %s109
    %s126 = sphi 0, %s110
    %s132 = sphi 0, %s134
    %s135 = sphi 0, %s132
    %s136 = sphi 0, %s135
    %s152 = sphi 0, %s136
    %s158 = sphi 0, %s160
    %s161 = sphi 0, %s158
    %s162 = sphi 0, %s161
    %s178 = sphi 0, %s162
  $region4: #{residual_block_forward.4} parent=0 // loop_header_branch
    %15 = sbr.rel (%p13) target = $region8
  $region5: #{residual_block_forward.4} parent=0 // loop_body
    %s17 = ssub.s32 %s12, 1
    %s18 = ssub.s32 %s12, 2
    %s25 = sadd.s32 1, %s20
    %p26 = scmp.ge.s32.totalorder %s25, 1
    %s27 = scalar_select %p26, 0, %s25
    %s28 = sadd.s32 1, %s19
    %s29 = scalar_select %p26, %s28, %s19
    %p30 = scmp.ge.s32.totalorder %s29, 2
    %s31 = scalar_select %p30, 0, %s29
    %s32 = sadd.s32 %s19, %s20
    %s33 = sadd.s32 %s31, %s27
    %s34 = ssub.s32 %s32, %s33
    %p35 = scmp.eq.s32.totalorder %s34, 0
    %s37 = sadd.s32 %s36, 1
    %s38 = scalar_select %p35, %s36, %s37
    %p41 = pneg %p35
    %p42 = scmp.eq.s32.totalorder %s12, 1
    %p43 = por %p41, %p42
    %p44 = scmp.ne.s32.totalorder %s36, %s39
    %p45 = scmp.eq.s32.totalorder %s12, 0
    %p46 = por %p44, %p45
    %p47 = scmp.ne.s32.totalorder %s36, %s39
    %p48 = scmp.eq.s32.totalorder %s17, 1
    %p49 = por %p47, %p48
    %p50 = scmp.ne.s32.totalorder %s39, %s40
    %p51 = scmp.eq.s32.totalorder %s17, 0
    %p52 = por %p50, %p51
    %p53 = scmp.ne.s32.totalorder %s39, %s40
    %p54 = scmp.eq.s32.totalorder %s18, 1
    %p55 = por %p53, %p54
    %p57 = scmp.ne.s32.totalorder %s40, %s56
    %p58 = scmp.eq.s32.totalorder %s18, 0
    %p59 = por %p57, %p58
    %s61 = sadd.s32 %s60, 1
    %p64 = scmp.eq.s32.totalorder %s12, 1
    %p65 = scmp.ne.s32.totalorder %s60, %s62
    %p66 = scmp.eq.s32.totalorder %s12, 0
    %p67 = por %p65, %p66
    %p68 = scmp.ne.s32.totalorder %s60, %s62
    %p69 = scmp.eq.s32.totalorder %s17, 1
    %p70 = por %p68, %p69
    %p71 = scmp.ne.s32.totalorder %s62, %s63
    %p72 = scmp.eq.s32.totalorder %s17, 0
    %p73 = por %p71, %p72
    %p74 = scmp.ne.s32.totalorder %s62, %s63
    %p75 = scmp.eq.s32.totalorder %s18, 1
    %p76 = por %p74, %p75
    %p78 = scmp.ne.s32.totalorder %s63, %s77
    %p79 = scmp.eq.s32.totalorder %s18, 0
    %p80 = por %p78, %p79
    %s82 = sadd.s32 %s81, 1
    %p85 = scmp.eq.s32.totalorder %s12, 1
    %p86 = scmp.ne.s32.totalorder %s81, %s83
    %p87 = scmp.eq.s32.totalorder %s12, 0
    %p88 = por %p86, %p87
    %p89 = scmp.ne.s32.totalorder %s81, %s83
    %p90 = scmp.eq.s32.totalorder %s17, 1
    %p91 = por %p89, %p90
    %p92 = scmp.ne.s32.totalorder %s83, %s84
    %p93 = scmp.eq.s32.totalorder %s17, 0
    %p94 = por %p92, %p93
    %p95 = scmp.ne.s32.totalorder %s83, %s84
    %p96 = scmp.eq.s32.totalorder %s18, 1
    %p97 = por %p95, %p96
    %p99 = scmp.ne.s32.totalorder %s84, %s98
    %p100 = scmp.eq.s32.totalorder %s18, 0
    %p101 = por %p99, %p100
    %s102 = sadd.s32 %s19, %s20
    %s103 = sadd.s32 %s31, %s27
    %s104 = ssub.s32 %s102, %s103
    %p105 = scmp.eq.s32.totalorder %s104, 0
    %s107 = sadd.s32 %s106, 1
    %s108 = scalar_select %p105, %s106, %s107
    %p111 = pneg %p105
    %p112 = scmp.eq.s32.totalorder %s12, 1
    %p113 = por %p111, %p112
    %p114 = scmp.ne.s32.totalorder %s106, %s109
    %p115 = scmp.eq.s32.totalorder %s12, 0
    %p116 = por %p114, %p115
    %p117 = scmp.ne.s32.totalorder %s106, %s109
    %p118 = scmp.eq.s32.totalorder %s17, 1
    %p119 = por %p117, %p118
    %p120 = scmp.ne.s32.totalorder %s109, %s110
    %p121 = scmp.eq.s32.totalorder %s17, 0
    %p122 = por %p120, %p121
    %p123 = scmp.ne.s32.totalorder %s109, %s110
    %p124 = scmp.eq.s32.totalorder %s18, 1
    %p125 = por %p123, %p124
    %p127 = scmp.ne.s32.totalorder %s110, %s126
    %p128 = scmp.eq.s32.totalorder %s18, 0
    %p129 = por %p127, %p128
    %s130 = ssub.s32 %s19, %s31
    %p131 = scmp.eq.s32.totalorder %s130, 0
    %s133 = sadd.s32 %s132, 1
    %s134 = scalar_select %p131, %s132, %s133
    %p137 = pneg %p131
    %p138 = scmp.eq.s32.totalorder %s12, 1
    %p139 = por %p137, %p138
    %p140 = scmp.ne.s32.totalorder %s132, %s135
    %p141 = scmp.eq.s32.totalorder %s12, 0
    %p142 = por %p140, %p141
    %p143 = scmp.ne.s32.totalorder %s132, %s135
    %p144 = scmp.eq.s32.totalorder %s17, 1
    %p145 = por %p143, %p144
    %p146 = scmp.ne.s32.totalorder %s135, %s136
    %p147 = scmp.eq.s32.totalorder %s17, 0
    %p148 = por %p146, %p147
    %p149 = scmp.ne.s32.totalorder %s135, %s136
    %p150 = scmp.eq.s32.totalorder %s18, 1
    %p151 = por %p149, %p150
    %p153 = scmp.ne.s32.totalorder %s136, %s152
    %p154 = scmp.eq.s32.totalorder %s18, 0
    %p155 = por %p153, %p154
    %s156 = ssub.s32 %s19, %s31
    %p157 = scmp.eq.s32.totalorder %s156, 0
    %s159 = sadd.s32 %s158, 1
    %s160 = scalar_select %p157, %s158, %s159
    %p163 = pneg %p157
    %p164 = scmp.eq.s32.totalorder %s12, 1
    %p165 = por %p163, %p164
    %p166 = scmp.ne.s32.totalorder %s158, %s161
    %p167 = scmp.eq.s32.totalorder %s12, 0
    %p168 = por %p166, %p167
    %p169 = scmp.ne.s32.totalorder %s158, %s161
    %p170 = scmp.eq.s32.totalorder %s17, 1
    %p171 = por %p169, %p170
    %p172 = scmp.ne.s32.totalorder %s161, %s162
    %p173 = scmp.eq.s32.totalorder %s17, 0
    %p174 = por %p172, %p173
    %p175 = scmp.ne.s32.totalorder %s161, %s162
    %p176 = scmp.eq.s32.totalorder %s18, 1
    %p177 = por %p175, %p176
    %p179 = scmp.ne.s32.totalorder %s162, %s178
    %p180 = scmp.eq.s32.totalorder %s18, 0
    %p181 = por %p179, %p180
    %p182 = scmp.le.s32.totalorder 1, %s12
    %p183 = scmp.lt.s32.totalorder %s12, 3
    %p184 = pnand %p182, %p183
    %p185 = pneg %p184
    // Predicated region
    $region9: #{residual_block_forward.4} parent=5 // pred_check
      _
    $region10: #{residual_block_forward.4} parent=5 // pred_check_branch
      %187 = sbr.rel (%p184) target = $region12
    $region11: #{residual_block_forward.4} parent=5 // pred_region
      %s188 = ssub.s32 %s12, 1
      // Predicated region
      $region13: #{residual_block_forward.4} parent=11 // pred_check
        %p189 = pneg %p73
      $region14: #{residual_block_forward.4} parent=11 // pred_check_branch
        %191 = sbr.rel (%p189) target = $region16
      $region15: #{residual_block_forward.4} parent=11 // pred_region
        _
      $region16: #{residual_block_forward.4} parent=11 // pred_fallthru
        _
      // Predicated region
      $region17: #{residual_block_forward.4} parent=11 // pred_check
        %p192 = pneg %p94
      $region18: #{residual_block_forward.4} parent=11 // pred_check_branch
        %194 = sbr.rel (%p192) target = $region20
      $region19: #{residual_block_forward.4} parent=11 // pred_region
        _
      $region20: #{residual_block_forward.4} parent=11 // pred_fallthru
        _
    $region12: #{residual_block_forward.4} parent=5 // pred_fallthru
      _
    %p195 = scmp.lt.s32.totalorder %s12, 2
    // Predicated region
    $region21: #{residual_block_forward.4} parent=5 // pred_check
      %p196 = pneg %p195
    $region22: #{residual_block_forward.4} parent=5 // pred_check_branch
      %198 = sbr.rel (%p196) target = $region24
    $region23: #{residual_block_forward.4} parent=5 // pred_region
      // Predicated region
      $region25: #{residual_block_forward.4} parent=23 // pred_check
        %p199 = pneg %p46
      $region26: #{residual_block_forward.4} parent=23 // pred_check_branch
        %201 = sbr.rel (%p199) target = $region28
      $region27: #{residual_block_forward.4} parent=23 // pred_region
        %s202 = sadd.s32 %s19, %s20
        %p203 = scmp.lt.s32.totalorder %s202, 1
        %s204 = scalar_select %p203, %s202, 1
        %s205 = smul.addr %s204, 54
        %s206 = smul.addr %s205, 8
        %s207 = scalar_lea.vmem %s0, %s206
        %s208 = sadd.s32 %s19, %s20
      $region28: #{residual_block_forward.4} parent=23 // pred_fallthru
        _
    $region24: #{residual_block_forward.4} parent=5 // pred_fallthru
      _
    %p209 = scmp.le.s32.totalorder 1, %s12
    %p210 = scmp.lt.s32.totalorder %s12, 3
    %p211 = pnand %p209, %p210
    %p212 = pneg %p211
    // Predicated region
    $region29: #{residual_block_forward.4} parent=5 // pred_check
      _
    $region30: #{residual_block_forward.4} parent=5 // pred_check_branch
      %214 = sbr.rel (%p211) target = $region32
    $region31: #{residual_block_forward.4} parent=5 // pred_region
      %s215 = ssub.s32 %s12, 1
      %s216 = sadd.s32 %s21, %s22
      %p217 = scmp.lt.s32.totalorder %s216, 1
      %s218 = scalar_select %p217, %s216, 1
      %s219 = smul.addr %s218, 54
      %s220 = smul.addr %s219, 8
      %s221 = scalar_lea.vmem %s0, %s220
      %p222 = pneg %p52
      %p223 = pneg %p49
      %p224 = pneg %p73
      %p225 = pneg %p70
      %p226 = pneg %p94
      %p227 = pneg %p91
      %p228 = pneg %p122
      %p229 = pneg %p119
      %s230 = sadd.s32 %s21, %s22
      %p231 = scmp.lt.s32.totalorder %s230, 1
      %s232 = scalar_select %p231, %s230, 1
      %s233 = smul.addr %s232, 32
      %s234 = smul.addr %s233, 8
      %s235 = scalar_lea.vmem %s3, %s234
      %p236 = pneg %p148
      %p237 = pneg %p145
      %p238 = scmp.lt.s32.totalorder %s21, 1
      %s239 = scalar_select %p238, %s21, 1
      %s240 = scalar_lea.vmem %s4, %s239
      %p241 = pneg %p174
      %p242 = pneg %p171
      %p243 = scmp.lt.s32.totalorder %s21, 1
      %s244 = scalar_select %p243, %s21, 1
      %s245 = scalar_lea.vmem %s5, %s244
      %s246 = sadd.s32 %s21, %s22
      %p247 = scmp.lt.s32.totalorder %s246, 1
      %s248 = scalar_select %p247, %s246, 1
      %s249 = smul.addr %s248, 54
      %s250 = smul.addr %s249, 8
      %s251 = scalar_lea.vmem %s0, %s250
      %s252 = sadd.s32 %s21, %s22
      %s253 = sadd.s32 %s21, %s22
      %p254 = scmp.lt.s32.totalorder %s253, 1
      %s255 = scalar_select %p254, %s253, 1
      %s256 = smul.addr %s255, 32
      %s257 = smul.addr %s256, 8
      %s258 = scalar_lea.vmem %s3, %s257
      %s259 = sadd.s32 %s21, %s22
      %p260 = scmp.lt.s32.totalorder %s21, 1
      %s261 = scalar_select %p260, %s21, 1
      %s262 = scalar_lea.vmem %s4, %s261
      %p263 = scmp.lt.s32.totalorder %s21, 1
      %s264 = scalar_select %p263, %s21, 1
      %s265 = scalar_lea.vmem %s5, %s264
      %p267 = scmp.eq.s32.totalorder %s22, 0
      // Predicated region
      $region33: #{residual_block_forward.4} parent=31 // pred_check
        %p268 = pneg %p267
      $region34: #{residual_block_forward.4} parent=31 // pred_check_branch
        %270 = sbr.rel (%p268) target = $region36
      $region35: #{residual_block_forward.4} parent=31 // pred_region
        %vm271 = vcmask 57344
        %272 = vst.msk [vmem:[%s262] sm:$0x1] %vm271, 0.0
        %273 = vst.msk [vmem:[%s265] sm:$0x1] %vm271, 0.0
      $region36: #{residual_block_forward.4} parent=31 // pred_fallthru
        _
      %v274 = vld [vmem:[%s251] sm:$0xff]
      %v275 = vld [vmem:[%s251 + $0x8] sm:$0xff]
      %v276 = vld [vmem:[%s251 + $0x10] sm:$0x3]
      %v277 = vld [vmem:[%s251 + $0x18] sm:$0xff]
      %v278 = vld [vmem:[%s251 + $0x20] sm:$0xff]
      %v279 = vld [vmem:[%s251 + $0x28] sm:$0x3]
      %v280 = vld [vmem:[%s251 + $0x30] sm:$0xff]
      %v281 = vld [vmem:[%s251 + $0x38] sm:$0xff]
      %v282 = vld [vmem:[%s251 + $0x40] sm:$0x3]
      %v283 = vld [vmem:[%s251 + $0x48] sm:$0xff]
      %v284 = vld [vmem:[%s251 + $0x50] sm:$0xff]
      %v285 = vld [vmem:[%s251 + $0x58] sm:$0x3]
      %v286 = vld [vmem:[%s251 + $0x60] sm:$0xff]
      %v287 = vld [vmem:[%s251 + $0x68] sm:$0xff]
      %v288 = vld [vmem:[%s251 + $0x70] sm:$0x3]
      %v289 = vld [vmem:[%s251 + $0x78] sm:$0xff]
      %v290 = vld [vmem:[%s251 + $0x80] sm:$0xff]
      %v291 = vld [vmem:[%s251 + $0x88] sm:$0x3]
      %v292 = vld [vmem:[%s251 + $0x90] sm:$0xff]
      %v293 = vld [vmem:[%s251 + $0x98] sm:$0xff]
      %v294 = vld [vmem:[%s251 + $0xa0] sm:$0x3]
      %v295 = vld [vmem:[%s251 + $0xa8] sm:$0xff]
      %v296 = vld [vmem:[%s251 + $0xb0] sm:$0xff]
      %v297 = vld [vmem:[%s251 + $0xb8] sm:$0x3]
      %v298 = vld [vmem:[%s251 + $0xc0] sm:$0xff]
      %v299 = vld [vmem:[%s251 + $0xc8] sm:$0xff]
      %v300 = vld [vmem:[%s251 + $0xd0] sm:$0x3]
      %v301 = vld [vmem:[%s251 + $0xd8] sm:$0xff]
      %v302 = vld [vmem:[%s251 + $0xe0] sm:$0xff]
      %v303 = vld [vmem:[%s251 + $0xe8] sm:$0x3]
      %v304 = vld [vmem:[%s251 + $0xf0] sm:$0xff]
      %v305 = vld [vmem:[%s251 + $0xf8] sm:$0xff]
      %v306 = vld [vmem:[%s251 + $0x100] sm:$0x3]
      %v307 = vld [vmem:[%s251 + $0x108] sm:$0xff]
      %v308 = vld [vmem:[%s251 + $0x110] sm:$0xff]
      %v309 = vld [vmem:[%s251 + $0x118] sm:$0x3]
      %v310 = vld [vmem:[%s251 + $0x120] sm:$0xff]
      %v311 = vld [vmem:[%s251 + $0x128] sm:$0xff]
      %v312 = vld [vmem:[%s251 + $0x130] sm:$0x3]
      %v313 = vld [vmem:[%s251 + $0x138] sm:$0xff]
      %v314 = vld [vmem:[%s251 + $0x140] sm:$0xff]
      %v315 = vld [vmem:[%s251 + $0x148] sm:$0x3]
      %v316 = vld [vmem:[%s251 + $0x150] sm:$0xff]
      %v317 = vld [vmem:[%s251 + $0x158] sm:$0xff]
      %v318 = vld [vmem:[%s251 + $0x160] sm:$0x3]
      %v319 = vld [vmem:[%s251 + $0x168] sm:$0xff]
      %v320 = vld [vmem:[%s251 + $0x170] sm:$0xff]
      %v321 = vld [vmem:[%s251 + $0x178] sm:$0x3]
      %v322 = vld [vmem:[%s251 + $0x180] sm:$0xff]
      %v323 = vld [vmem:[%s251 + $0x188] sm:$0xff]
      %v324 = vld [vmem:[%s251 + $0x190] sm:$0x3]
      %v325 = vld [vmem:[%s251 + $0x198] sm:$0xff]
      %v326 = vld [vmem:[%s251 + $0x1a0] sm:$0xff]
      %v327 = vld [vmem:[%s251 + $0x1a8] sm:$0x3]
      %vm376 = vcmask 1046528
      %v377 = vrot.slane %v274, 1
      %v378 = vrot.slane %v275, 1
      %v379 = vsel %vm376, %v377, %v378
      %v380 = vrot.slane %v276, 1
      %v381 = vsel %vm376, %v378, %v380
      %v382 = vrot.slane %v277, 1
      %v383 = vrot.slane %v278, 1
      %v384 = vsel %vm376, %v382, %v383
      %v385 = vrot.slane %v279, 1
      %v386 = vsel %vm376, %v383, %v385
      %v387 = vrot.slane %v280, 1
      %v388 = vrot.slane %v281, 1
      %v389 = vsel %vm376, %v387, %v388
      %v390 = vrot.slane %v282, 1
      %v391 = vsel %vm376, %v388, %v390
      %v392 = vrot.slane %v283, 1
      %v393 = vrot.slane %v284, 1
      %v394 = vsel %vm376, %v392, %v393
      %v395 = vrot.slane %v285, 1
      %v396 = vsel %vm376, %v393, %v395
      %v397 = vrot.slane %v286, 1
      %v398 = vrot.slane %v287, 1
      %v399 = vsel %vm376, %v397, %v398
      %v400 = vrot.slane %v288, 1
      %v401 = vsel %vm376, %v398, %v400
      %v402 = vrot.slane %v289, 1
      %v403 = vrot.slane %v290, 1
      %v404 = vsel %vm376, %v402, %v403
      %v405 = vrot.slane %v291, 1
      %v406 = vsel %vm376, %v403, %v405
      %v407 = vrot.slane %v292, 1
      %v408 = vrot.slane %v293, 1
      %v409 = vsel %vm376, %v407, %v408
      %v410 = vrot.slane %v294, 1
      %v411 = vsel %vm376, %v408, %v410
      %v412 = vrot.slane %v295, 1
      %v413 = vrot.slane %v296, 1
      %v414 = vsel %vm376, %v412, %v413
      %v415 = vrot.slane %v297, 1
      %v416 = vsel %vm376, %v413, %v415
      %v417 = vrot.slane %v298, 1
      %v418 = vrot.slane %v299, 1
      %v419 = vsel %vm376, %v417, %v418
      %v420 = vrot.slane %v300, 1
      %v421 = vsel %vm376, %v418, %v420
      %v422 = vrot.slane %v301, 1
      %v423 = vrot.slane %v302, 1
      %v424 = vsel %vm376, %v422, %v423
      %v425 = vrot.slane %v303, 1
      %v426 = vsel %vm376, %v423, %v425
      %v427 = vrot.slane %v304, 1
      %v428 = vrot.slane %v305, 1
      %v429 = vsel %vm376, %v427, %v428
      %v430 = vrot.slane %v306, 1
      %v431 = vsel %vm376, %v428, %v430
      %v432 = vrot.slane %v307, 1
      %v433 = vrot.slane %v308, 1
      %v434 = vsel %vm376, %v432, %v433
      %v435 = vrot.slane %v309, 1
      %v436 = vsel %vm376, %v433, %v435
      %v437 = vrot.slane %v310, 1
      %v438 = vrot.slane %v311, 1
      %v439 = vsel %vm376, %v437, %v438
      %v440 = vrot.slane %v312, 1
      %v441 = vsel %vm376, %v438, %v440
      %v442 = vrot.slane %v313, 1
      %v443 = vrot.slane %v314, 1
      %v444 = vsel %vm376, %v442, %v443
      %v445 = vrot.slane %v315, 1
      %v446 = vsel %vm376, %v443, %v445
      %v447 = vrot.slane %v316, 1
      %v448 = vrot.slane %v317, 1
      %v449 = vsel %vm376, %v447, %v448
      %v450 = vrot.slane %v318, 1
      %v451 = vsel %vm376, %v448, %v450
      %v452 = vrot.slane %v319, 1
      %v453 = vrot.slane %v320, 1
      %v454 = vsel %vm376, %v452, %v453
      %v455 = vrot.slane %v321, 1
      %v456 = vsel %vm376, %v453, %v455
      %457 = vrot.lane.b32.xlu0 %v379, 4
      %v458 = vpop.permute.xlu0 %457
      %459 = vrot.lane.b32.xlu0 %v381, 4
      %v460 = vpop.permute.xlu0 %459
      %461 = vrot.lane.b32.xlu0 %v384, 4
      %v462 = vpop.permute.xlu0 %461
      %463 = vrot.lane.b32.xlu0 %v386, 4
      %v464 = vpop.permute.xlu0 %463
      %465 = vrot.lane.b32.xlu0 %v389, 4
      %v466 = vpop.permute.xlu0 %465
      %467 = vrot.lane.b32.xlu0 %v391, 4
      %v468 = vpop.permute.xlu0 %467
      %469 = vrot.lane.b32.xlu0 %v394, 4
      %v470 = vpop.permute.xlu0 %469
      %471 = vrot.lane.b32.xlu0 %v396, 4
      %v472 = vpop.permute.xlu0 %471
      %473 = vrot.lane.b32.xlu0 %v399, 4
      %v474 = vpop.permute.xlu0 %473
      %475 = vrot.lane.b32.xlu0 %v401, 4
      %v476 = vpop.permute.xlu0 %475
      %477 = vrot.lane.b32.xlu0 %v404, 4
      %v478 = vpop.permute.xlu0 %477
      %479 = vrot.lane.b32.xlu0 %v406, 4
      %v480 = vpop.permute.xlu0 %479
      %481 = vrot.lane.b32.xlu0 %v409, 4
      %v482 = vpop.permute.xlu0 %481
      %483 = vrot.lane.b32.xlu0 %v411, 4
      %v484 = vpop.permute.xlu0 %483
      %485 = vrot.lane.b32.xlu0 %v414, 4
      %v486 = vpop.permute.xlu0 %485
      %487 = vrot.lane.b32.xlu0 %v416, 4
      %v488 = vpop.permute.xlu0 %487
      %489 = vrot.lane.b32.xlu0 %v419, 4
      %v490 = vpop.permute.xlu0 %489
      %491 = vrot.lane.b32.xlu0 %v421, 4
      %v492 = vpop.permute.xlu0 %491
      %493 = vrot.lane.b32.xlu0 %v424, 4
      %v494 = vpop.permute.xlu0 %493
      %495 = vrot.lane.b32.xlu0 %v426, 4
      %v496 = vpop.permute.xlu0 %495
      %497 = vrot.lane.b32.xlu0 %v429, 4
      %v498 = vpop.permute.xlu0 %497
      %499 = vrot.lane.b32.xlu0 %v431, 4
      %v500 = vpop.permute.xlu0 %499
      %501 = vrot.lane.b32.xlu0 %v434, 4
      %v502 = vpop.permute.xlu0 %501
      %503 = vrot.lane.b32.xlu0 %v436, 4
      %v504 = vpop.permute.xlu0 %503
      %505 = vrot.lane.b32.xlu0 %v439, 4
      %v506 = vpop.permute.xlu0 %505
      %507 = vrot.lane.b32.xlu0 %v441, 4
      %v508 = vpop.permute.xlu0 %507
      %509 = vrot.lane.b32.xlu0 %v444, 4
      %v510 = vpop.permute.xlu0 %509
      %511 = vrot.lane.b32.xlu0 %v446, 4
      %v512 = vpop.permute.xlu0 %511
      %513 = vrot.lane.b32.xlu0 %v449, 4
      %v514 = vpop.permute.xlu0 %513
      %515 = vrot.lane.b32.xlu0 %v451, 4
      %v516 = vpop.permute.xlu0 %515
      %517 = vrot.lane.b32.xlu0 %v454, 4
      %v518 = vpop.permute.xlu0 %517
      %519 = vrot.lane.b32.xlu0 %v456, 4
      %v520 = vpop.permute.xlu0 %519
      %vm553 = vcmask 1045504
      %v554 = vrot.slane %v274, 2
      %v555 = vrot.slane %v275, 2
      %v556 = vsel %vm553, %v554, %v555
      %v557 = vrot.slane %v276, 2
      %v558 = vsel %vm553, %v555, %v557
      %v559 = vrot.slane %v277, 2
      %v560 = vrot.slane %v278, 2
      %v561 = vsel %vm553, %v559, %v560
      %v562 = vrot.slane %v279, 2
      %v563 = vsel %vm553, %v560, %v562
      %v564 = vrot.slane %v280, 2
      %v565 = vrot.slane %v281, 2
      %v566 = vsel %vm553, %v564, %v565
      %v567 = vrot.slane %v282, 2
      %v568 = vsel %vm553, %v565, %v567
      %v569 = vrot.slane %v283, 2
      %v570 = vrot.slane %v284, 2
      %v571 = vsel %vm553, %v569, %v570
      %v572 = vrot.slane %v285, 2
      %v573 = vsel %vm553, %v570, %v572
      %v574 = vrot.slane %v286, 2
      %v575 = vrot.slane %v287, 2
      %v576 = vsel %vm553, %v574, %v575
      %v577 = vrot.slane %v288, 2
      %v578 = vsel %vm553, %v575, %v577
      %v579 = vrot.slane %v289, 2
      %v580 = vrot.slane %v290, 2
      %v581 = vsel %vm553, %v579, %v580
      %v582 = vrot.slane %v291, 2
      %v583 = vsel %vm553, %v580, %v582
      %v584 = vrot.slane %v292, 2
      %v585 = vrot.slane %v293, 2
      %v586 = vsel %vm553, %v584, %v585
      %v587 = vrot.slane %v294, 2
      %v588 = vsel %vm553, %v585, %v587
      %v589 = vrot.slane %v295, 2
      %v590 = vrot.slane %v296, 2
      %v591 = vsel %vm553, %v589, %v590
      %v592 = vrot.slane %v297, 2
      %v593 = vsel %vm553, %v590, %v592
      %v594 = vrot.slane %v298, 2
      %v595 = vrot.slane %v299, 2
      %v596 = vsel %vm553, %v594, %v595
      %v597 = vrot.slane %v300, 2
      %v598 = vsel %vm553, %v595, %v597
      %v599 = vrot.slane %v301, 2
      %v600 = vrot.slane %v302, 2
      %v601 = vsel %vm553, %v599, %v600
      %v602 = vrot.slane %v303, 2
      %v603 = vsel %vm553, %v600, %v602
      %v604 = vrot.slane %v304, 2
      %v605 = vrot.slane %v305, 2
      %v606 = vsel %vm553, %v604, %v605
      %v607 = vrot.slane %v306, 2
      %v608 = vsel %vm553, %v605, %v607
      %v609 = vrot.slane %v307, 2
      %v610 = vrot.slane %v308, 2
      %v611 = vsel %vm553, %v609, %v610
      %v612 = vrot.slane %v309, 2
      %v613 = vsel %vm553, %v610, %v612
      %v614 = vrot.slane %v310, 2
      %v615 = vrot.slane %v311, 2
      %v616 = vsel %vm553, %v614, %v615
      %v617 = vrot.slane %v312, 2
      %v618 = vsel %vm553, %v615, %v617
      %v619 = vrot.slane %v313, 2
      %v620 = vrot.slane %v314, 2
      %v621 = vsel %vm553, %v619, %v620
      %v622 = vrot.slane %v315, 2
      %v623 = vsel %vm553, %v620, %v622
      %v624 = vrot.slane %v316, 2
      %v625 = vrot.slane %v317, 2
      %v626 = vsel %vm553, %v624, %v625
      %v627 = vrot.slane %v318, 2
      %v628 = vsel %vm553, %v625, %v627
      %v629 = vrot.slane %v319, 2
      %v630 = vrot.slane %v320, 2
      %v631 = vsel %vm553, %v629, %v630
      %v632 = vrot.slane %v321, 2
      %v633 = vsel %vm553, %v630, %v632
      %634 = vrot.lane.b32.xlu0 %v556, 8
      %v635 = vpop.permute.xlu0 %634
      %636 = vrot.lane.b32.xlu0 %v558, 8
      %v637 = vpop.permute.xlu0 %636
      %638 = vrot.lane.b32.xlu0 %v561, 8
      %v639 = vpop.permute.xlu0 %638
      %640 = vrot.lane.b32.xlu0 %v563, 8
      %v641 = vpop.permute.xlu0 %640
      %642 = vrot.lane.b32.xlu0 %v566, 8
      %v643 = vpop.permute.xlu0 %642
      %644 = vrot.lane.b32.xlu0 %v568, 8
      %v645 = vpop.permute.xlu0 %644
      %646 = vrot.lane.b32.xlu0 %v571, 8
      %v647 = vpop.permute.xlu0 %646
      %648 = vrot.lane.b32.xlu0 %v573, 8
      %v649 = vpop.permute.xlu0 %648
      %650 = vrot.lane.b32.xlu0 %v576, 8
      %v651 = vpop.permute.xlu0 %650
      %652 = vrot.lane.b32.xlu0 %v578, 8
      %v653 = vpop.permute.xlu0 %652
      %654 = vrot.lane.b32.xlu0 %v581, 8
      %v655 = vpop.permute.xlu0 %654
      %656 = vrot.lane.b32.xlu0 %v583, 8
      %v657 = vpop.permute.xlu0 %656
      %658 = vrot.lane.b32.xlu0 %v586, 8
      %v659 = vpop.permute.xlu0 %658
      %660 = vrot.lane.b32.xlu0 %v588, 8
      %v661 = vpop.permute.xlu0 %660
      %662 = vrot.lane.b32.xlu0 %v591, 8
      %v663 = vpop.permute.xlu0 %662
      %664 = vrot.lane.b32.xlu0 %v593, 8
      %v665 = vpop.permute.xlu0 %664
      %666 = vrot.lane.b32.xlu0 %v596, 8
      %v667 = vpop.permute.xlu0 %666
      %668 = vrot.lane.b32.xlu0 %v598, 8
      %v669 = vpop.permute.xlu0 %668
      %670 = vrot.lane.b32.xlu0 %v601, 8
      %v671 = vpop.permute.xlu0 %670
      %672 = vrot.lane.b32.xlu0 %v603, 8
      %v673 = vpop.permute.xlu0 %672
      %674 = vrot.lane.b32.xlu0 %v606, 8
      %v675 = vpop.permute.xlu0 %674
      %676 = vrot.lane.b32.xlu0 %v608, 8
      %v677 = vpop.permute.xlu0 %676
      %678 = vrot.lane.b32.xlu0 %v611, 8
      %v679 = vpop.permute.xlu0 %678
      %680 = vrot.lane.b32.xlu0 %v613, 8
      %v681 = vpop.permute.xlu0 %680
      %682 = vrot.lane.b32.xlu0 %v616, 8
      %v683 = vpop.permute.xlu0 %682
      %684 = vrot.lane.b32.xlu0 %v618, 8
      %v685 = vpop.permute.xlu0 %684
      %686 = vrot.lane.b32.xlu0 %v621, 8
      %v687 = vpop.permute.xlu0 %686
      %688 = vrot.lane.b32.xlu0 %v623, 8
      %v689 = vpop.permute.xlu0 %688
      %690 = vrot.lane.b32.xlu0 %v626, 8
      %v691 = vpop.permute.xlu0 %690
      %692 = vrot.lane.b32.xlu0 %v628, 8
      %v693 = vpop.permute.xlu0 %692
      %694 = vrot.lane.b32.xlu0 %v631, 8
      %v695 = vpop.permute.xlu0 %694
      %696 = vrot.lane.b32.xlu0 %v633, 8
      %v697 = vpop.permute.xlu0 %696
      %732 = vrot.lane.b32.xlu0 %v277, 12
      %v733 = vpop.permute.xlu0 %732
      %734 = vrot.lane.b32.xlu0 %v278, 12
      %v735 = vpop.permute.xlu0 %734
      %736 = vrot.lane.b32.xlu0 %v280, 12
      %v737 = vpop.permute.xlu0 %736
      %738 = vrot.lane.b32.xlu0 %v281, 12
      %v739 = vpop.permute.xlu0 %738
      %740 = vrot.lane.b32.xlu0 %v283, 12
      %v741 = vpop.permute.xlu0 %740
      %742 = vrot.lane.b32.xlu0 %v284, 12
      %v743 = vpop.permute.xlu0 %742
      %744 = vrot.lane.b32.xlu0 %v286, 12
      %v745 = vpop.permute.xlu0 %744
      %746 = vrot.lane.b32.xlu0 %v287, 12
      %v747 = vpop.permute.xlu0 %746
      %748 = vrot.lane.b32.xlu0 %v289, 12
      %v749 = vpop.permute.xlu0 %748
      %750 = vrot.lane.b32.xlu0 %v290, 12
      %v751 = vpop.permute.xlu0 %750
      %752 = vrot.lane.b32.xlu0 %v292, 12
      %v753 = vpop.permute.xlu0 %752
      %754 = vrot.lane.b32.xlu0 %v293, 12
      %v755 = vpop.permute.xlu0 %754
      %756 = vrot.lane.b32.xlu0 %v295, 12
      %v757 = vpop.permute.xlu0 %756
      %758 = vrot.lane.b32.xlu0 %v296, 12
      %v759 = vpop.permute.xlu0 %758
      %760 = vrot.lane.b32.xlu0 %v298, 12
      %v761 = vpop.permute.xlu0 %760
      %762 = vrot.lane.b32.xlu0 %v299, 12
      %v763 = vpop.permute.xlu0 %762
      %764 = vrot.lane.b32.xlu0 %v301, 12
      %v765 = vpop.permute.xlu0 %764
      %766 = vrot.lane.b32.xlu0 %v302, 12
      %v767 = vpop.permute.xlu0 %766
      %768 = vrot.lane.b32.xlu0 %v304, 12
      %v769 = vpop.permute.xlu0 %768
      %770 = vrot.lane.b32.xlu0 %v305, 12
      %v771 = vpop.permute.xlu0 %770
      %772 = vrot.lane.b32.xlu0 %v307, 12
      %v773 = vpop.permute.xlu0 %772
      %774 = vrot.lane.b32.xlu0 %v308, 12
      %v775 = vpop.permute.xlu0 %774
      %776 = vrot.lane.b32.xlu0 %v310, 12
      %v777 = vpop.permute.xlu0 %776
      %778 = vrot.lane.b32.xlu0 %v311, 12
      %v779 = vpop.permute.xlu0 %778
      %780 = vrot.lane.b32.xlu0 %v313, 12
      %v781 = vpop.permute.xlu0 %780
      %782 = vrot.lane.b32.xlu0 %v314, 12
      %v783 = vpop.permute.xlu0 %782
      %784 = vrot.lane.b32.xlu0 %v316, 12
      %v785 = vpop.permute.xlu0 %784
      %786 = vrot.lane.b32.xlu0 %v317, 12
      %v787 = vpop.permute.xlu0 %786
      %788 = vrot.lane.b32.xlu0 %v319, 12
      %v789 = vpop.permute.xlu0 %788
      %790 = vrot.lane.b32.xlu0 %v320, 12
      %v791 = vpop.permute.xlu0 %790
      %792 = vrot.lane.b32.xlu0 %v322, 12
      %v793 = vpop.permute.xlu0 %792
      %794 = vrot.lane.b32.xlu0 %v323, 12
      %v795 = vpop.permute.xlu0 %794
      %v829 = vrot.slane %v322, 1
      %v830 = vrot.slane %v323, 1
      %v831 = vsel %vm376, %v829, %v830
      %v832 = vrot.slane %v324, 1
      %v833 = vsel %vm376, %v830, %v832
      %834 = vrot.lane.b32.xlu0 %v384, 16
      %v835 = vpop.permute.xlu0 %834
      %836 = vrot.lane.b32.xlu0 %v386, 16
      %v837 = vpop.permute.xlu0 %836
      %838 = vrot.lane.b32.xlu0 %v389, 16
      %v839 = vpop.permute.xlu0 %838
      %840 = vrot.lane.b32.xlu0 %v391, 16
      %v841 = vpop.permute.xlu0 %840
      %842 = vrot.lane.b32.xlu0 %v394, 16
      %v843 = vpop.permute.xlu0 %842
      %844 = vrot.lane.b32.xlu0 %v396, 16
      %v845 = vpop.permute.xlu0 %844
      %846 = vrot.lane.b32.xlu0 %v399, 16
      %v847 = vpop.permute.xlu0 %846
      %848 = vrot.lane.b32.xlu0 %v401, 16
      %v849 = vpop.permute.xlu0 %848
      %850 = vrot.lane.b32.xlu0 %v404, 16
      %v851 = vpop.permute.xlu0 %850
      %852 = vrot.lane.b32.xlu0 %v406, 16
      %v853 = vpop.permute.xlu0 %852
      %854 = vrot.lane.b32.xlu0 %v409, 16
      %v855 = vpop.permute.xlu0 %854
      %856 = vrot.lane.b32.xlu0 %v411, 16
      %v857 = vpop.permute.xlu0 %856
      %858 = vrot.lane.b32.xlu0 %v414, 16
      %v859 = vpop.permute.xlu0 %858
      %860 = vrot.lane.b32.xlu0 %v416, 16
      %v861 = vpop.permute.xlu0 %860
      %862 = vrot.lane.b32.xlu0 %v419, 16
      %v863 = vpop.permute.xlu0 %862
      %864 = vrot.lane.b32.xlu0 %v421, 16
      %v865 = vpop.permute.xlu0 %864
      %866 = vrot.lane.b32.xlu0 %v424, 16
      %v867 = vpop.permute.xlu0 %866
      %868 = vrot.lane.b32.xlu0 %v426, 16
      %v869 = vpop.permute.xlu0 %868
      %870 = vrot.lane.b32.xlu0 %v429, 16
      %v871 = vpop.permute.xlu0 %870
      %872 = vrot.lane.b32.xlu0 %v431, 16
      %v873 = vpop.permute.xlu0 %872
      %874 = vrot.lane.b32.xlu0 %v434, 16
      %v875 = vpop.permute.xlu0 %874
      %876 = vrot.lane.b32.xlu0 %v436, 16
      %v877 = vpop.permute.xlu0 %876
      %878 = vrot.lane.b32.xlu0 %v439, 16
      %v879 = vpop.permute.xlu0 %878
      %880 = vrot.lane.b32.xlu0 %v441, 16
      %v881 = vpop.permute.xlu0 %880
      %882 = vrot.lane.b32.xlu0 %v444, 16
      %v883 = vpop.permute.xlu0 %882
      %884 = vrot.lane.b32.xlu0 %v446, 16
      %v885 = vpop.permute.xlu0 %884
      %886 = vrot.lane.b32.xlu0 %v449, 16
      %v887 = vpop.permute.xlu0 %886
      %888 = vrot.lane.b32.xlu0 %v451, 16
      %v889 = vpop.permute.xlu0 %888
      %890 = vrot.lane.b32.xlu0 %v454, 16
      %v891 = vpop.permute.xlu0 %890
      %892 = vrot.lane.b32.xlu0 %v456, 16
      %v893 = vpop.permute.xlu0 %892
      %894 = vrot.lane.b32.xlu0 %v831, 16
      %v895 = vpop.permute.xlu0 %894
      %896 = vrot.lane.b32.xlu0 %v833, 16
      %v897 = vpop.permute.xlu0 %896
      %v930 = vrot.slane %v322, 2
      %v931 = vrot.slane %v323, 2
      %v932 = vsel %vm553, %v930, %v931
      %v933 = vrot.slane %v324, 2
      %v934 = vsel %vm553, %v931, %v933
      %935 = vrot.lane.b32.xlu0 %v561, 20
      %v936 = vpop.permute.xlu0 %935
      %937 = vrot.lane.b32.xlu0 %v563, 20
      %v938 = vpop.permute.xlu0 %937
      %939 = vrot.lane.b32.xlu0 %v566, 20
      %v940 = vpop.permute.xlu0 %939
      %941 = vrot.lane.b32.xlu0 %v568, 20
      %v942 = vpop.permute.xlu0 %941
      %943 = vrot.lane.b32.xlu0 %v571, 20
      %v944 = vpop.permute.xlu0 %943
      %945 = vrot.lane.b32.xlu0 %v573, 20
      %v946 = vpop.permute.xlu0 %945
      %947 = vrot.lane.b32.xlu0 %v576, 20
      %v948 = vpop.permute.xlu0 %947
      %949 = vrot.lane.b32.xlu0 %v578, 20
      %v950 = vpop.permute.xlu0 %949
      %951 = vrot.lane.b32.xlu0 %v581, 20
      %v952 = vpop.permute.xlu0 %951
      %953 = vrot.lane.b32.xlu0 %v583, 20
      %v954 = vpop.permute.xlu0 %953
      %955 = vrot.lane.b32.xlu0 %v586, 20
      %v956 = vpop.permute.xlu0 %955
      %957 = vrot.lane.b32.xlu0 %v588, 20
      %v958 = vpop.permute.xlu0 %957
      %959 = vrot.lane.b32.xlu0 %v591, 20
      %v960 = vpop.permute.xlu0 %959
      %961 = vrot.lane.b32.xlu0 %v593, 20
      %v962 = vpop.permute.xlu0 %961
      %963 = vrot.lane.b32.xlu0 %v596, 20
      %v964 = vpop.permute.xlu0 %963
      %965 = vrot.lane.b32.xlu0 %v598, 20
      %v966 = vpop.permute.xlu0 %965
      %967 = vrot.lane.b32.xlu0 %v601, 20
      %v968 = vpop.permute.xlu0 %967
      %969 = vrot.lane.b32.xlu0 %v603, 20
      %v970 = vpop.permute.xlu0 %969
      %971 = vrot.lane.b32.xlu0 %v606, 20
      %v972 = vpop.permute.xlu0 %971
      %973 = vrot.lane.b32.xlu0 %v608, 20
      %v974 = vpop.permute.xlu0 %973
      %975 = vrot.lane.b32.xlu0 %v611, 20
      %v976 = vpop.permute.xlu0 %975
      %977 = vrot.lane.b32.xlu0 %v613, 20
      %v978 = vpop.permute.xlu0 %977
      %979 = vrot.lane.b32.xlu0 %v616, 20
      %v980 = vpop.permute.xlu0 %979
      %981 = vrot.lane.b32.xlu0 %v618, 20
      %v982 = vpop.permute.xlu0 %981
      %983 = vrot.lane.b32.xlu0 %v621, 20
      %v984 = vpop.permute.xlu0 %983
      %985 = vrot.lane.b32.xlu0 %v623, 20
      %v986 = vpop.permute.xlu0 %985
      %987 = vrot.lane.b32.xlu0 %v626, 20
      %v988 = vpop.permute.xlu0 %987
      %989 = vrot.lane.b32.xlu0 %v628, 20
      %v990 = vpop.permute.xlu0 %989
      %991 = vrot.lane.b32.xlu0 %v631, 20
      %v992 = vpop.permute.xlu0 %991
      %993 = vrot.lane.b32.xlu0 %v633, 20
      %v994 = vpop.permute.xlu0 %993
      %995 = vrot.lane.b32.xlu0 %v932, 20
      %v996 = vpop.permute.xlu0 %995
      %997 = vrot.lane.b32.xlu0 %v934, 20
      %v998 = vpop.permute.xlu0 %997
      %1033 = vrot.lane.b32.xlu0 %v280, 24
      %v1034 = vpop.permute.xlu0 %1033
      %1035 = vrot.lane.b32.xlu0 %v281, 24
      %v1036 = vpop.permute.xlu0 %1035
      %1037 = vrot.lane.b32.xlu0 %v283, 24
      %v1038 = vpop.permute.xlu0 %1037
      %1039 = vrot.lane.b32.xlu0 %v284, 24
      %v1040 = vpop.permute.xlu0 %1039
      %1041 = vrot.lane.b32.xlu0 %v286, 24
      %v1042 = vpop.permute.xlu0 %1041
      %1043 = vrot.lane.b32.xlu0 %v287, 24
      %v1044 = vpop.permute.xlu0 %1043
      %1045 = vrot.lane.b32.xlu0 %v289, 24
      %v1046 = vpop.permute.xlu0 %1045
      %1047 = vrot.lane.b32.xlu0 %v290, 24
      %v1048 = vpop.permute.xlu0 %1047
      %1049 = vrot.lane.b32.xlu0 %v292, 24
      %v1050 = vpop.permute.xlu0 %1049
      %1051 = vrot.lane.b32.xlu0 %v293, 24
      %v1052 = vpop.permute.xlu0 %1051
      %1053 = vrot.lane.b32.xlu0 %v295, 24
      %v1054 = vpop.permute.xlu0 %1053
      %1055 = vrot.lane.b32.xlu0 %v296, 24
      %v1056 = vpop.permute.xlu0 %1055
      %1057 = vrot.lane.b32.xlu0 %v298, 24
      %v1058 = vpop.permute.xlu0 %1057
      %1059 = vrot.lane.b32.xlu0 %v299, 24
      %v1060 = vpop.permute.xlu0 %1059
      %1061 = vrot.lane.b32.xlu0 %v301, 24
      %v1062 = vpop.permute.xlu0 %1061
      %1063 = vrot.lane.b32.xlu0 %v302, 24
      %v1064 = vpop.permute.xlu0 %1063
      %1065 = vrot.lane.b32.xlu0 %v304, 24
      %v1066 = vpop.permute.xlu0 %1065
      %1067 = vrot.lane.b32.xlu0 %v305, 24
      %v1068 = vpop.permute.xlu0 %1067
      %1069 = vrot.lane.b32.xlu0 %v307, 24
      %v1070 = vpop.permute.xlu0 %1069
      %1071 = vrot.lane.b32.xlu0 %v308, 24
      %v1072 = vpop.permute.xlu0 %1071
      %1073 = vrot.lane.b32.xlu0 %v310, 24
      %v1074 = vpop.permute.xlu0 %1073
      %1075 = vrot.lane.b32.xlu0 %v311, 24
      %v1076 = vpop.permute.xlu0 %1075
      %1077 = vrot.lane.b32.xlu0 %v313, 24
      %v1078 = vpop.permute.xlu0 %1077
      %1079 = vrot.lane.b32.xlu0 %v314, 24
      %v1080 = vpop.permute.xlu0 %1079
      %1081 = vrot.lane.b32.xlu0 %v316, 24
      %v1082 = vpop.permute.xlu0 %1081
      %1083 = vrot.lane.b32.xlu0 %v317, 24
      %v1084 = vpop.permute.xlu0 %1083
      %1085 = vrot.lane.b32.xlu0 %v319, 24
      %v1086 = vpop.permute.xlu0 %1085
      %1087 = vrot.lane.b32.xlu0 %v320, 24
      %v1088 = vpop.permute.xlu0 %1087
      %1089 = vrot.lane.b32.xlu0 %v322, 24
      %v1090 = vpop.permute.xlu0 %1089
      %1091 = vrot.lane.b32.xlu0 %v323, 24
      %v1092 = vpop.permute.xlu0 %1091
      %1093 = vrot.lane.b32.xlu0 %v325, 24
      %v1094 = vpop.permute.xlu0 %1093
      %1095 = vrot.lane.b32.xlu0 %v326, 24
      %v1096 = vpop.permute.xlu0 %1095
      %v1130 = vrot.slane %v325, 1
      %v1131 = vrot.slane %v326, 1
      %v1132 = vsel %vm376, %v1130, %v1131
      %v1133 = vrot.slane %v327, 1
      %v1134 = vsel %vm376, %v1131, %v1133
      %1135 = vrot.lane.b32.xlu0 %v389, 28
      %v1136 = vpop.permute.xlu0 %1135
      %1137 = vrot.lane.b32.xlu0 %v391, 28
      %v1138 = vpop.permute.xlu0 %1137
      %1139 = vrot.lane.b32.xlu0 %v394, 28
      %v1140 = vpop.permute.xlu0 %1139
      %1141 = vrot.lane.b32.xlu0 %v396, 28
      %v1142 = vpop.permute.xlu0 %1141
      %1143 = vrot.lane.b32.xlu0 %v399, 28
      %v1144 = vpop.permute.xlu0 %1143
      %1145 = vrot.lane.b32.xlu0 %v401, 28
      %v1146 = vpop.permute.xlu0 %1145
      %1147 = vrot.lane.b32.xlu0 %v404, 28
      %v1148 = vpop.permute.xlu0 %1147
      %1149 = vrot.lane.b32.xlu0 %v406, 28
      %v1150 = vpop.permute.xlu0 %1149
      %1151 = vrot.lane.b32.xlu0 %v409, 28
      %v1152 = vpop.permute.xlu0 %1151
      %1153 = vrot.lane.b32.xlu0 %v411, 28
      %v1154 = vpop.permute.xlu0 %1153
      %1155 = vrot.lane.b32.xlu0 %v414, 28
      %v1156 = vpop.permute.xlu0 %1155
      %1157 = vrot.lane.b32.xlu0 %v416, 28
      %v1158 = vpop.permute.xlu0 %1157
      %1159 = vrot.lane.b32.xlu0 %v419, 28
      %v1160 = vpop.permute.xlu0 %1159
      %1161 = vrot.lane.b32.xlu0 %v421, 28
      %v1162 = vpop.permute.xlu0 %1161
      %1163 = vrot.lane.b32.xlu0 %v424, 28
      %v1164 = vpop.permute.xlu0 %1163
      %1165 = vrot.lane.b32.xlu0 %v426, 28
      %v1166 = vpop.permute.xlu0 %1165
      %1167 = vrot.lane.b32.xlu0 %v429, 28
      %v1168 = vpop.permute.xlu0 %1167
      %1169 = vrot.lane.b32.xlu0 %v431, 28
      %v1170 = vpop.permute.xlu0 %1169
      %1171 = vrot.lane.b32.xlu0 %v434, 28
      %v1172 = vpop.permute.xlu0 %1171
      %1173 = vrot.lane.b32.xlu0 %v436, 28
      %v1174 = vpop.permute.xlu0 %1173
      %1175 = vrot.lane.b32.xlu0 %v439, 28
      %v1176 = vpop.permute.xlu0 %1175
      %1177 = vrot.lane.b32.xlu0 %v441, 28
      %v1178 = vpop.permute.xlu0 %1177
      %1179 = vrot.lane.b32.xlu0 %v444, 28
      %v1180 = vpop.permute.xlu0 %1179
      %1181 = vrot.lane.b32.xlu0 %v446, 28
      %v1182 = vpop.permute.xlu0 %1181
      %1183 = vrot.lane.b32.xlu0 %v449, 28
      %v1184 = vpop.permute.xlu0 %1183
      %1185 = vrot.lane.b32.xlu0 %v451, 28
      %v1186 = vpop.permute.xlu0 %1185
      %1187 = vrot.lane.b32.xlu0 %v454, 28
      %v1188 = vpop.permute.xlu0 %1187
      %1189 = vrot.lane.b32.xlu0 %v456, 28
      %v1190 = vpop.permute.xlu0 %1189
      %1191 = vrot.lane.b32.xlu0 %v831, 28
      %v1192 = vpop.permute.xlu0 %1191
      %1193 = vrot.lane.b32.xlu0 %v833, 28
      %v1194 = vpop.permute.xlu0 %1193
      %1195 = vrot.lane.b32.xlu0 %v1132, 28
      %v1196 = vpop.permute.xlu0 %1195
      %1197 = vrot.lane.b32.xlu0 %v1134, 28
      %v1198 = vpop.permute.xlu0 %1197
      %v1231 = vrot.slane %v325, 2
      %v1232 = vrot.slane %v326, 2
      %v1233 = vsel %vm553, %v1231, %v1232
      %v1234 = vrot.slane %v327, 2
      %v1235 = vsel %vm553, %v1232, %v1234
      %1236 = vrot.lane.b32.xlu0 %v566, 32
      %v1237 = vpop.permute.xlu0 %1236
      %1238 = vrot.lane.b32.xlu0 %v568, 32
      %v1239 = vpop.permute.xlu0 %1238
      %1240 = vrot.lane.b32.xlu0 %v571, 32
      %v1241 = vpop.permute.xlu0 %1240
      %1242 = vrot.lane.b32.xlu0 %v573, 32
      %v1243 = vpop.permute.xlu0 %1242
      %1244 = vrot.lane.b32.xlu0 %v576, 32
      %v1245 = vpop.permute.xlu0 %1244
      %1246 = vrot.lane.b32.xlu0 %v578, 32
      %v1247 = vpop.permute.xlu0 %1246
      %1248 = vrot.lane.b32.xlu0 %v581, 32
      %v1249 = vpop.permute.xlu0 %1248
      %1250 = vrot.lane.b32.xlu0 %v583, 32
      %v1251 = vpop.permute.xlu0 %1250
      %1252 = vrot.lane.b32.xlu0 %v586, 32
      %v1253 = vpop.permute.xlu0 %1252
      %1254 = vrot.lane.b32.xlu0 %v588, 32
      %v1255 = vpop.permute.xlu0 %1254
      %1256 = vrot.lane.b32.xlu0 %v591, 32
      %v1257 = vpop.permute.xlu0 %1256
      %1258 = vrot.lane.b32.xlu0 %v593, 32
      %v1259 = vpop.permute.xlu0 %1258
      %1260 = vrot.lane.b32.xlu0 %v596, 32
      %v1261 = vpop.permute.xlu0 %1260
      %1262 = vrot.lane.b32.xlu0 %v598, 32
      %v1263 = vpop.permute.xlu0 %1262
      %1264 = vrot.lane.b32.xlu0 %v601, 32
      %v1265 = vpop.permute.xlu0 %1264
      %1266 = vrot.lane.b32.xlu0 %v603, 32
      %v1267 = vpop.permute.xlu0 %1266
      %1268 = vrot.lane.b32.xlu0 %v606, 32
      %v1269 = vpop.permute.xlu0 %1268
      %1270 = vrot.lane.b32.xlu0 %v608, 32
      %v1271 = vpop.permute.xlu0 %1270
      %1272 = vrot.lane.b32.xlu0 %v611, 32
      %v1273 = vpop.permute.xlu0 %1272
      %1274 = vrot.lane.b32.xlu0 %v613, 32
      %v1275 = vpop.permute.xlu0 %1274
      %1276 = vrot.lane.b32.xlu0 %v616, 32
      %v1277 = vpop.permute.xlu0 %1276
      %1278 = vrot.lane.b32.xlu0 %v618, 32
      %v1279 = vpop.permute.xlu0 %1278
      %1280 = vrot.lane.b32.xlu0 %v621, 32
      %v1281 = vpop.permute.xlu0 %1280
      %1282 = vrot.lane.b32.xlu0 %v623, 32
      %v1283 = vpop.permute.xlu0 %1282
      %1284 = vrot.lane.b32.xlu0 %v626, 32
      %v1285 = vpop.permute.xlu0 %1284
      %1286 = vrot.lane.b32.xlu0 %v628, 32
      %v1287 = vpop.permute.xlu0 %1286
      %1288 = vrot.lane.b32.xlu0 %v631, 32
      %v1289 = vpop.permute.xlu0 %1288
      %1290 = vrot.lane.b32.xlu0 %v633, 32
      %v1291 = vpop.permute.xlu0 %1290
      %1292 = vrot.lane.b32.xlu0 %v932, 32
      %v1293 = vpop.permute.xlu0 %1292
      %1294 = vrot.lane.b32.xlu0 %v934, 32
      %v1295 = vpop.permute.xlu0 %1294
      %1296 = vrot.lane.b32.xlu0 %v1233, 32
      %v1297 = vpop.permute.xlu0 %1296
      %1298 = vrot.lane.b32.xlu0 %v1235, 32
      %v1299 = vpop.permute.xlu0 %1298
      %vm1332 = vcmask 31744
      %v1333 = vsel %vm1332, %v274, %v458
      %v1334 = vsel %vm1332, %v275, %v460
      %v1335 = vsel %vm1332, %v277, %v462
      %v1336 = vsel %vm1332, %v278, %v464
      %v1337 = vsel %vm1332, %v280, %v466
      %v1338 = vsel %vm1332, %v281, %v468
      %v1339 = vsel %vm1332, %v283, %v470
      %v1340 = vsel %vm1332, %v284, %v472
      %v1341 = vsel %vm1332, %v286, %v474
      %v1342 = vsel %vm1332, %v287, %v476
      %v1343 = vsel %vm1332, %v289, %v478
      %v1344 = vsel %vm1332, %v290, %v480
      %v1345 = vsel %vm1332, %v292, %v482
      %v1346 = vsel %vm1332, %v293, %v484
      %v1347 = vsel %vm1332, %v295, %v486
      %v1348 = vsel %vm1332, %v296, %v488
      %v1349 = vsel %vm1332, %v298, %v490
      %v1350 = vsel %vm1332, %v299, %v492
      %v1351 = vsel %vm1332, %v301, %v494
      %v1352 = vsel %vm1332, %v302, %v496
      %v1353 = vsel %vm1332, %v304, %v498
      %v1354 = vsel %vm1332, %v305, %v500
      %v1355 = vsel %vm1332, %v307, %v502
      %v1356 = vsel %vm1332, %v308, %v504
      %v1357 = vsel %vm1332, %v310, %v506
      %v1358 = vsel %vm1332, %v311, %v508
      %v1359 = vsel %vm1332, %v313, %v510
      %v1360 = vsel %vm1332, %v314, %v512
      %v1361 = vsel %vm1332, %v316, %v514
      %v1362 = vsel %vm1332, %v317, %v516
      %v1363 = vsel %vm1332, %v319, %v518
      %v1364 = vsel %vm1332, %v320, %v520
      %vm1365 = vcmask 64512
      %v1366 = vsel %vm1365, %v1333, %v635
      %v1367 = vsel %vm1365, %v1334, %v637
      %v1368 = vsel %vm1365, %v1335, %v639
      %v1369 = vsel %vm1365, %v1336, %v641
      %v1370 = vsel %vm1365, %v1337, %v643
      %v1371 = vsel %vm1365, %v1338, %v645
      %v1372 = vsel %vm1365, %v1339, %v647
      %v1373 = vsel %vm1365, %v1340, %v649
      %v1374 = vsel %vm1365, %v1341, %v651
      %v1375 = vsel %vm1365, %v1342, %v653
      %v1376 = vsel %vm1365, %v1343, %v655
      %v1377 = vsel %vm1365, %v1344, %v657
      %v1378 = vsel %vm1365, %v1345, %v659
      %v1379 = vsel %vm1365, %v1346, %v661
      %v1380 = vsel %vm1365, %v1347, %v663
      %v1381 = vsel %vm1365, %v1348, %v665
      %v1382 = vsel %vm1365, %v1349, %v667
      %v1383 = vsel %vm1365, %v1350, %v669
      %v1384 = vsel %vm1365, %v1351, %v671
      %v1385 = vsel %vm1365, %v1352, %v673
      %v1386 = vsel %vm1365, %v1353, %v675
      %v1387 = vsel %vm1365, %v1354, %v677
      %v1388 = vsel %vm1365, %v1355, %v679
      %v1389 = vsel %vm1365, %v1356, %v681
      %v1390 = vsel %vm1365, %v1357, %v683
      %v1391 = vsel %vm1365, %v1358, %v685
      %v1392 = vsel %vm1365, %v1359, %v687
      %v1393 = vsel %vm1365, %v1360, %v689
      %v1394 = vsel %vm1365, %v1361, %v691
      %v1395 = vsel %vm1365, %v1362, %v693
      %v1396 = vsel %vm1365, %v1363, %v695
      %v1397 = vsel %vm1365, %v1364, %v697
      %vm1398 = vcmask 97280
      %v1399 = vsel %vm1398, %v1366, %v733
      %v1400 = vsel %vm1398, %v1367, %v735
      %v1401 = vsel %vm1398, %v1368, %v737
      %v1402 = vsel %vm1398, %v1369, %v739
      %v1403 = vsel %vm1398, %v1370, %v741
      %v1404 = vsel %vm1398, %v1371, %v743
      %v1405 = vsel %vm1398, %v1372, %v745
      %v1406 = vsel %vm1398, %v1373, %v747
      %v1407 = vsel %vm1398, %v1374, %v749
      %v1408 = vsel %vm1398, %v1375, %v751
      %v1409 = vsel %vm1398, %v1376, %v753
      %v1410 = vsel %vm1398, %v1377, %v755
      %v1411 = vsel %vm1398, %v1378, %v757
      %v1412 = vsel %vm1398, %v1379, %v759
      %v1413 = vsel %vm1398, %v1380, %v761
      %v1414 = vsel %vm1398, %v1381, %v763
      %v1415 = vsel %vm1398, %v1382, %v765
      %v1416 = vsel %vm1398, %v1383, %v767
      %v1417 = vsel %vm1398, %v1384, %v769
      %v1418 = vsel %vm1398, %v1385, %v771
      %v1419 = vsel %vm1398, %v1386, %v773
      %v1420 = vsel %vm1398, %v1387, %v775
      %v1421 = vsel %vm1398, %v1388, %v777
      %v1422 = vsel %vm1398, %v1389, %v779
      %v1423 = vsel %vm1398, %v1390, %v781
      %v1424 = vsel %vm1398, %v1391, %v783
      %v1425 = vsel %vm1398, %v1392, %v785
      %v1426 = vsel %vm1398, %v1393, %v787
      %v1427 = vsel %vm1398, %v1394, %v789
      %v1428 = vsel %vm1398, %v1395, %v791
      %v1429 = vsel %vm1398, %v1396, %v793
      %v1430 = vsel %vm1398, %v1397, %v795
      %vm1431 = vcmask 130048
      %v1432 = vsel %vm1431, %v1399, %v835
      %v1433 = vsel %vm1431, %v1400, %v837
      %v1434 = vsel %vm1431, %v1401, %v839
      %v1435 = vsel %vm1431, %v1402, %v841
      %v1436 = vsel %vm1431, %v1403, %v843
      %v1437 = vsel %vm1431, %v1404, %v845
      %v1438 = vsel %vm1431, %v1405, %v847
      %v1439 = vsel %vm1431, %v1406, %v849
      %v1440 = vsel %vm1431, %v1407, %v851
      %v1441 = vsel %vm1431, %v1408, %v853
      %v1442 = vsel %vm1431, %v1409, %v855
      %v1443 = vsel %vm1431, %v1410, %v857
      %v1444 = vsel %vm1431, %v1411, %v859
      %v1445 = vsel %vm1431, %v1412, %v861
      %v1446 = vsel %vm1431, %v1413, %v863
      %v1447 = vsel %vm1431, %v1414, %v865
      %v1448 = vsel %vm1431, %v1415, %v867
      %v1449 = vsel %vm1431, %v1416, %v869
      %v1450 = vsel %vm1431, %v1417, %v871
      %v1451 = vsel %vm1431, %v1418, %v873
      %v1452 = vsel %vm1431, %v1419, %v875
      %v1453 = vsel %vm1431, %v1420, %v877
      %v1454 = vsel %vm1431, %v1421, %v879
      %v1455 = vsel %vm1431, %v1422, %v881
      %v1456 = vsel %vm1431, %v1423, %v883
      %v1457 = vsel %vm1431, %v1424, %v885
      %v1458 = vsel %vm1431, %v1425, %v887
      %v1459 = vsel %vm1431, %v1426, %v889
      %v1460 = vsel %vm1431, %v1427, %v891
      %v1461 = vsel %vm1431, %v1428, %v893
      %v1462 = vsel %vm1431, %v1429, %v895
      %v1463 = vsel %vm1431, %v1430, %v897
      %vm1464 = vcmask 162816
      %v1465 = vsel %vm1464, %v1432, %v936
      %v1466 = vsel %vm1464, %v1433, %v938
      %v1467 = vsel %vm1464, %v1434, %v940
      %v1468 = vsel %vm1464, %v1435, %v942
      %v1469 = vsel %vm1464, %v1436, %v944
      %v1470 = vsel %vm1464, %v1437, %v946
      %v1471 = vsel %vm1464, %v1438, %v948
      %v1472 = vsel %vm1464, %v1439, %v950
      %v1473 = vsel %vm1464, %v1440, %v952
      %v1474 = vsel %vm1464, %v1441, %v954
      %v1475 = vsel %vm1464, %v1442, %v956
      %v1476 = vsel %vm1464, %v1443, %v958
      %v1477 = vsel %vm1464, %v1444, %v960
      %v1478 = vsel %vm1464, %v1445, %v962
      %v1479 = vsel %vm1464, %v1446, %v964
      %v1480 = vsel %vm1464, %v1447, %v966
      %v1481 = vsel %vm1464, %v1448, %v968
      %v1482 = vsel %vm1464, %v1449, %v970
      %v1483 = vsel %vm1464, %v1450, %v972
      %v1484 = vsel %vm1464, %v1451, %v974
      %v1485 = vsel %vm1464, %v1452, %v976
      %v1486 = vsel %vm1464, %v1453, %v978
      %v1487 = vsel %vm1464, %v1454, %v980
      %v1488 = vsel %vm1464, %v1455, %v982
      %v1489 = vsel %vm1464, %v1456, %v984
      %v1490 = vsel %vm1464, %v1457, %v986
      %v1491 = vsel %vm1464, %v1458, %v988
      %v1492 = vsel %vm1464, %v1459, %v990
      %v1493 = vsel %vm1464, %v1460, %v992
      %v1494 = vsel %vm1464, %v1461, %v994
      %v1495 = vsel %vm1464, %v1462, %v996
      %v1496 = vsel %vm1464, %v1463, %v998
      %vm1497 = vcmask 195584
      %v1498 = vsel %vm1497, %v1465, %v1034
      %v1499 = vsel %vm1497, %v1466, %v1036
      %v1500 = vsel %vm1497, %v1467, %v1038
      %v1501 = vsel %vm1497, %v1468, %v1040
      %v1502 = vsel %vm1497, %v1469, %v1042
      %v1503 = vsel %vm1497, %v1470, %v1044
      %v1504 = vsel %vm1497, %v1471, %v1046
      %v1505 = vsel %vm1497, %v1472, %v1048
      %v1506 = vsel %vm1497, %v1473, %v1050
      %v1507 = vsel %vm1497, %v1474, %v1052
      %v1508 = vsel %vm1497, %v1475, %v1054
      %v1509 = vsel %vm1497, %v1476, %v1056
      %v1510 = vsel %vm1497, %v1477, %v1058
      %v1511 = vsel %vm1497, %v1478, %v1060
      %v1512 = vsel %vm1497, %v1479, %v1062
      %v1513 = vsel %vm1497, %v1480, %v1064
      %v1514 = vsel %vm1497, %v1481, %v1066
      %v1515 = vsel %vm1497, %v1482, %v1068
      %v1516 = vsel %vm1497, %v1483, %v1070
      %v1517 = vsel %vm1497, %v1484, %v1072
      %v1518 = vsel %vm1497, %v1485, %v1074
      %v1519 = vsel %vm1497, %v1486, %v1076
      %v1520 = vsel %vm1497, %v1487, %v1078
      %v1521 = vsel %vm1497, %v1488, %v1080
      %v1522 = vsel %vm1497, %v1489, %v1082
      %v1523 = vsel %vm1497, %v1490, %v1084
      %v1524 = vsel %vm1497, %v1491, %v1086
      %v1525 = vsel %vm1497, %v1492, %v1088
      %v1526 = vsel %vm1497, %v1493, %v1090
      %v1527 = vsel %vm1497, %v1494, %v1092
      %v1528 = vsel %vm1497, %v1495, %v1094
      %v1529 = vsel %vm1497, %v1496, %v1096
      %vm1530 = vcmask 228352
      %v1531 = vsel %vm1530, %v1498, %v1136
      %v1532 = vsel %vm1530, %v1499, %v1138
      %v1533 = vsel %vm1530, %v1500, %v1140
      %v1534 = vsel %vm1530, %v1501, %v1142
      %v1535 = vsel %vm1530, %v1502, %v1144
      %v1536 = vsel %vm1530, %v1503, %v1146
      %v1537 = vsel %vm1530, %v1504, %v1148
      %v1538 = vsel %vm1530, %v1505, %v1150
      %v1539 = vsel %vm1530, %v1506, %v1152
      %v1540 = vsel %vm1530, %v1507, %v1154
      %v1541 = vsel %vm1530, %v1508, %v1156
      %v1542 = vsel %vm1530, %v1509, %v1158
      %v1543 = vsel %vm1530, %v1510, %v1160
      %v1544 = vsel %vm1530, %v1511, %v1162
      %v1545 = vsel %vm1530, %v1512, %v1164
      %v1546 = vsel %vm1530, %v1513, %v1166
      %v1547 = vsel %vm1530, %v1514, %v1168
      %v1548 = vsel %vm1530, %v1515, %v1170
      %v1549 = vsel %vm1530, %v1516, %v1172
      %v1550 = vsel %vm1530, %v1517, %v1174
      %v1551 = vsel %vm1530, %v1518, %v1176
      %v1552 = vsel %vm1530, %v1519, %v1178
      %v1553 = vsel %vm1530, %v1520, %v1180
      %v1554 = vsel %vm1530, %v1521, %v1182
      %v1555 = vsel %vm1530, %v1522, %v1184
      %v1556 = vsel %vm1530, %v1523, %v1186
      %v1557 = vsel %vm1530, %v1524, %v1188
      %v1558 = vsel %vm1530, %v1525, %v1190
      %v1559 = vsel %vm1530, %v1526, %v1192
      %v1560 = vsel %vm1530, %v1527, %v1194
      %v1561 = vsel %vm1530, %v1528, %v1196
      %v1562 = vsel %vm1530, %v1529, %v1198
      %vm1563 = vcmask 261120
      %v1564 = vsel %vm1563, %v1531, %v1237
      %v1565 = vsel %vm1563, %v1532, %v1239
      %v1566 = vsel %vm1563, %v1533, %v1241
      %v1567 = vsel %vm1563, %v1534, %v1243
      %v1568 = vsel %vm1563, %v1535, %v1245
      %v1569 = vsel %vm1563, %v1536, %v1247
      %v1570 = vsel %vm1563, %v1537, %v1249
      %v1571 = vsel %vm1563, %v1538, %v1251
      %v1572 = vsel %vm1563, %v1539, %v1253
      %v1573 = vsel %vm1563, %v1540, %v1255
      %v1574 = vsel %vm1563, %v1541, %v1257
      %v1575 = vsel %vm1563, %v1542, %v1259
      %v1576 = vsel %vm1563, %v1543, %v1261
      %v1577 = vsel %vm1563, %v1544, %v1263
      %v1578 = vsel %vm1563, %v1545, %v1265
      %v1579 = vsel %vm1563, %v1546, %v1267
      %v1580 = vsel %vm1563, %v1547, %v1269
      %v1581 = vsel %vm1563, %v1548, %v1271
      %v1582 = vsel %vm1563, %v1549, %v1273
      %v1583 = vsel %vm1563, %v1550, %v1275
      %v1584 = vsel %vm1563, %v1551, %v1277
      %v1585 = vsel %vm1563, %v1552, %v1279
      %v1586 = vsel %vm1563, %v1553, %v1281
      %v1587 = vsel %vm1563, %v1554, %v1283
      %v1588 = vsel %vm1563, %v1555, %v1285
      %v1589 = vsel %vm1563, %v1556, %v1287
      %v1590 = vsel %vm1563, %v1557, %v1289
      %v1591 = vsel %vm1563, %v1558, %v1291
      %v1592 = vsel %vm1563, %v1559, %v1293
      %v1593 = vsel %vm1563, %v1560, %v1295
      %v1594 = vsel %vm1563, %v1561, %v1297
      %v1595 = vsel %vm1563, %v1562, %v1299
      %v1596 = vpack.c.bf16 %v1565, %v1564
      %v1597 = vpack.c.bf16 %v1567, %v1566
      %v1598 = vpack.c.bf16 %v1569, %v1568
      %v1599 = vpack.c.bf16 %v1571, %v1570
      %v1600 = vpack.c.bf16 %v1573, %v1572
      %v1601 = vpack.c.bf16 %v1575, %v1574
      %v1602 = vpack.c.bf16 %v1577, %v1576
      %v1603 = vpack.c.bf16 %v1579, %v1578
      %v1604 = vpack.c.bf16 %v1581, %v1580
      %v1605 = vpack.c.bf16 %v1583, %v1582
      %v1606 = vpack.c.bf16 %v1585, %v1584
      %v1607 = vpack.c.bf16 %v1587, %v1586
      %v1608 = vpack.c.bf16 %v1589, %v1588
      %v1609 = vpack.c.bf16 %v1591, %v1590
      %v1610 = vpack.c.bf16 %v1593, %v1592
      %v1611 = vpack.c.bf16 %v1595, %v1594
      %v1612 = vld [vmem:[%s1] sm:$0xf]
      %v1613 = vld [vmem:[%s1 + $0x4] sm:$0xf]
      %v1614 = vld [vmem:[%s1 + $0x8] sm:$0xf]
      %v1615 = vld [vmem:[%s1 + $0xc] sm:$0xf]
      %v1616 = vld [vmem:[%s1 + $0x10] sm:$0x3]
      %v1617 = vld [vmem:[%s2] sm:$0x1]
      %v1619 = vlaneseq
      %v1620 = vshrl.u32 %v1619, 7
      %v1621 = vsub.s32 0, %v1620
      %v1622 = vrot.slane %v1617, %v1621
      %v1629 = vunpack.c.l.b16 %v1612
      %v1630 = vunpack.c.l.b16 %v1613
      %v1631 = vunpack.c.l.b16 %v1614
      %v1632 = vunpack.c.l.b16 %v1615
      %v1633 = vunpack.c.l.b16 %v1616
      %v1634 = vpack.c.b16 %v1630, %v1629
      %v1635 = vpack.c.b16 %v1632, %v1631
      %v1636 = vpack.c.b16 %v1633, %v1633
      %vm1639 = vcmask 293888
      %v1641 = vsel %vm1639, %v1596, 0
      %v1644 = vsel %vm1639, %v1597, 0
      %v1647 = vsel %vm1639, %v1598, 0
      %v1650 = vsel %vm1639, %v1599, 0
      %v1653 = vsel %vm1639, %v1600, 0
      %v1656 = vsel %vm1639, %v1601, 0
      %v1659 = vsel %vm1639, %v1602, 0
      %v1662 = vsel %vm1639, %v1603, 0
      %v1665 = vsel %vm1639, %v1604, 0
      %v1668 = vsel %vm1639, %v1605, 0
      %v1671 = vsel %vm1639, %v1606, 0
      %v1674 = vsel %vm1639, %v1607, 0
      %v1677 = vsel %vm1639, %v1608, 0
      %v1680 = vsel %vm1639, %v1609, 0
      %v1683 = vsel %vm1639, %v1610, 0
      %v1686 = vsel %vm1639, %v1611, 0
      %vm1688 = vcmask 1041408
      %v1690 = vsel %vm1688, %v1636, 0
      %1692 = vmatprep.subr.bf16.mxu0 0
      %1693 = vmatpush1.bf16.msra.mxu0 0
      %1694 = vmatprep.subr.bf16.mxu0 0
      %1695 = vmatpush1.bf16.msra.mxu0 0
      %1696 = vmatprep.subr.bf16.mxu0 0
      %1697 = vmatpush1.bf16.msra.mxu0 0
      %1698 = vmatprep.subr.bf16.mxu0 0
      %1699 = vmatpush1.bf16.msra.mxu0 0
      %1700 = vmatprep.subr.bf16.mxu0 0
      %1701 = vmatpush1.bf16.msra.mxu0 0
      %1702 = vmatprep.subr.bf16.mxu0 0
      %1703 = vmatpush1.bf16.msra.mxu0 %v1690
      %1704 = vmatprep.subr.bf16.mxu0 0
      %1705 = vmatpush1.bf16.msra.mxu0 %v1635
      %1706 = vmatprep.subr.bf16.mxu0 0
      %1707 = vmatpush1.bf16.msra.mxu0 %v1634
      %1708 = vmatprep.subr.bf16.mxu0 0
      %1709 = vmatpush2.bf16.msra.mxu0 0
      %1710 = vmatprep.subr.bf16.mxu0 0
      %1711 = vmatpush2.bf16.msra.mxu0 0
      %1712 = vmatprep.subr.bf16.mxu0 0
      %1713 = vmatpush2.bf16.msra.mxu0 0
      %1714 = vmatprep.subr.bf16.mxu0 0
      %1715 = vmatpush2.bf16.msra.mxu0 0
      %1716 = vmatprep.subr.bf16.mxu0 0
      %1717 = vmatpush2.bf16.msra.mxu0 0
      %1718 = vmatprep.subr.bf16.mxu0 0
      %1719 = vmatpush2.bf16.msra.mxu0 0
      %1720 = vmatprep.subr.bf16.mxu0 0
      %1721 = vmatpush2.bf16.msra.mxu0 0
      %1722 = vmatprep.subr.bf16.mxu0 0
      %1723 = vmatpush2.bf16.msra.mxu0 0
      %1724 = vmatprep.mubr.bf16.mxu0 0
      %1725 = vmatmul.mubr.bf16.gmra.mxu0 %v1641
      %v1726 = vpop.f32.mrf.mxu0
      %v1727 = vadd.f32 %v1622, %v1726
      %v1728 = vpop.f32.mrf.mxu0
      %v1729 = vpop.f32.mrf.mxu0
      %v1730 = vadd.f32 %v1622, %v1729
      %v1731 = vpop.f32.mrf.mxu0
      %1732 = vmatprep.mubr.bf16.mxu0 0
      %1733 = vmatmul.mubr.bf16.gmra.mxu0 %v1644
      %v1734 = vpop.f32.mrf.mxu0
      %v1735 = vadd.f32 %v1622, %v1734
      %v1736 = vpop.f32.mrf.mxu0
      %v1737 = vpop.f32.mrf.mxu0
      %v1738 = vadd.f32 %v1622, %v1737
      %v1739 = vpop.f32.mrf.mxu0
      %1740 = vmatprep.mubr.bf16.mxu0 0
      %1741 = vmatmul.mubr.bf16.gmra.mxu0 %v1647
      %v1742 = vpop.f32.mrf.mxu0
      %v1743 = vadd.f32 %v1622, %v1742
      %v1744 = vpop.f32.mrf.mxu0
      %v1745 = vpop.f32.mrf.mxu0
      %v1746 = vadd.f32 %v1622, %v1745
      %v1747 = vpop.f32.mrf.mxu0
      %1748 = vmatprep.mubr.bf16.mxu0 0
      %1749 = vmatmul.mubr.bf16.gmra.mxu0 %v1650
      %v1750 = vpop.f32.mrf.mxu0
      %v1751 = vadd.f32 %v1622, %v1750
      %v1752 = vpop.f32.mrf.mxu0
      %v1753 = vpop.f32.mrf.mxu0
      %v1754 = vadd.f32 %v1622, %v1753
      %v1755 = vpop.f32.mrf.mxu0
      %1756 = vmatprep.mubr.bf16.mxu0 0
      %1757 = vmatmul.mubr.bf16.gmra.mxu0 %v1653
      %v1758 = vpop.f32.mrf.mxu0
      %v1759 = vadd.f32 %v1622, %v1758
      %v1760 = vpop.f32.mrf.mxu0
      %v1761 = vpop.f32.mrf.mxu0
      %v1762 = vadd.f32 %v1622, %v1761
      %v1763 = vpop.f32.mrf.mxu0
      %1764 = vmatprep.mubr.bf16.mxu0 0
      %1765 = vmatmul.mubr.bf16.gmra.mxu0 %v1656
      %v1766 = vpop.f32.mrf.mxu0
      %v1767 = vadd.f32 %v1622, %v1766
      %v1768 = vpop.f32.mrf.mxu0
      %v1769 = vpop.f32.mrf.mxu0
      %v1770 = vadd.f32 %v1622, %v1769
      %v1771 = vpop.f32.mrf.mxu0
      %1772 = vmatprep.mubr.bf16.mxu0 0
      %1773 = vmatmul.mubr.bf16.gmra.mxu0 %v1659
      %v1774 = vpop.f32.mrf.mxu0
      %v1775 = vadd.f32 %v1622, %v1774
      %v1776 = vpop.f32.mrf.mxu0
      %v1777 = vpop.f32.mrf.mxu0
      %v1778 = vadd.f32 %v1622, %v1777
      %v1779 = vpop.f32.mrf.mxu0
      %1780 = vmatprep.mubr.bf16.mxu0 0
      %1781 = vmatmul.mubr.bf16.gmra.mxu0 %v1662
      %v1782 = vpop.f32.mrf.mxu0
      %v1783 = vadd.f32 %v1622, %v1782
      %v1784 = vpop.f32.mrf.mxu0
      %v1785 = vpop.f32.mrf.mxu0
      %v1786 = vadd.f32 %v1622, %v1785
      %v1787 = vpop.f32.mrf.mxu0
      %1788 = vmatprep.mubr.bf16.mxu0 0
      %1789 = vmatmul.mubr.bf16.gmra.mxu0 %v1665
      %v1790 = vpop.f32.mrf.mxu0
      %v1791 = vadd.f32 %v1622, %v1790
      %v1792 = vpop.f32.mrf.mxu0
      %v1793 = vpop.f32.mrf.mxu0
      %v1794 = vadd.f32 %v1622, %v1793
      %v1795 = vpop.f32.mrf.mxu0
      %1796 = vmatprep.mubr.bf16.mxu0 0
      %1797 = vmatmul.mubr.bf16.gmra.mxu0 %v1668
      %v1798 = vpop.f32.mrf.mxu0
      %v1799 = vadd.f32 %v1622, %v1798
      %v1800 = vpop.f32.mrf.mxu0
      %v1801 = vpop.f32.mrf.mxu0
      %v1802 = vadd.f32 %v1622, %v1801
      %v1803 = vpop.f32.mrf.mxu0
      %1804 = vmatprep.mubr.bf16.mxu0 0
      %1805 = vmatmul.mubr.bf16.gmra.mxu0 %v1671
      %v1806 = vpop.f32.mrf.mxu0
      %v1807 = vadd.f32 %v1622, %v1806
      %v1808 = vpop.f32.mrf.mxu0
      %v1809 = vpop.f32.mrf.mxu0
      %v1810 = vadd.f32 %v1622, %v1809
      %v1811 = vpop.f32.mrf.mxu0
      %1812 = vmatprep.mubr.bf16.mxu0 0
      %1813 = vmatmul.mubr.bf16.gmra.mxu0 %v1674
      %v1814 = vpop.f32.mrf.mxu0
      %v1815 = vadd.f32 %v1622, %v1814
      %v1816 = vpop.f32.mrf.mxu0
      %v1817 = vpop.f32.mrf.mxu0
      %v1818 = vadd.f32 %v1622, %v1817
      %v1819 = vpop.f32.mrf.mxu0
      %1820 = vmatprep.mubr.bf16.mxu0 0
      %1821 = vmatmul.mubr.bf16.gmra.mxu0 %v1677
      %v1822 = vpop.f32.mrf.mxu0
      %v1823 = vadd.f32 %v1622, %v1822
      %v1824 = vpop.f32.mrf.mxu0
      %v1825 = vpop.f32.mrf.mxu0
      %v1826 = vadd.f32 %v1622, %v1825
      %v1827 = vpop.f32.mrf.mxu0
      %1828 = vmatprep.mubr.bf16.mxu0 0
      %1829 = vmatmul.mubr.bf16.gmra.mxu0 %v1680
      %v1830 = vpop.f32.mrf.mxu0
      %v1831 = vadd.f32 %v1622, %v1830
      %v1832 = vpop.f32.mrf.mxu0
      %v1833 = vpop.f32.mrf.mxu0
      %v1834 = vadd.f32 %v1622, %v1833
      %v1835 = vpop.f32.mrf.mxu0
      %1836 = vmatprep.mubr.bf16.mxu0 0
      %1837 = vmatmul.mubr.bf16.gmra.mxu0 %v1683
      %v1838 = vpop.f32.mrf.mxu0
      %v1839 = vadd.f32 %v1622, %v1838
      %v1840 = vpop.f32.mrf.mxu0
      %v1841 = vpop.f32.mrf.mxu0
      %v1842 = vadd.f32 %v1622, %v1841
      %v1843 = vpop.f32.mrf.mxu0
      %1844 = vmatprep.mubr.bf16.mxu0 0
      %1845 = vmatmul.mubr.bf16.gmra.mxu0 %v1686
      %v1846 = vpop.f32.mrf.mxu0
      %v1847 = vadd.f32 %v1622, %v1846
      %v1848 = vpop.f32.mrf.mxu0
      %v1849 = vpop.f32.mrf.mxu0
      %v1850 = vadd.f32 %v1622, %v1849
      %v1851 = vpop.f32.mrf.mxu0
      %1852 = vdwg.mxu0
      %v1853 = vmax.f32 %v1727, 0.0
      %v1854 = vmax.f32 %v1730, 0.0
      %v1855 = vmax.f32 %v1735, 0.0
      %v1856 = vmax.f32 %v1738, 0.0
      %v1857 = vmax.f32 %v1743, 0.0
      %v1858 = vmax.f32 %v1746, 0.0
      %v1859 = vmax.f32 %v1751, 0.0
      %v1860 = vmax.f32 %v1754, 0.0
      %v1861 = vmax.f32 %v1759, 0.0
      %v1862 = vmax.f32 %v1762, 0.0
      %v1863 = vmax.f32 %v1767, 0.0
      %v1864 = vmax.f32 %v1770, 0.0
      %v1865 = vmax.f32 %v1775, 0.0
      %v1866 = vmax.f32 %v1778, 0.0
      %v1867 = vmax.f32 %v1783, 0.0
      %v1868 = vmax.f32 %v1786, 0.0
      %v1869 = vmax.f32 %v1791, 0.0
      %v1870 = vmax.f32 %v1794, 0.0
      %v1871 = vmax.f32 %v1799, 0.0
      %v1872 = vmax.f32 %v1802, 0.0
      %v1873 = vmax.f32 %v1807, 0.0
      %v1874 = vmax.f32 %v1810, 0.0
      %v1875 = vmax.f32 %v1815, 0.0
      %v1876 = vmax.f32 %v1818, 0.0
      %v1877 = vmax.f32 %v1823, 0.0
      %v1878 = vmax.f32 %v1826, 0.0
      %v1879 = vmax.f32 %v1831, 0.0
      %v1880 = vmax.f32 %v1834, 0.0
      %v1881 = vmax.f32 %v1839, 0.0
      %v1882 = vmax.f32 %v1842, 0.0
      %v1883 = vmax.f32 %v1847, 0.0
      %v1884 = vmax.f32 %v1850, 0.0
      %v1885 = vld [vmem:[%s262] sm:$0x1]
      %v1886 = vsel %vm1365, %v1853, 0.0
      %v1887 = vsel %vm1365, %v1854, 0.0
      %v1888 = vadd.f32 %v1886, %v1887
      %v1889 = vsel %vm1365, %v1855, 0.0
      %v1890 = vadd.f32 %v1888, %v1889
      %v1891 = vsel %vm1365, %v1856, 0.0
      %v1892 = vadd.f32 %v1890, %v1891
      %v1893 = vsel %vm1365, %v1857, 0.0
      %v1894 = vadd.f32 %v1892, %v1893
      %v1895 = vsel %vm1365, %v1858, 0.0
      %v1896 = vadd.f32 %v1894, %v1895
      %v1897 = vsel %vm1365, %v1859, 0.0
      %v1898 = vadd.f32 %v1896, %v1897
      %v1899 = vsel %vm1365, %v1860, 0.0
      %v1900 = vadd.f32 %v1898, %v1899
      %v1901 = vsel %vm1365, %v1861, 0.0
      %v1902 = vadd.f32 %v1900, %v1901
      %v1903 = vsel %vm1365, %v1862, 0.0
      %v1904 = vadd.f32 %v1902, %v1903
      %v1905 = vsel %vm1365, %v1863, 0.0
      %v1906 = vadd.f32 %v1904, %v1905
      %v1907 = vsel %vm1365, %v1864, 0.0
      %v1908 = vadd.f32 %v1906, %v1907
      %v1909 = vsel %vm1365, %v1865, 0.0
      %v1910 = vadd.f32 %v1908, %v1909
      %v1911 = vsel %vm1365, %v1866, 0.0
      %v1912 = vadd.f32 %v1910, %v1911
      %v1913 = vsel %vm1365, %v1867, 0.0
      %v1914 = vadd.f32 %v1912, %v1913
      %v1915 = vsel %vm1365, %v1868, 0.0
      %v1916 = vadd.f32 %v1914, %v1915
      %v1917 = vsel %vm1365, %v1869, 0.0
      %v1918 = vadd.f32 %v1916, %v1917
      %v1919 = vsel %vm1365, %v1870, 0.0
      %v1920 = vadd.f32 %v1918, %v1919
      %v1921 = vsel %vm1365, %v1871, 0.0
      %v1922 = vadd.f32 %v1920, %v1921
      %v1923 = vsel %vm1365, %v1872, 0.0
      %v1924 = vadd.f32 %v1922, %v1923
      %v1925 = vsel %vm1365, %v1873, 0.0
      %v1926 = vadd.f32 %v1924, %v1925
      %v1927 = vsel %vm1365, %v1874, 0.0
      %v1928 = vadd.f32 %v1926, %v1927
      %v1929 = vsel %vm1365, %v1875, 0.0
      %v1930 = vadd.f32 %v1928, %v1929
      %v1931 = vsel %vm1365, %v1876, 0.0
      %v1932 = vadd.f32 %v1930, %v1931
      %v1933 = vsel %vm1365, %v1877, 0.0
      %v1934 = vadd.f32 %v1932, %v1933
      %v1935 = vsel %vm1365, %v1878, 0.0
      %v1936 = vadd.f32 %v1934, %v1935
      %v1937 = vsel %vm1365, %v1879, 0.0
      %v1938 = vadd.f32 %v1936, %v1937
      %v1939 = vsel %vm1365, %v1880, 0.0
      %v1940 = vadd.f32 %v1938, %v1939
      %v1941 = vsel %vm1365, %v1881, 0.0
      %v1942 = vadd.f32 %v1940, %v1941
      %v1943 = vsel %vm1365, %v1882, 0.0
      %v1944 = vadd.f32 %v1942, %v1943
      %v1945 = vsel %vm1365, %v1883, 0.0
      %v1946 = vadd.f32 %v1944, %v1945
      %v1947 = vsel %vm1365, %v1884, 0.0
      %v1948 = vadd.f32 %v1946, %v1947
      %v1949 = vrot.slane %v1948, 4
      %v1950 = vadd.f32 %v1948, %v1949
      %v1951 = vrot.slane %v1950, 2
      %v1952 = vadd.f32 %v1950, %v1951
      %v1953 = vrot.slane %v1952, 1
      %v1954 = vadd.f32 %v1952, %v1953
      %v1955 = vadd.f32 %v1885, %v1954
      %vm1956 = vcmask 57344
      %1957 = vst.msk [vmem:[%s262] sm:$0x1] %vm1956, %v1955
      %v1958 = vld [vmem:[%s265] sm:$0x1]
      %v1959 = vmul.f32 %v1853, %v1853
      %v1960 = vmul.f32 %v1854, %v1854
      %v1961 = vmul.f32 %v1855, %v1855
      %v1962 = vmul.f32 %v1856, %v1856
      %v1963 = vmul.f32 %v1857, %v1857
      %v1964 = vmul.f32 %v1858, %v1858
      %v1965 = vmul.f32 %v1859, %v1859
      %v1966 = vmul.f32 %v1860, %v1860
      %v1967 = vmul.f32 %v1861, %v1861
      %v1968 = vmul.f32 %v1862, %v1862
      %v1969 = vmul.f32 %v1863, %v1863
      %v1970 = vmul.f32 %v1864, %v1864
      %v1971 = vmul.f32 %v1865, %v1865
      %v1972 = vmul.f32 %v1866, %v1866
      %v1973 = vmul.f32 %v1867, %v1867
      %v1974 = vmul.f32 %v1868, %v1868
      %v1975 = vmul.f32 %v1869, %v1869
      %v1976 = vmul.f32 %v1870, %v1870
      %v1977 = vmul.f32 %v1871, %v1871
      %v1978 = vmul.f32 %v1872, %v1872
      %v1979 = vmul.f32 %v1873, %v1873
      %v1980 = vmul.f32 %v1874, %v1874
      %v1981 = vmul.f32 %v1875, %v1875
      %v1982 = vmul.f32 %v1876, %v1876
      %v1983 = vmul.f32 %v1877, %v1877
      %v1984 = vmul.f32 %v1878, %v1878
      %v1985 = vmul.f32 %v1879, %v1879
      %v1986 = vmul.f32 %v1880, %v1880
      %v1987 = vmul.f32 %v1881, %v1881
      %v1988 = vmul.f32 %v1882, %v1882
      %v1989 = vmul.f32 %v1883, %v1883
      %v1990 = vmul.f32 %v1884, %v1884
      %v1991 = vsel %vm1365, %v1959, 0.0
      %v1992 = vsel %vm1365, %v1960, 0.0
      %v1993 = vadd.f32 %v1991, %v1992
      %v1994 = vsel %vm1365, %v1961, 0.0
      %v1995 = vadd.f32 %v1993, %v1994
      %v1996 = vsel %vm1365, %v1962, 0.0
      %v1997 = vadd.f32 %v1995, %v1996
      %v1998 = vsel %vm1365, %v1963, 0.0
      %v1999 = vadd.f32 %v1997, %v1998
      %v2000 = vsel %vm1365, %v1964, 0.0
      %v2001 = vadd.f32 %v1999, %v2000
      %v2002 = vsel %vm1365, %v1965, 0.0
      %v2003 = vadd.f32 %v2001, %v2002
      %v2004 = vsel %vm1365, %v1966, 0.0
      %v2005 = vadd.f32 %v2003, %v2004
      %v2006 = vsel %vm1365, %v1967, 0.0
      %v2007 = vadd.f32 %v2005, %v2006
      %v2008 = vsel %vm1365, %v1968, 0.0
      %v2009 = vadd.f32 %v2007, %v2008
      %v2010 = vsel %vm1365, %v1969, 0.0
      %v2011 = vadd.f32 %v2009, %v2010
      %v2012 = vsel %vm1365, %v1970, 0.0
      %v2013 = vadd.f32 %v2011, %v2012
      %v2014 = vsel %vm1365, %v1971, 0.0
      %v2015 = vadd.f32 %v2013, %v2014
      %v2016 = vsel %vm1365, %v1972, 0.0
      %v2017 = vadd.f32 %v2015, %v2016
      %v2018 = vsel %vm1365, %v1973, 0.0
      %v2019 = vadd.f32 %v2017, %v2018
      %v2020 = vsel %vm1365, %v1974, 0.0
      %v2021 = vadd.f32 %v2019, %v2020
      %v2022 = vsel %vm1365, %v1975, 0.0
      %v2023 = vadd.f32 %v2021, %v2022
      %v2024 = vsel %vm1365, %v1976, 0.0
      %v2025 = vadd.f32 %v2023, %v2024
      %v2026 = vsel %vm1365, %v1977, 0.0
      %v2027 = vadd.f32 %v2025, %v2026
      %v2028 = vsel %vm1365, %v1978, 0.0
      %v2029 = vadd.f32 %v2027, %v2028
      %v2030 = vsel %vm1365, %v1979, 0.0
      %v2031 = vadd.f32 %v2029, %v2030
      %v2032 = vsel %vm1365, %v1980, 0.0
      %v2033 = vadd.f32 %v2031, %v2032
      %v2034 = vsel %vm1365, %v1981, 0.0
      %v2035 = vadd.f32 %v2033, %v2034
      %v2036 = vsel %vm1365, %v1982, 0.0
      %v2037 = vadd.f32 %v2035, %v2036
      %v2038 = vsel %vm1365, %v1983, 0.0
      %v2039 = vadd.f32 %v2037, %v2038
      %v2040 = vsel %vm1365, %v1984, 0.0
      %v2041 = vadd.f32 %v2039, %v2040
      %v2042 = vsel %vm1365, %v1985, 0.0
      %v2043 = vadd.f32 %v2041, %v2042
      %v2044 = vsel %vm1365, %v1986, 0.0
      %v2045 = vadd.f32 %v2043, %v2044
      %v2046 = vsel %vm1365, %v1987, 0.0
      %v2047 = vadd.f32 %v2045, %v2046
      %v2048 = vsel %vm1365, %v1988, 0.0
      %v2049 = vadd.f32 %v2047, %v2048
      %v2050 = vsel %vm1365, %v1989, 0.0
      %v2051 = vadd.f32 %v2049, %v2050
      %v2052 = vsel %vm1365, %v1990, 0.0
      %v2053 = vadd.f32 %v2051, %v2052
      %v2054 = vrot.slane %v2053, 4
      %v2055 = vadd.f32 %v2053, %v2054
      %v2056 = vrot.slane %v2055, 2
      %v2057 = vadd.f32 %v2055, %v2056
      %v2058 = vrot.slane %v2057, 1
      %v2059 = vadd.f32 %v2057, %v2058
      %v2060 = vadd.f32 %v1958, %v2059
      %2061 = vst.msk [vmem:[%s265] sm:$0x1] %vm1956, %v2060
      %2062 = vst.msk [vmem:[%s258] sm:$0xff] %vm1365, %v1853
      %2063 = vst.msk [vmem:[%s258 + $0x8] sm:$0xff] %vm1365, %v1854
      %2064 = vst.msk [vmem:[%s258 + $0x10] sm:$0xff] %vm1365, %v1855
      %2065 = vst.msk [vmem:[%s258 + $0x18] sm:$0xff] %vm1365, %v1856
      %2066 = vst.msk [vmem:[%s258 + $0x20] sm:$0xff] %vm1365, %v1857
      %2067 = vst.msk [vmem:[%s258 + $0x28] sm:$0xff] %vm1365, %v1858
      %2068 = vst.msk [vmem:[%s258 + $0x30] sm:$0xff] %vm1365, %v1859
      %2069 = vst.msk [vmem:[%s258 + $0x38] sm:$0xff] %vm1365, %v1860
      %2070 = vst.msk [vmem:[%s258 + $0x40] sm:$0xff] %vm1365, %v1861
      %2071 = vst.msk [vmem:[%s258 + $0x48] sm:$0xff] %vm1365, %v1862
      %2072 = vst.msk [vmem:[%s258 + $0x50] sm:$0xff] %vm1365, %v1863
      %2073 = vst.msk [vmem:[%s258 + $0x58] sm:$0xff] %vm1365, %v1864
      %2074 = vst.msk [vmem:[%s258 + $0x60] sm:$0xff] %vm1365, %v1865
      %2075 = vst.msk [vmem:[%s258 + $0x68] sm:$0xff] %vm1365, %v1866
      %2076 = vst.msk [vmem:[%s258 + $0x70] sm:$0xff] %vm1365, %v1867
      %2077 = vst.msk [vmem:[%s258 + $0x78] sm:$0xff] %vm1365, %v1868
      %2078 = vst.msk [vmem:[%s258 + $0x80] sm:$0xff] %vm1365, %v1869
      %2079 = vst.msk [vmem:[%s258 + $0x88] sm:$0xff] %vm1365, %v1870
      %2080 = vst.msk [vmem:[%s258 + $0x90] sm:$0xff] %vm1365, %v1871
      %2081 = vst.msk [vmem:[%s258 + $0x98] sm:$0xff] %vm1365, %v1872
      %2082 = vst.msk [vmem:[%s258 + $0xa0] sm:$0xff] %vm1365, %v1873
      %2083 = vst.msk [vmem:[%s258 + $0xa8] sm:$0xff] %vm1365, %v1874
      %2084 = vst.msk [vmem:[%s258 + $0xb0] sm:$0xff] %vm1365, %v1875
      %2085 = vst.msk [vmem:[%s258 + $0xb8] sm:$0xff] %vm1365, %v1876
      %2086 = vst.msk [vmem:[%s258 + $0xc0] sm:$0xff] %vm1365, %v1877
      %2087 = vst.msk [vmem:[%s258 + $0xc8] sm:$0xff] %vm1365, %v1878
      %2088 = vst.msk [vmem:[%s258 + $0xd0] sm:$0xff] %vm1365, %v1879
      %2089 = vst.msk [vmem:[%s258 + $0xd8] sm:$0xff] %vm1365, %v1880
      %2090 = vst.msk [vmem:[%s258 + $0xe0] sm:$0xff] %vm1365, %v1881
      %2091 = vst.msk [vmem:[%s258 + $0xe8] sm:$0xff] %vm1365, %v1882
      %2092 = vst.msk [vmem:[%s258 + $0xf0] sm:$0xff] %vm1365, %v1883
      %2093 = vst.msk [vmem:[%s258 + $0xf8] sm:$0xff] %vm1365, %v1884
      %s2094 = sadd.s32 %s21, %s22
      %p2095 = scmp.lt.s32.totalorder %s2094, 1
      %s2096 = scalar_select %p2095, %s2094, 1
      %s2097 = smul.addr %s2096, 32
      %s2098 = smul.addr %s2097, 8
      %s2099 = scalar_lea.vmem %s3, %s2098
      %p2100 = scmp.lt.s32.totalorder %s21, 1
      %s2101 = scalar_select %p2100, %s21, 1
      %s2102 = scalar_lea.vmem %s4, %s2101
      %p2103 = scmp.lt.s32.totalorder %s21, 1
      %s2104 = scalar_select %p2103, %s21, 1
      %s2105 = scalar_lea.vmem %s5, %s2104
      // Predicated region
      $region37: #{residual_block_forward.4} parent=31 // pred_check
        %p2106 = pneg %p119
      $region38: #{residual_block_forward.4} parent=31 // pred_check_branch
        %2108 = sbr.rel (%p2106) target = $region40
      $region39: #{residual_block_forward.4} parent=31 // pred_region
        %s2109 = sadd.s32 %s21, %s22
      $region40: #{residual_block_forward.4} parent=31 // pred_fallthru
        _
      // Predicated region
      $region41: #{residual_block_forward.4} parent=31 // pred_check
        %p2110 = pneg %p145
      $region42: #{residual_block_forward.4} parent=31 // pred_check_branch
        %2112 = sbr.rel (%p2110) target = $region44
      $region43: #{residual_block_forward.4} parent=31 // pred_region
        _
      $region44: #{residual_block_forward.4} parent=31 // pred_fallthru
        _
      // Predicated region
      $region45: #{residual_block_forward.4} parent=31 // pred_check
        %p2113 = pneg %p171
      $region46: #{residual_block_forward.4} parent=31 // pred_check_branch
        %2115 = sbr.rel (%p2113) target = $region48
      $region47: #{residual_block_forward.4} parent=31 // pred_region
        _
      $region48: #{residual_block_forward.4} parent=31 // pred_fallthru
        _
    $region32: #{residual_block_forward.4} parent=5 // pred_fallthru
      _
    %p2116 = scmp.le.s32.totalorder 2, %s12
    // Predicated region
    $region49: #{residual_block_forward.4} parent=5 // pred_check
      %p2117 = pneg %p2116
    $region50: #{residual_block_forward.4} parent=5 // pred_check_branch
      %2119 = sbr.rel (%p2117) target = $region52
    $region51: #{residual_block_forward.4} parent=5 // pred_region
      %s2120 = ssub.s32 %s12, 2
      // Predicated region
      $region53: #{residual_block_forward.4} parent=51 // pred_check
        %p2121 = pneg %p125
      $region54: #{residual_block_forward.4} parent=51 // pred_check_branch
        %2123 = sbr.rel (%p2121) target = $region56
      $region55: #{residual_block_forward.4} parent=51 // pred_region
        %s2124 = sadd.s32 %s23, %s24
        %p2125 = scmp.lt.s32.totalorder %s2124, 1
        %s2126 = scalar_select %p2125, %s2124, 1
        %s2127 = smul.addr %s2126, 32
        %s2128 = smul.addr %s2127, 8
        %s2129 = scalar_lea.vmem %s3, %s2128
      $region56: #{residual_block_forward.4} parent=51 // pred_fallthru
        _
      // Predicated region
      $region57: #{residual_block_forward.4} parent=51 // pred_check
        %p2130 = pneg %p151
      $region58: #{residual_block_forward.4} parent=51 // pred_check_branch
        %2132 = sbr.rel (%p2130) target = $region60
      $region59: #{residual_block_forward.4} parent=51 // pred_region
        %p2133 = scmp.lt.s32.totalorder %s23, 1
        %s2134 = scalar_select %p2133, %s23, 1
        %s2135 = scalar_lea.vmem %s4, %s2134
      $region60: #{residual_block_forward.4} parent=51 // pred_fallthru
        _
      // Predicated region
      $region61: #{residual_block_forward.4} parent=51 // pred_check
        %p2136 = pneg %p177
      $region62: #{residual_block_forward.4} parent=51 // pred_check_branch
        %2138 = sbr.rel (%p2136) target = $region64
      $region63: #{residual_block_forward.4} parent=51 // pred_region
        %p2139 = scmp.lt.s32.totalorder %s23, 1
        %s2140 = scalar_select %p2139, %s23, 1
        %s2141 = scalar_lea.vmem %s5, %s2140
      $region64: #{residual_block_forward.4} parent=51 // pred_fallthru
        _
    $region52: #{residual_block_forward.4} parent=5 // pred_fallthru
      _
  $region6: #{residual_block_forward.4} parent=0 // loop_footer
    %s16 = sadd.s32 1, %s12
  $region7: #{residual_block_forward.4} parent=0 // loop_footer_branch
    %11 = sbr.rel target = $region3
  $region8: #{residual_block_forward.4} parent=0 // loop_exit
    _

// kernel: residual_block_forward.6
$region0: #{residual_block_forward.6}
  #allocation0 [shape = 'u32[]', space=smem, size = 0x4, offset = 0x4, fixed_abs, tag = 'smem constant byte address 0x4 - core index']
  #allocation1 [shape = 'u32[144,128]{1,0:T(1,128)}', space=vmem, size = 0x12000, scoped, tag = 'internal scratch']
  %s0 = inlined_call_operand.vmem [shape: f32[2,18,18,8], index: 0, kind: input, shape index: {}]
  %s1 = inlined_call_operand.vmem [shape: bf16[72,8], index: 1, kind: input, shape index: {}]
  %s2 = inlined_call_operand.vmem [shape: f32[1,8], index: 2, kind: input, shape index: {}]
  %s3 = inlined_call_operand.vmem [shape: f32[1,8], index: 3, kind: input, shape index: {}]
  %s4 = inlined_call_operand.vmem [shape: f32[1,8], index: 4, kind: input, shape index: {}]
  %s5 = inlined_call_operand.vmem [shape: f32[2,16,16,8], index: 5, kind: input, shape index: {}]
  %s6 = inlined_call_operand.vmem [shape: f32[2,16,16,8], index: 6, kind: output, shape index: {0}]
  %s7 = inlined_call_operand.vmem [shape: f32[2,1,8], index: 7, kind: output, shape index: {1}]
  %s8 = inlined_call_operand.vmem [shape: f32[2,1,8], index: 8, kind: output, shape index: {2}]
  %s9 = inlined_call_operand.vmem [shape: f32[2,1,8], index: 9, kind: output, shape index: {3}]
  %10 = xla_tuple %s6, %s7, %s8, %s9
  %s11 = sld [smem:[#allocation0]]
  $region85: #{residual_block_forward.6} parent=0
    _
  %s13 = ssub.s32 1, %s11
  %s14 = scalar_select 0, %s13, %s11
  loop: start=0, step=1, limit=4
  $region2: #{residual_block_forward.6} parent=0 // loop_pre_header
    _
  $region3: #{residual_block_forward.6} parent=0 // loop_header
    %s16 = sphi 0, %s20
    %p17 = scmp.ge.s32.totalorder %s16, 4
    %s23 = sphi 0, %s35
    %s24 = sphi 0, %s31
    %s25 = sphi 0, %s23
    %s26 = sphi 0, %s24
    %s27 = sphi 0, %s25
    %s28 = sphi 0, %s26
    %s40 = sphi 0, %s42
    %s43 = sphi 0, %s40
    %s44 = sphi 0, %s43
    %s60 = sphi 0, %s44
    %s64 = sphi 0, %s64
    %s66 = sphi 0, %s64
    %s67 = sphi 0, %s66
    %s81 = sphi 0, %s67
    %s85 = sphi 0, %s85
    %s87 = sphi 0, %s85
    %s88 = sphi 0, %s87
    %s102 = sphi 0, %s88
    %s106 = sphi 0, %s106
    %s108 = sphi 0, %s106
    %s109 = sphi 0, %s108
    %s123 = sphi 0, %s109
    %s127 = sphi 0, %s127
    %s129 = sphi 0, %s127
    %s130 = sphi 0, %s129
    %s144 = sphi 0, %s130
    %s152 = sphi 0, %s154
    %s155 = sphi 0, %s152
    %s156 = sphi 0, %s155
    %s172 = sphi 0, %s156
    %s180 = sphi 0, %s182
    %s183 = sphi 0, %s180
    %s184 = sphi 0, %s183
    %s200 = sphi 0, %s184
    %s206 = sphi 0, %s208
    %s209 = sphi 0, %s206
    %s210 = sphi 0, %s209
    %s226 = sphi 0, %s210
    %s232 = sphi 0, %s234
    %s235 = sphi 0, %s232
    %s236 = sphi 0, %s235
    %s252 = sphi 0, %s236
    %s258 = sphi 0, %s260
    %s261 = sphi 0, %s258
    %s262 = sphi 0, %s261
    %s278 = sphi 0, %s262
  $region4: #{residual_block_forward.6} parent=0 // loop_header_branch
    %19 = sbr.rel (%p17) target = $region8
  $region5: #{residual_block_forward.6} parent=0 // loop_body
    %s21 = ssub.s32 %s16, 1
    %s22 = ssub.s32 %s16, 2
    %s29 = sadd.s32 1, %s24
    %p30 = scmp.ge.s32.totalorder %s29, 1
    %s31 = scalar_select %p30, 0, %s29
    %s32 = sadd.s32 1, %s23
    %s33 = scalar_select %p30, %s32, %s23
    %p34 = scmp.ge.s32.totalorder %s33, 2
    %s35 = scalar_select %p34, 0, %s33
    %s36 = sadd.s32 %s23, %s24
    %s37 = sadd.s32 %s35, %s31
    %s38 = ssub.s32 %s36, %s37
    %p39 = scmp.eq.s32.totalorder %s38, 0
    %s41 = sadd.s32 %s40, 1
    %s42 = scalar_select %p39, %s40, %s41
    %p45 = pneg %p39
    %p46 = scmp.eq.s32.totalorder %s16, 1
    %p47 = por %p45, %p46
    %p48 = scmp.ne.s32.totalorder %s40, %s43
    %p49 = scmp.eq.s32.totalorder %s16, 0
    %p50 = por %p48, %p49
    %p51 = scmp.ne.s32.totalorder %s40, %s43
    %p52 = scmp.eq.s32.totalorder %s21, 1
    %p53 = por %p51, %p52
    %p54 = scmp.ne.s32.totalorder %s43, %s44
    %p55 = scmp.eq.s32.totalorder %s21, 0
    %p56 = por %p54, %p55
    %p57 = scmp.ne.s32.totalorder %s43, %s44
    %p58 = scmp.eq.s32.totalorder %s22, 1
    %p59 = por %p57, %p58
    %p61 = scmp.ne.s32.totalorder %s44, %s60
    %p62 = scmp.eq.s32.totalorder %s22, 0
    %p63 = por %p61, %p62
    %s65 = sadd.s32 %s64, 1
    %p68 = scmp.eq.s32.totalorder %s16, 1
    %p69 = scmp.ne.s32.totalorder %s64, %s66
    %p70 = scmp.eq.s32.totalorder %s16, 0
    %p71 = por %p69, %p70
    %p72 = scmp.ne.s32.totalorder %s64, %s66
    %p73 = scmp.eq.s32.totalorder %s21, 1
    %p74 = por %p72, %p73
    %p75 = scmp.ne.s32.totalorder %s66, %s67
    %p76 = scmp.eq.s32.totalorder %s21, 0
    %p77 = por %p75, %p76
    %p78 = scmp.ne.s32.totalorder %s66, %s67
    %p79 = scmp.eq.s32.totalorder %s22, 1
    %p80 = por %p78, %p79
    %p82 = scmp.ne.s32.totalorder %s67, %s81
    %p83 = scmp.eq.s32.totalorder %s22, 0
    %p84 = por %p82, %p83
    %s86 = sadd.s32 %s85, 1
    %p89 = scmp.eq.s32.totalorder %s16, 1
    %p90 = scmp.ne.s32.totalorder %s85, %s87
    %p91 = scmp.eq.s32.totalorder %s16, 0
    %p92 = por %p90, %p91
    %p93 = scmp.ne.s32.totalorder %s85, %s87
    %p94 = scmp.eq.s32.totalorder %s21, 1
    %p95 = por %p93, %p94
    %p96 = scmp.ne.s32.totalorder %s87, %s88
    %p97 = scmp.eq.s32.totalorder %s21, 0
    %p98 = por %p96, %p97
    %p99 = scmp.ne.s32.totalorder %s87, %s88
    %p100 = scmp.eq.s32.totalorder %s22, 1
    %p101 = por %p99, %p100
    %p103 = scmp.ne.s32.totalorder %s88, %s102
    %p104 = scmp.eq.s32.totalorder %s22, 0
    %p105 = por %p103, %p104
    %s107 = sadd.s32 %s106, 1
    %p110 = scmp.eq.s32.totalorder %s16, 1
    %p111 = scmp.ne.s32.totalorder %s106, %s108
    %p112 = scmp.eq.s32.totalorder %s16, 0
    %p113 = por %p111, %p112
    %p114 = scmp.ne.s32.totalorder %s106, %s108
    %p115 = scmp.eq.s32.totalorder %s21, 1
    %p116 = por %p114, %p115
    %p117 = scmp.ne.s32.totalorder %s108, %s109
    %p118 = scmp.eq.s32.totalorder %s21, 0
    %p119 = por %p117, %p118
    %p120 = scmp.ne.s32.totalorder %s108, %s109
    %p121 = scmp.eq.s32.totalorder %s22, 1
    %p122 = por %p120, %p121
    %p124 = scmp.ne.s32.totalorder %s109, %s123
    %p125 = scmp.eq.s32.totalorder %s22, 0
    %p126 = por %p124, %p125
    %s128 = sadd.s32 %s127, 1
    %p131 = scmp.eq.s32.totalorder %s16, 1
    %p132 = scmp.ne.s32.totalorder %s127, %s129
    %p133 = scmp.eq.s32.totalorder %s16, 0
    %p134 = por %p132, %p133
    %p135 = scmp.ne.s32.totalorder %s127, %s129
    %p136 = scmp.eq.s32.totalorder %s21, 1
    %p137 = por %p135, %p136
    %p138 = scmp.ne.s32.totalorder %s129, %s130
    %p139 = scmp.eq.s32.totalorder %s21, 0
    %p140 = por %p138, %p139
    %p141 = scmp.ne.s32.totalorder %s129, %s130
    %p142 = scmp.eq.s32.totalorder %s22, 1
    %p143 = por %p141, %p142
    %p145 = scmp.ne.s32.totalorder %s130, %s144
    %p146 = scmp.eq.s32.totalorder %s22, 0
    %p147 = por %p145, %p146
    %s148 = sadd.s32 %s23, %s24
    %s149 = sadd.s32 %s35, %s31
    %s150 = ssub.s32 %s148, %s149
    %p151 = scmp.eq.s32.totalorder %s150, 0
    %s153 = sadd.s32 %s152, 1
    %s154 = scalar_select %p151, %s152, %s153
    %p157 = pneg %p151
    %p158 = scmp.eq.s32.totalorder %s16, 1
    %p159 = por %p157, %p158
    %p160 = scmp.ne.s32.totalorder %s152, %s155
    %p161 = scmp.eq.s32.totalorder %s16, 0
    %p162 = por %p160, %p161
    %p163 = scmp.ne.s32.totalorder %s152, %s155
    %p164 = scmp.eq.s32.totalorder %s21, 1
    %p165 = por %p163, %p164
    %p166 = scmp.ne.s32.totalorder %s155, %s156
    %p167 = scmp.eq.s32.totalorder %s21, 0
    %p168 = por %p166, %p167
    %p169 = scmp.ne.s32.totalorder %s155, %s156
    %p170 = scmp.eq.s32.totalorder %s22, 1
    %p171 = por %p169, %p170
    %p173 = scmp.ne.s32.totalorder %s156, %s172
    %p174 = scmp.eq.s32.totalorder %s22, 0
    %p175 = por %p173, %p174
    %s176 = sadd.s32 %s23, %s24
    %s177 = sadd.s32 %s35, %s31
    %s178 = ssub.s32 %s176, %s177
    %p179 = scmp.eq.s32.totalorder %s178, 0
    %s181 = sadd.s32 %s180, 1
    %s182 = scalar_select %p179, %s180, %s181
    %p185 = pneg %p179
    %p186 = scmp.eq.s32.totalorder %s16, 1
    %p187 = por %p185, %p186
    %p188 = scmp.ne.s32.totalorder %s180, %s183
    %p189 = scmp.eq.s32.totalorder %s16, 0
    %p190 = por %p188, %p189
    %p191 = scmp.ne.s32.totalorder %s180, %s183
    %p192 = scmp.eq.s32.totalorder %s21, 1
    %p193 = por %p191, %p192
    %p194 = scmp.ne.s32.totalorder %s183, %s184
    %p195 = scmp.eq.s32.totalorder %s21, 0
    %p196 = por %p194, %p195
    %p197 = scmp.ne.s32.totalorder %s183, %s184
    %p198 = scmp.eq.s32.totalorder %s22, 1
    %p199 = por %p197, %p198
    %p201 = scmp.ne.s32.totalorder %s184, %s200
    %p202 = scmp.eq.s32.totalorder %s22, 0
    %p203 = por %p201, %p202
    %s204 = ssub.s32 %s23, %s35
    %p205 = scmp.eq.s32.totalorder %s204, 0
    %s207 = sadd.s32 %s206, 1
    %s208 = scalar_select %p205, %s206, %s207
    %p211 = pneg %p205
    %p212 = scmp.eq.s32.totalorder %s16, 1
    %p213 = por %p211, %p212
    %p214 = scmp.ne.s32.totalorder %s206, %s209
    %p215 = scmp.eq.s32.totalorder %s16, 0
    %p216 = por %p214, %p215
    %p217 = scmp.ne.s32.totalorder %s206, %s209
    %p218 = scmp.eq.s32.totalorder %s21, 1
    %p219 = por %p217, %p218
    %p220 = scmp.ne.s32.totalorder %s209, %s210
    %p221 = scmp.eq.s32.totalorder %s21, 0
    %p222 = por %p220, %p221
    %p223 = scmp.ne.s32.totalorder %s209, %s210
    %p224 = scmp.eq.s32.totalorder %s22, 1
    %p225 = por %p223, %p224
    %p227 = scmp.ne.s32.totalorder %s210, %s226
    %p228 = scmp.eq.s32.totalorder %s22, 0
    %p229 = por %p227, %p228
    %s230 = ssub.s32 %s23, %s35
    %p231 = scmp.eq.s32.totalorder %s230, 0
    %s233 = sadd.s32 %s232, 1
    %s234 = scalar_select %p231, %s232, %s233
    %p237 = pneg %p231
    %p238 = scmp.eq.s32.totalorder %s16, 1
    %p239 = por %p237, %p238
    %p240 = scmp.ne.s32.totalorder %s232, %s235
    %p241 = scmp.eq.s32.totalorder %s16, 0
    %p242 = por %p240, %p241
    %p243 = scmp.ne.s32.totalorder %s232, %s235
    %p244 = scmp.eq.s32.totalorder %s21, 1
    %p245 = por %p243, %p244
    %p246 = scmp.ne.s32.totalorder %s235, %s236
    %p247 = scmp.eq.s32.totalorder %s21, 0
    %p248 = por %p246, %p247
    %p249 = scmp.ne.s32.totalorder %s235, %s236
    %p250 = scmp.eq.s32.totalorder %s22, 1
    %p251 = por %p249, %p250
    %p253 = scmp.ne.s32.totalorder %s236, %s252
    %p254 = scmp.eq.s32.totalorder %s22, 0
    %p255 = por %p253, %p254
    %s256 = ssub.s32 %s23, %s35
    %p257 = scmp.eq.s32.totalorder %s256, 0
    %s259 = sadd.s32 %s258, 1
    %s260 = scalar_select %p257, %s258, %s259
    %p263 = pneg %p257
    %p264 = scmp.eq.s32.totalorder %s16, 1
    %p265 = por %p263, %p264
    %p266 = scmp.ne.s32.totalorder %s258, %s261
    %p267 = scmp.eq.s32.totalorder %s16, 0
    %p268 = por %p266, %p267
    %p269 = scmp.ne.s32.totalorder %s258, %s261
    %p270 = scmp.eq.s32.totalorder %s21, 1
    %p271 = por %p269, %p270
    %p272 = scmp.ne.s32.totalorder %s261, %s262
    %p273 = scmp.eq.s32.totalorder %s21, 0
    %p274 = por %p272, %p273
    %p275 = scmp.ne.s32.totalorder %s261, %s262
    %p276 = scmp.eq.s32.totalorder %s22, 1
    %p277 = por %p275, %p276
    %p279 = scmp.ne.s32.totalorder %s262, %s278
    %p280 = scmp.eq.s32.totalorder %s22, 0
    %p281 = por %p279, %p280
    %p282 = scmp.le.s32.totalorder 1, %s16
    %p283 = scmp.lt.s32.totalorder %s16, 3
    %p284 = pnand %p282, %p283
    %p285 = pneg %p284
    // Predicated region
    $region9: #{residual_block_forward.6} parent=5 // pred_check
      _
    $region10: #{residual_block_forward.6} parent=5 // pred_check_branch
      %287 = sbr.rel (%p284) target = $region12
    $region11: #{residual_block_forward.6} parent=5 // pred_region
      %s288 = ssub.s32 %s16, 1
      // Predicated region
      $region13: #{residual_block_forward.6} parent=11 // pred_check
        %p289 = pneg %p77
      $region14: #{residual_block_forward.6} parent=11 // pred_check_branch
        %291 = sbr.rel (%p289) target = $region16
      $region15: #{residual_block_forward.6} parent=11 // pred_region
        _
      $region16: #{residual_block_forward.6} parent=11 // pred_fallthru
        _
      // Predicated region
      $region17: #{residual_block_forward.6} parent=11 // pred_check
        %p292 = pneg %p98
      $region18: #{residual_block_forward.6} parent=11 // pred_check_branch
        %294 = sbr.rel (%p292) target = $region20
      $region19: #{residual_block_forward.6} parent=11 // pred_region
        _
      $region20: #{residual_block_forward.6} parent=11 // pred_fallthru
        _
      // Predicated region
      $region21: #{residual_block_forward.6} parent=11 // pred_check
        %p295 = pneg %p119
      $region22: #{residual_block_forward.6} parent=11 // pred_check_branch
        %297 = sbr.rel (%p295) target = $region24
      $region23: #{residual_block_forward.6} parent=11 // pred_region
        _
      $region24: #{residual_block_forward.6} parent=11 // pred_fallthru
        _
      // Predicated region
      $region25: #{residual_block_forward.6} parent=11 // pred_check
        %p298 = pneg %p140
      $region26: #{residual_block_forward.6} parent=11 // pred_check_branch
        %300 = sbr.rel (%p298) target = $region28
      $region27: #{residual_block_forward.6} parent=11 // pred_region
        _
      $region28: #{residual_block_forward.6} parent=11 // pred_fallthru
        _
    $region12: #{residual_block_forward.6} parent=5 // pred_fallthru
      _
    %p301 = scmp.lt.s32.totalorder %s16, 2
    // Predicated region
    $region29: #{residual_block_forward.6} parent=5 // pred_check
      %p302 = pneg %p301
    $region30: #{residual_block_forward.6} parent=5 // pred_check_branch
      %304 = sbr.rel (%p302) target = $region32
    $region31: #{residual_block_forward.6} parent=5 // pred_region
      // Predicated region
      $region33: #{residual_block_forward.6} parent=31 // pred_check
        %p305 = pneg %p50
      $region34: #{residual_block_forward.6} parent=31 // pred_check_branch
        %307 = sbr.rel (%p305) target = $region36
      $region35: #{residual_block_forward.6} parent=31 // pred_region
        %s308 = sadd.s32 %s23, %s24
        %p309 = scmp.lt.s32.totalorder %s308, 1
        %s310 = scalar_select %p309, %s308, 1
        %s311 = smul.addr %s310, 54
        %s312 = smul.addr %s311, 8
        %s313 = scalar_lea.vmem %s0, %s312
        %s314 = sadd.s32 %s23, %s24
      $region36: #{residual_block_forward.6} parent=31 // pred_fallthru
        _
      // Predicated region
      $region37: #{residual_block_forward.6} parent=31 // pred_check
        %p315 = pneg %p162
      $region38: #{residual_block_forward.6} parent=31 // pred_check_branch
        %317 = sbr.rel (%p315) target = $region40
      $region39: #{residual_block_forward.6} parent=31 // pred_region
        %s318 = sadd.s32 %s23, %s24
        %p319 = scmp.lt.s32.totalorder %s318, 1
        %s320 = scalar_select %p319, %s318, 1
        %s321 = smul.addr %s320, 32
        %s322 = smul.addr %s321, 8
        %s323 = scalar_lea.vmem %s5, %s322
        %s324 = sadd.s32 %s23, %s24
      $region40: #{residual_block_forward.6} parent=31 // pred_fallthru
        _
    $region32: #{residual_block_forward.6} parent=5 // pred_fallthru
      _
    %p325 = scmp.le.s32.totalorder 1, %s16
    %p326 = scmp.lt.s32.totalorder %s16, 3
    %p327 = pnand %p325, %p326
    %p328 = pneg %p327
    // Predicated region
    $region41: #{residual_block_forward.6} parent=5 // pred_check
      _
    $region42: #{residual_block_forward.6} parent=5 // pred_check_branch
      %330 = sbr.rel (%p327) target = $region44
    $region43: #{residual_block_forward.6} parent=5 // pred_region
      %s331 = ssub.s32 %s16, 1
      %s332 = sadd.s32 %s25, %s26
      %p333 = scmp.lt.s32.totalorder %s332, 1
      %s334 = scalar_select %p333, %s332, 1
      %s335 = smul.addr %s334, 54
      %s336 = smul.addr %s335, 8
      %s337 = scalar_lea.vmem %s0, %s336
      %p338 = pneg %p56
      %p339 = pneg %p53
      %p340 = pneg %p77
      %p341 = pneg %p74
      %p342 = pneg %p98
      %p343 = pneg %p95
      %p344 = pneg %p119
      %p345 = pneg %p116
      %p346 = pneg %p140
      %p347 = pneg %p137
      %s348 = sadd.s32 %s25, %s26
      %p349 = scmp.lt.s32.totalorder %s348, 1
      %s350 = scalar_select %p349, %s348, 1
      %s351 = smul.addr %s350, 32
      %s352 = smul.addr %s351, 8
      %s353 = scalar_lea.vmem %s5, %s352
      %p354 = pneg %p168
      %p355 = pneg %p165
      %p356 = pneg %p196
      %p357 = pneg %p193
      %s358 = sadd.s32 %s25, %s26
      %p359 = scmp.lt.s32.totalorder %s358, 1
      %s360 = scalar_select %p359, %s358, 1
      %s361 = smul.addr %s360, 32
      %s362 = smul.addr %s361, 8
      %s363 = scalar_lea.vmem %s6, %s362
      %p364 = pneg %p222
      %p365 = pneg %p219
      %p366 = scmp.lt.s32.totalorder %s25, 1
      %s367 = scalar_select %p366, %s25, 1
      %s368 = scalar_lea.vmem %s7, %s367
      %p369 = pneg %p248
      %p370 = pneg %p245
      %p371 = scmp.lt.s32.totalorder %s25, 1
      %s372 = scalar_select %p371, %s25, 1
      %s373 = scalar_lea.vmem %s8, %s372
      %p374 = pneg %p274
      %p375 = pneg %p271
      %p376 = scmp.lt.s32.totalorder %s25, 1
      %s377 = scalar_select %p376, %s25, 1
      %s378 = scalar_lea.vmem %s9, %s377
      %s379 = sadd.s32 %s25, %s26
      %p380 = scmp.lt.s32.totalorder %s379, 1
      %s381 = scalar_select %p380, %s379, 1
      %s382 = smul.addr %s381, 54
      %s383 = smul.addr %s382, 8
      %s384 = scalar_lea.vmem %s0, %s383
      %s385 = sadd.s32 %s25, %s26
      %s386 = sadd.s32 %s25, %s26
      %p387 = scmp.lt.s32.totalorder %s386, 1
      %s388 = scalar_select %p387, %s386, 1
      %s389 = smul.addr %s388, 32
      %s390 = smul.addr %s389, 8
      %s391 = scalar_lea.vmem %s5, %s390
      %s392 = sadd.s32 %s25, %s26
      %s393 = sadd.s32 %s25, %s26
      %p394 = scmp.lt.s32.totalorder %s393, 1
      %s395 = scalar_select %p394, %s393, 1
      %s396 = smul.addr %s395, 32
      %s397 = smul.addr %s396, 8
      %s398 = scalar_lea.vmem %s6, %s397
      %s399 = sadd.s32 %s25, %s26
      %p400 = scmp.lt.s32.totalorder %s25, 1
      %s401 = scalar_select %p400, %s25, 1
      %s402 = scalar_lea.vmem %s7, %s401
      %p403 = scmp.lt.s32.totalorder %s25, 1
      %s404 = scalar_select %p403, %s25, 1
      %s405 = scalar_lea.vmem %s8, %s404
      %p406 = scmp.lt.s32.totalorder %s25, 1
      %s407 = scalar_select %p406, %s25, 1
      %s408 = scalar_lea.vmem %s9, %s407
      %p410 = scmp.eq.s32.totalorder %s26, 0
      // Predicated region
      $region45: #{residual_block_forward.6} parent=43 // pred_check
        %p411 = pneg %p410
      $region46: #{residual_block_forward.6} parent=43 // pred_check_branch
        %413 = sbr.rel (%p411) target = $region48
      $region47: #{residual_block_forward.6} parent=43 // pred_region
        %vm414 = vcmask 57344
        %415 = vst.msk [vmem:[%s402] sm:$0x1] %vm414, 0.0
        %416 = vst.msk [vmem:[%s405] sm:$0x1] %vm414, 0.0
        %417 = vst.msk [vmem:[%s408] sm:$0x1] %vm414, 0.0
      $region48: #{residual_block_forward.6} parent=43 // pred_fallthru
        _
      %v418 = vld [vmem:[%s384] sm:$0xff]
      %v419 = vld [vmem:[%s384 + $0x8] sm:$0xff]
      %v420 = vld [vmem:[%s384 + $0x10] sm:$0x3]
      %v421 = vld [vmem:[%s384 + $0x18] sm:$0xff]
      %v422 = vld [vmem:[%s384 + $0x20] sm:$0xff]
      %v423 = vld [vmem:[%s384 + $0x28] sm:$0x3]
      %v424 = vld [vmem:[%s384 + $0x30] sm:$0xff]
      %v425 = vld [vmem:[%s384 + $0x38] sm:$0xff]
      %v426 = vld [vmem:[%s384 + $0x40] sm:$0x3]
      %v427 = vld [vmem:[%s384 + $0x48] sm:$0xff]
      %v428 = vld [vmem:[%s384 + $0x50] sm:$0xff]
      %v429 = vld [vmem:[%s384 + $0x58] sm:$0x3]
      %v430 = vld [vmem:[%s384 + $0x60] sm:$0xff]
      %v431 = vld [vmem:[%s384 + $0x68] sm:$0xff]
      %v432 = vld [vmem:[%s384 + $0x70] sm:$0x3]
      %v433 = vld [vmem:[%s384 + $0x78] sm:$0xff]
      %v434 = vld [vmem:[%s384 + $0x80] sm:$0xff]
      %v435 = vld [vmem:[%s384 + $0x88] sm:$0x3]
      %v436 = vld [vmem:[%s384 + $0x90] sm:$0xff]
      %v437 = vld [vmem:[%s384 + $0x98] sm:$0xff]
      %v438 = vld [vmem:[%s384 + $0xa0] sm:$0x3]
      %v439 = vld [vmem:[%s384 + $0xa8] sm:$0xff]
      %v440 = vld [vmem:[%s384 + $0xb0] sm:$0xff]
      %v441 = vld [vmem:[%s384 + $0xb8] sm:$0x3]
      %v442 = vld [vmem:[%s384 + $0xc0] sm:$0xff]
      %v443 = vld [vmem:[%s384 + $0xc8] sm:$0xff]
      %v444 = vld [vmem:[%s384 + $0xd0] sm:$0x3]
      %v445 = vld [vmem:[%s384 + $0xd8] sm:$0xff]
      %v446 = vld [vmem:[%s384 + $0xe0] sm:$0xff]
      %v447 = vld [vmem:[%s384 + $0xe8] sm:$0x3]
      %v448 = vld [vmem:[%s384 + $0xf0] sm:$0xff]
      %v449 = vld [vmem:[%s384 + $0xf8] sm:$0xff]
      %v450 = vld [vmem:[%s384 + $0x100] sm:$0x3]
      %v451 = vld [vmem:[%s384 + $0x108] sm:$0xff]
      %v452 = vld [vmem:[%s384 + $0x110] sm:$0xff]
      %v453 = vld [vmem:[%s384 + $0x118] sm:$0x3]
      %v454 = vld [vmem:[%s384 + $0x120] sm:$0xff]
      %v455 = vld [vmem:[%s384 + $0x128] sm:$0xff]
      %v456 = vld [vmem:[%s384 + $0x130] sm:$0x3]
      %v457 = vld [vmem:[%s384 + $0x138] sm:$0xff]
      %v458 = vld [vmem:[%s384 + $0x140] sm:$0xff]
      %v459 = vld [vmem:[%s384 + $0x148] sm:$0x3]
      %v460 = vld [vmem:[%s384 + $0x150] sm:$0xff]
      %v461 = vld [vmem:[%s384 + $0x158] sm:$0xff]
      %v462 = vld [vmem:[%s384 + $0x160] sm:$0x3]
      %v463 = vld [vmem:[%s384 + $0x168] sm:$0xff]
      %v464 = vld [vmem:[%s384 + $0x170] sm:$0xff]
      %v465 = vld [vmem:[%s384 + $0x178] sm:$0x3]
      %v466 = vld [vmem:[%s384 + $0x180] sm:$0xff]
      %v467 = vld [vmem:[%s384 + $0x188] sm:$0xff]
      %v468 = vld [vmem:[%s384 + $0x190] sm:$0x3]
      %v469 = vld [vmem:[%s384 + $0x198] sm:$0xff]
      %v470 = vld [vmem:[%s384 + $0x1a0] sm:$0xff]
      %v471 = vld [vmem:[%s384 + $0x1a8] sm:$0x3]
      %v472 = vld [vmem:[%s3] sm:$0x1]
      %v474 = vlaneseq
      %v475 = vshrl.u32 %v474, 7
      %v476 = vsub.s32 0, %v475
      %v477 = vrot.slane %v472, %v476
      %v479 = vmul.f32 %v418, %v477
      %v480 = vmul.f32 %v419, %v477
      %v481 = vmul.f32 %v420, %v477
      %v482 = vmul.f32 %v421, %v477
      %v483 = vmul.f32 %v422, %v477
      %v484 = vmul.f32 %v423, %v477
      %v485 = vmul.f32 %v424, %v477
      %v486 = vmul.f32 %v425, %v477
      %v487 = vmul.f32 %v426, %v477
      %v488 = vmul.f32 %v427, %v477
      %v489 = vmul.f32 %v428, %v477
      %v490 = vmul.f32 %v429, %v477
      %v491 = vmul.f32 %v430, %v477
      %v492 = vmul.f32 %v431, %v477
      %v493 = vmul.f32 %v432, %v477
      %v494 = vmul.f32 %v433, %v477
      %v495 = vmul.f32 %v434, %v477
      %v496 = vmul.f32 %v435, %v477
      %v497 = vmul.f32 %v436, %v477
      %v498 = vmul.f32 %v437, %v477
      %v499 = vmul.f32 %v438, %v477
      %v500 = vmul.f32 %v439, %v477
      %v501 = vmul.f32 %v440, %v477
      %v502 = vmul.f32 %v441, %v477
      %v503 = vmul.f32 %v442, %v477
      %v504 = vmul.f32 %v443, %v477
      %v505 = vmul.f32 %v444, %v477
      %v506 = vmul.f32 %v445, %v477
      %v507 = vmul.f32 %v446, %v477
      %v508 = vmul.f32 %v447, %v477
      %v509 = vmul.f32 %v448, %v477
      %v510 = vmul.f32 %v449, %v477
      %v511 = vmul.f32 %v450, %v477
      %v512 = vmul.f32 %v451, %v477
      %v513 = vmul.f32 %v452, %v477
      %v514 = vmul.f32 %v453, %v477
      %v515 = vmul.f32 %v454, %v477
      %v516 = vmul.f32 %v455, %v477
      %v517 = vmul.f32 %v456, %v477
      %v518 = vmul.f32 %v457, %v477
      %v519 = vmul.f32 %v458, %v477
      %v520 = vmul.f32 %v459, %v477
      %v521 = vmul.f32 %v460, %v477
      %v522 = vmul.f32 %v461, %v477
      %v523 = vmul.f32 %v462, %v477
      %v524 = vmul.f32 %v463, %v477
      %v525 = vmul.f32 %v464, %v477
      %v526 = vmul.f32 %v465, %v477
      %v527 = vmul.f32 %v466, %v477
      %v528 = vmul.f32 %v467, %v477
      %v529 = vmul.f32 %v468, %v477
      %v530 = vmul.f32 %v469, %v477
      %v531 = vmul.f32 %v470, %v477
      %v532 = vmul.f32 %v471, %v477
      %v533 = vld [vmem:[%s4] sm:$0x1]
      %v535 = vlaneseq
      %v536 = vshrl.u32 %v535, 7
      %v537 = vsub.s32 0, %v536
      %v538 = vrot.slane %v533, %v537
      %v540 = vadd.f32 %v479, %v538
      %v541 = vadd.f32 %v480, %v538
      %v542 = vadd.f32 %v481, %v538
      %v543 = vadd.f32 %v482, %v538
      %v544 = vadd.f32 %v483, %v538
      %v545 = vadd.f32 %v484, %v538
      %v546 = vadd.f32 %v485, %v538
      %v547 = vadd.f32 %v486, %v538
      %v548 = vadd.f32 %v487, %v538
      %v549 = vadd.f32 %v488, %v538
      %v550 = vadd.f32 %v489, %v538
      %v551 = vadd.f32 %v490, %v538
      %v552 = vadd.f32 %v491, %v538
      %v553 = vadd.f32 %v492, %v538
      %v554 = vadd.f32 %v493, %v538
      %v555 = vadd.f32 %v494, %v538
      %v556 = vadd.f32 %v495, %v538
      %v557 = vadd.f32 %v496, %v538
      %v558 = vadd.f32 %v497, %v538
      %v559 = vadd.f32 %v498, %v538
      %v560 = vadd.f32 %v499, %v538
      %v561 = vadd.f32 %v500, %v538
      %v562 = vadd.f32 %v501, %v538
      %v563 = vadd.f32 %v502, %v538
      %v564 = vadd.f32 %v503, %v538
      %v565 = vadd.f32 %v504, %v538
      %v566 = vadd.f32 %v505, %v538
      %v567 = vadd.f32 %v506, %v538
      %v568 = vadd.f32 %v507, %v538
      %v569 = vadd.f32 %v508, %v538
      %v570 = vadd.f32 %v509, %v538
      %v571 = vadd.f32 %v510, %v538
      %v572 = vadd.f32 %v511, %v538
      %v573 = vadd.f32 %v512, %v538
      %v574 = vadd.f32 %v513, %v538
      %v575 = vadd.f32 %v514, %v538
      %v576 = vadd.f32 %v515, %v538
      %v577 = vadd.f32 %v516, %v538
      %v578 = vadd.f32 %v517, %v538
      %v579 = vadd.f32 %v518, %v538
      %v580 = vadd.f32 %v519, %v538
      %v581 = vadd.f32 %v520, %v538
      %v582 = vadd.f32 %v521, %v538
      %v583 = vadd.f32 %v522, %v538
      %v584 = vadd.f32 %v523, %v538
      %v585 = vadd.f32 %v524, %v538
      %v586 = vadd.f32 %v525, %v538
      %v587 = vadd.f32 %v526, %v538
      %v588 = vadd.f32 %v527, %v538
      %v589 = vadd.f32 %v528, %v538
      %v590 = vadd.f32 %v529, %v538
      %v591 = vadd.f32 %v530, %v538
      %v592 = vadd.f32 %v531, %v538
      %v593 = vadd.f32 %v532, %v538
      %v594 = vmax.f32 %v540, 0.0
      %v595 = vmax.f32 %v541, 0.0
      %v596 = vmax.f32 %v542, 0.0
      %v597 = vmax.f32 %v543, 0.0
      %v598 = vmax.f32 %v544, 0.0
      %v599 = vmax.f32 %v545, 0.0
      %v600 = vmax.f32 %v546, 0.0
      %v601 = vmax.f32 %v547, 0.0
      %v602 = vmax.f32 %v548, 0.0
      %v603 = vmax.f32 %v549, 0.0
      %v604 = vmax.f32 %v550, 0.0
      %v605 = vmax.f32 %v551, 0.0
      %v606 = vmax.f32 %v552, 0.0
      %v607 = vmax.f32 %v553, 0.0
      %v608 = vmax.f32 %v554, 0.0
      %v609 = vmax.f32 %v555, 0.0
      %v610 = vmax.f32 %v556, 0.0
      %v611 = vmax.f32 %v557, 0.0
      %v612 = vmax.f32 %v558, 0.0
      %v613 = vmax.f32 %v559, 0.0
      %v614 = vmax.f32 %v560, 0.0
      %v615 = vmax.f32 %v561, 0.0
      %v616 = vmax.f32 %v562, 0.0
      %v617 = vmax.f32 %v563, 0.0
      %v618 = vmax.f32 %v564, 0.0
      %v619 = vmax.f32 %v565, 0.0
      %v620 = vmax.f32 %v566, 0.0
      %v621 = vmax.f32 %v567, 0.0
      %v622 = vmax.f32 %v568, 0.0
      %v623 = vmax.f32 %v569, 0.0
      %v624 = vmax.f32 %v570, 0.0
      %v625 = vmax.f32 %v571, 0.0
      %v626 = vmax.f32 %v572, 0.0
      %v627 = vmax.f32 %v573, 0.0
      %v628 = vmax.f32 %v574, 0.0
      %v629 = vmax.f32 %v575, 0.0
      %v630 = vmax.f32 %v576, 0.0
      %v631 = vmax.f32 %v577, 0.0
      %v632 = vmax.f32 %v578, 0.0
      %v633 = vmax.f32 %v579, 0.0
      %v634 = vmax.f32 %v580, 0.0
      %v635 = vmax.f32 %v581, 0.0
      %v636 = vmax.f32 %v582, 0.0
      %v637 = vmax.f32 %v583, 0.0
      %v638 = vmax.f32 %v584, 0.0
      %v639 = vmax.f32 %v585, 0.0
      %v640 = vmax.f32 %v586, 0.0
      %v641 = vmax.f32 %v587, 0.0
      %v642 = vmax.f32 %v588, 0.0
      %v643 = vmax.f32 %v589, 0.0
      %v644 = vmax.f32 %v590, 0.0
      %v645 = vmax.f32 %v591, 0.0
      %v646 = vmax.f32 %v592, 0.0
      %v647 = vmax.f32 %v593, 0.0
      %v648 = vlaneseq
      %v649 = vshrl.u32 %v648, 7
      %v650 = vadd.s32 %v649, 8
      %v651 = vadd.s32 %v649, 16
      %vm652 = vcmp.ge.s32.totalorder %v649, 1
      %vm653 = vcmp.ge.s32.totalorder %v650, 1
      %vm654 = vcmp.ge.s32.totalorder %v651, 1
      %vm655 = vmand 0, %vm652
      %vm656 = vmand 0, %vm653
      %vm657 = vmand 0, %vm654
      %vm658 = vmand 1, %vm652
      %vm659 = vmand 1, %vm653
      %vm660 = vmand 1, %vm654
      %vm661 = vcmp.lt.s32.totalorder %v649, 17
      %vm662 = vcmp.lt.s32.totalorder %v650, 17
      %vm663 = vcmp.lt.s32.totalorder %v651, 17
      %vm664 = vmand %vm655, %vm661
      %vm665 = vmand %vm656, %vm662
      %vm666 = vmand %vm657, %vm663
      %vm667 = vmand %vm658, %vm661
      %vm668 = vmand %vm659, %vm662
      %vm669 = vmand %vm660, %vm663
      %v670 = vsel %vm664, 1, 0
      %v671 = vsel %vm665, 1, 0
      %v672 = vsel %vm666, 1, 0
      %v673 = vsel %vm667, 1, 0
      %v674 = vsel %vm668, 1, 0
      %v675 = vsel %vm669, 1, 0
      %vm676 = vcmp.eq.s32.totalorder %v670, 1
      %vm677 = vcmp.eq.s32.totalorder %v671, 1
      %vm678 = vcmp.eq.s32.totalorder %v672, 1
      %vm679 = vcmp.eq.s32.totalorder %v673, 1
      %vm680 = vcmp.eq.s32.totalorder %v674, 1
      %vm681 = vcmp.eq.s32.totalorder %v675, 1
      %v682 = vsel %vm676, %v594, 0.0
      %v683 = vsel %vm677, %v595, 0.0
      %v684 = vsel %vm678, %v596, 0.0
      %v685 = vsel %vm679, %v597, 0.0
      %v686 = vsel %vm680, %v598, 0.0
      %v687 = vsel %vm681, %v599, 0.0
      %v688 = vsel %vm679, %v600, 0.0
      %v689 = vsel %vm680, %v601, 0.0
      %v690 = vsel %vm681, %v602, 0.0
      %v691 = vsel %vm679, %v603, 0.0
      %v692 = vsel %vm680, %v604, 0.0
      %v693 = vsel %vm681, %v605, 0.0
      %v694 = vsel %vm679, %v606, 0.0
      %v695 = vsel %vm680, %v607, 0.0
      %v696 = vsel %vm681, %v608, 0.0
      %v697 = vsel %vm679, %v609, 0.0
      %v698 = vsel %vm680, %v610, 0.0
      %v699 = vsel %vm681, %v611, 0.0
      %v700 = vsel %vm679, %v612, 0.0
      %v701 = vsel %vm680, %v613, 0.0
      %v702 = vsel %vm681, %v614, 0.0
      %v703 = vsel %vm679, %v615, 0.0
      %v704 = vsel %vm680, %v616, 0.0
      %v705 = vsel %vm681, %v617, 0.0
      %v706 = vsel %vm679, %v618, 0.0
      %v707 = vsel %vm680, %v619, 0.0
      %v708 = vsel %vm681, %v620, 0.0
      %v709 = vsel %vm679, %v621, 0.0
      %v710 = vsel %vm680, %v622, 0.0
      %v711 = vsel %vm681, %v623, 0.0
      %v712 = vsel %vm679, %v624, 0.0
      %v713 = vsel %vm680, %v625, 0.0
      %v714 = vsel %vm681, %v626, 0.0
      %v715 = vsel %vm679, %v627, 0.0
      %v716 = vsel %vm680, %v628, 0.0
      %v717 = vsel %vm681, %v629, 0.0
      %v718 = vsel %vm679, %v630, 0.0
      %v719 = vsel %vm680, %v631, 0.0
      %v720 = vsel %vm681, %v632, 0.0
      %v721 = vsel %vm679, %v633, 0.0
      %v722 = vsel %vm680, %v634, 0.0
      %v723 = vsel %vm681, %v635, 0.0
      %v724 = vsel %vm679, %v636, 0.0
      %v725 = vsel %vm680, %v637, 0.0
      %v726 = vsel %vm681, %v638, 0.0
      %v727 = vsel %vm679, %v639, 0.0
      %v728 = vsel %vm680, %v640, 0.0
      %v729 = vsel %vm681, %v641, 0.0
      %v730 = vsel %vm679, %v642, 0.0
      %v731 = vsel %vm680, %v643, 0.0
      %v732 = vsel %vm681, %v644, 0.0
      %v733 = vsel %vm676, %v645, 0.0
      %v734 = vsel %vm677, %v646, 0.0
      %v735 = vsel %vm678, %v647, 0.0
      %vm784 = vcmask 1046528
      %v785 = vrot.slane %v682, 1
      %v786 = vrot.slane %v683, 1
      %v787 = vsel %vm784, %v785, %v786
      %v788 = vrot.slane %v684, 1
      %v789 = vsel %vm784, %v786, %v788
      %v790 = vrot.slane %v685, 1
      %v791 = vrot.slane %v686, 1
      %v792 = vsel %vm784, %v790, %v791
      %v793 = vrot.slane %v687, 1
      %v794 = vsel %vm784, %v791, %v793
      %v795 = vrot.slane %v688, 1
      %v796 = vrot.slane %v689, 1
      %v797 = vsel %vm784, %v795, %v796
      %v798 = vrot.slane %v690, 1
      %v799 = vsel %vm784, %v796, %v798
      %v800 = vrot.slane %v691, 1
      %v801 = vrot.slane %v692, 1
      %v802 = vsel %vm784, %v800, %v801
      %v803 = vrot.slane %v693, 1
      %v804 = vsel %vm784, %v801, %v803
      %v805 = vrot.slane %v694, 1
      %v806 = vrot.slane %v695, 1
      %v807 = vsel %vm784, %v805, %v806
      %v808 = vrot.slane %v696, 1
      %v809 = vsel %vm784, %v806, %v808
      %v810 = vrot.slane %v697, 1
      %v811 = vrot.slane %v698, 1
      %v812 = vsel %vm784, %v810, %v811
      %v813 = vrot.slane %v699, 1
      %v814 = vsel %vm784, %v811, %v813
      %v815 = vrot.slane %v700, 1
      %v816 = vrot.slane %v701, 1
      %v817 = vsel %vm784, %v815, %v816
      %v818 = vrot.slane %v702, 1
      %v819 = vsel %vm784, %v816, %v818
      %v820 = vrot.slane %v703, 1
      %v821 = vrot.slane %v704, 1
      %v822 = vsel %vm784, %v820, %v821
      %v823 = vrot.slane %v705, 1
      %v824 = vsel %vm784, %v821, %v823
      %v825 = vrot.slane %v706, 1
      %v826 = vrot.slane %v707, 1
      %v827 = vsel %vm784, %v825, %v826
      %v828 = vrot.slane %v708, 1
      %v829 = vsel %vm784, %v826, %v828
      %v830 = vrot.slane %v709, 1
      %v831 = vrot.slane %v710, 1
      %v832 = vsel %vm784, %v830, %v831
      %v833 = vrot.slane %v711, 1
      %v834 = vsel %vm784, %v831, %v833
      %v835 = vrot.slane %v712, 1
      %v836 = vrot.slane %v713, 1
      %v837 = vsel %vm784, %v835, %v836
      %v838 = vrot.slane %v714, 1
      %v839 = vsel %vm784, %v836, %v838
      %v840 = vrot.slane %v715, 1
      %v841 = vrot.slane %v716, 1
      %v842 = vsel %vm784, %v840, %v841
      %v843 = vrot.slane %v717, 1
      %v844 = vsel %vm784, %v841, %v843
      %v845 = vrot.slane %v718, 1
      %v846 = vrot.slane %v719, 1
      %v847 = vsel %vm784, %v845, %v846
      %v848 = vrot.slane %v720, 1
      %v849 = vsel %vm784, %v846, %v848
      %v850 = vrot.slane %v721, 1
      %v851 = vrot.slane %v722, 1
      %v852 = vsel %vm784, %v850, %v851
      %v853 = vrot.slane %v723, 1
      %v854 = vsel %vm784, %v851, %v853
      %v855 = vrot.slane %v724, 1
      %v856 = vrot.slane %v725, 1
      %v857 = vsel %vm784, %v855, %v856
      %v858 = vrot.slane %v726, 1
      %v859 = vsel %vm784, %v856, %v858
      %v860 = vrot.slane %v727, 1
      %v861 = vrot.slane %v728, 1
      %v862 = vsel %vm784, %v860, %v861
      %v863 = vrot.slane %v729, 1
      %v864 = vsel %vm784, %v861, %v863
      %865 = vrot.lane.b32.xlu0 %v787, 8
      %v866 = vpop.permute.xlu0 %865
      %867 = vrot.lane.b32.xlu0 %v789, 8
      %v868 = vpop.permute.xlu0 %867
      %869 = vrot.lane.b32.xlu0 %v792, 8
      %v870 = vpop.permute.xlu0 %869
      %871 = vrot.lane.b32.xlu0 %v794, 8
      %v872 = vpop.permute.xlu0 %871
      %873 = vrot.lane.b32.xlu0 %v797, 8
      %v874 = vpop.permute.xlu0 %873
      %875 = vrot.lane.b32.xlu0 %v799, 8
      %v876 = vpop.permute.xlu0 %875
      %877 = vrot.lane.b32.xlu0 %v802, 8
      %v878 = vpop.permute.xlu0 %877
      %879 = vrot.lane.b32.xlu0 %v804, 8
      %v880 = vpop.permute.xlu0 %879
      %881 = vrot.lane.b32.xlu0 %v807, 8
      %v882 = vpop.permute.xlu0 %881
      %883 = vrot.lane.b32.xlu0 %v809, 8
      %v884 = vpop.permute.xlu0 %883
      %885 = vrot.lane.b32.xlu0 %v812, 8
      %v886 = vpop.permute.xlu0 %885
      %887 = vrot.lane.b32.xlu0 %v814, 8
      %v888 = vpop.permute.xlu0 %887
      %889 = vrot.lane.b32.xlu0 %v817, 8
      %v890 = vpop.permute.xlu0 %889
      %891 = vrot.lane.b32.xlu0 %v819, 8
      %v892 = vpop.permute.xlu0 %891
      %893 = vrot.lane.b32.xlu0 %v822, 8
      %v894 = vpop.permute.xlu0 %893
      %895 = vrot.lane.b32.xlu0 %v824, 8
      %v896 = vpop.permute.xlu0 %895
      %897 = vrot.lane.b32.xlu0 %v827, 8
      %v898 = vpop.permute.xlu0 %897
      %899 = vrot.lane.b32.xlu0 %v829, 8
      %v900 = vpop.permute.xlu0 %899
      %901 = vrot.lane.b32.xlu0 %v832, 8
      %v902 = vpop.permute.xlu0 %901
      %903 = vrot.lane.b32.xlu0 %v834, 8
      %v904 = vpop.permute.xlu0 %903
      %905 = vrot.lane.b32.xlu0 %v837, 8
      %v906 = vpop.permute.xlu0 %905
      %907 = vrot.lane.b32.xlu0 %v839, 8
      %v908 = vpop.permute.xlu0 %907
      %909 = vrot.lane.b32.xlu0 %v842, 8
      %v910 = vpop.permute.xlu0 %909
      %911 = vrot.lane.b32.xlu0 %v844, 8
      %v912 = vpop.permute.xlu0 %911
      %913 = vrot.lane.b32.xlu0 %v847, 8
      %v914 = vpop.permute.xlu0 %913
      %915 = vrot.lane.b32.xlu0 %v849, 8
      %v916 = vpop.permute.xlu0 %915
      %917 = vrot.lane.b32.xlu0 %v852, 8
      %v918 = vpop.permute.xlu0 %917
      %919 = vrot.lane.b32.xlu0 %v854, 8
      %v920 = vpop.permute.xlu0 %919
      %921 = vrot.lane.b32.xlu0 %v857, 8
      %v922 = vpop.permute.xlu0 %921
      %923 = vrot.lane.b32.xlu0 %v859, 8
      %v924 = vpop.permute.xlu0 %923
      %925 = vrot.lane.b32.xlu0 %v862, 8
      %v926 = vpop.permute.xlu0 %925
      %927 = vrot.lane.b32.xlu0 %v864, 8
      %v928 = vpop.permute.xlu0 %927
      %vm961 = vcmask 1045504
      %v962 = vrot.slane %v682, 2
      %v963 = vrot.slane %v683, 2
      %v964 = vsel %vm961, %v962, %v963
      %v965 = vrot.slane %v684, 2
      %v966 = vsel %vm961, %v963, %v965
      %v967 = vrot.slane %v685, 2
      %v968 = vrot.slane %v686, 2
      %v969 = vsel %vm961, %v967, %v968
      %v970 = vrot.slane %v687, 2
      %v971 = vsel %vm961, %v968, %v970
      %v972 = vrot.slane %v688, 2
      %v973 = vrot.slane %v689, 2
      %v974 = vsel %vm961, %v972, %v973
      %v975 = vrot.slane %v690, 2
      %v976 = vsel %vm961, %v973, %v975
      %v977 = vrot.slane %v691, 2
      %v978 = vrot.slane %v692, 2
      %v979 = vsel %vm961, %v977, %v978
      %v980 = vrot.slane %v693, 2
      %v981 = vsel %vm961, %v978, %v980
      %v982 = vrot.slane %v694, 2
      %v983 = vrot.slane %v695, 2
      %v984 = vsel %vm961, %v982, %v983
      %v985 = vrot.slane %v696, 2
      %v986 = vsel %vm961, %v983, %v985
      %v987 = vrot.slane %v697, 2
      %v988 = vrot.slane %v698, 2
      %v989 = vsel %vm961, %v987, %v988
      %v990 = vrot.slane %v699, 2
      %v991 = vsel %vm961, %v988, %v990
      %v992 = vrot.slane %v700, 2
      %v993 = vrot.slane %v701, 2
      %v994 = vsel %vm961, %v992, %v993
      %v995 = vrot.slane %v702, 2
      %v996 = vsel %vm961, %v993, %v995
      %v997 = vrot.slane %v703, 2
      %v998 = vrot.slane %v704, 2
      %v999 = vsel %vm961, %v997, %v998
      %v1000 = vrot.slane %v705, 2
      %v1001 = vsel %vm961, %v998, %v1000
      %v1002 = vrot.slane %v706, 2
      %v1003 = vrot.slane %v707, 2
      %v1004 = vsel %vm961, %v1002, %v1003
      %v1005 = vrot.slane %v708, 2
      %v1006 = vsel %vm961, %v1003, %v1005
      %v1007 = vrot.slane %v709, 2
      %v1008 = vrot.slane %v710, 2
      %v1009 = vsel %vm961, %v1007, %v1008
      %v1010 = vrot.slane %v711, 2
      %v1011 = vsel %vm961, %v1008, %v1010
      %v1012 = vrot.slane %v712, 2
      %v1013 = vrot.slane %v713, 2
      %v1014 = vsel %vm961, %v1012, %v1013
      %v1015 = vrot.slane %v714, 2
      %v1016 = vsel %vm961, %v1013, %v1015
      %v1017 = vrot.slane %v715, 2
      %v1018 = vrot.slane %v716, 2
      %v1019 = vsel %vm961, %v1017, %v1018
      %v1020 = vrot.slane %v717, 2
      %v1021 = vsel %vm961, %v1018, %v1020
      %v1022 = vrot.slane %v718, 2
      %v1023 = vrot.slane %v719, 2
      %v1024 = vsel %vm961, %v1022, %v1023
      %v1025 = vrot.slane %v720, 2
      %v1026 = vsel %vm961, %v1023, %v1025
      %v1027 = vrot.slane %v721, 2
      %v1028 = vrot.slane %v722, 2
      %v1029 = vsel %vm961, %v1027, %v1028
      %v1030 = vrot.slane %v723, 2
      %v1031 = vsel %vm961, %v1028, %v1030
      %v1032 = vrot.slane %v724, 2
      %v1033 = vrot.slane %v725, 2
      %v1034 = vsel %vm961, %v1032, %v1033
      %v1035 = vrot.slane %v726, 2
      %v1036 = vsel %vm961, %v1033, %v1035
      %v1037 = vrot.slane %v727, 2
      %v1038 = vrot.slane %v728, 2
      %v1039 = vsel %vm961, %v1037, %v1038
      %v1040 = vrot.slane %v729, 2
      %v1041 = vsel %vm961, %v1038, %v1040
      %1042 = vrot.lane.b32.xlu0 %v964, 16
      %v1043 = vpop.permute.xlu0 %1042
      %1044 = vrot.lane.b32.xlu0 %v966, 16
      %v1045 = vpop.permute.xlu0 %1044
      %1046 = vrot.lane.b32.xlu0 %v969, 16
      %v1047 = vpop.permute.xlu0 %1046
      %1048 = vrot.lane.b32.xlu0 %v971, 16
      %v1049 = vpop.permute.xlu0 %1048
      %1050 = vrot.lane.b32.xlu0 %v974, 16
      %v1051 = vpop.permute.xlu0 %1050
      %1052 = vrot.lane.b32.xlu0 %v976, 16
      %v1053 = vpop.permute.xlu0 %1052
      %1054 = vrot.lane.b32.xlu0 %v979, 16
      %v1055 = vpop.permute.xlu0 %1054
      %1056 = vrot.lane.b32.xlu0 %v981, 16
      %v1057 = vpop.permute.xlu0 %1056
      %1058 = vrot.lane.b32.xlu0 %v984, 16
      %v1059 = vpop.permute.xlu0 %1058
      %1060 = vrot.lane.b32.xlu0 %v986, 16
      %v1061 = vpop.permute.xlu0 %1060
      %1062 = vrot.lane.b32.xlu0 %v989, 16
      %v1063 = vpop.permute.xlu0 %1062
      %1064 = vrot.lane.b32.xlu0 %v991, 16
      %v1065 = vpop.permute.xlu0 %1064
      %1066 = vrot.lane.b32.xlu0 %v994, 16
      %v1067 = vpop.permute.xlu0 %1066
      %1068 = vrot.lane.b32.xlu0 %v996, 16
      %v1069 = vpop.permute.xlu0 %1068
      %1070 = vrot.lane.b32.xlu0 %v999, 16
      %v1071 = vpop.permute.xlu0 %1070
      %1072 = vrot.lane.b32.xlu0 %v1001, 16
      %v1073 = vpop.permute.xlu0 %1072
      %1074 = vrot.lane.b32.xlu0 %v1004, 16
      %v1075 = vpop.permute.xlu0 %1074
      %1076 = vrot.lane.b32.xlu0 %v1006, 16
      %v1077 = vpop.permute.xlu0 %1076
      %1078 = vrot.lane.b32.xlu0 %v1009, 16
      %v1079 = vpop.permute.xlu0 %1078
      %1080 = vrot.lane.b32.xlu0 %v1011, 16
      %v1081 = vpop.permute.xlu0 %1080
      %1082 = vrot.lane.b32.xlu0 %v1014, 16
      %v1083 = vpop.permute.xlu0 %1082
      %1084 = vrot.lane.b32.xlu0 %v1016, 16
      %v1085 = vpop.permute.xlu0 %1084
      %1086 = vrot.lane.b32.xlu0 %v1019, 16
      %v1087 = vpop.permute.xlu0 %1086
      %1088 = vrot.lane.b32.xlu0 %v1021, 16
      %v1089 = vpop.permute.xlu0 %1088
      %1090 = vrot.lane.b32.xlu0 %v1024, 16
      %v1091 = vpop.permute.xlu0 %1090
      %1092 = vrot.lane.b32.xlu0 %v1026, 16
      %v1093 = vpop.permute.xlu0 %1092
      %1094 = vrot.lane.b32.xlu0 %v1029, 16
      %v1095 = vpop.permute.xlu0 %1094
      %1096 = vrot.lane.b32.xlu0 %v1031, 16
      %v1097 = vpop.permute.xlu0 %1096
      %1098 = vrot.lane.b32.xlu0 %v1034, 16
      %v1099 = vpop.permute.xlu0 %1098
      %1100 = vrot.lane.b32.xlu0 %v1036, 16
      %v1101 = vpop.permute.xlu0 %1100
      %1102 = vrot.lane.b32.xlu0 %v1039, 16
      %v1103 = vpop.permute.xlu0 %1102
      %1104 = vrot.lane.b32.xlu0 %v1041, 16
      %v1105 = vpop.permute.xlu0 %1104
      %1140 = vrot.lane.b32.xlu0 %v685, 24
      %v1141 = vpop.permute.xlu0 %1140
      %1142 = vrot.lane.b32.xlu0 %v686, 24
      %v1143 = vpop.permute.xlu0 %1142
      %1144 = vrot.lane.b32.xlu0 %v688, 24
      %v1145 = vpop.permute.xlu0 %1144
      %1146 = vrot.lane.b32.xlu0 %v689, 24
      %v1147 = vpop.permute.xlu0 %1146
      %1148 = vrot.lane.b32.xlu0 %v691, 24
      %v1149 = vpop.permute.xlu0 %1148
      %1150 = vrot.lane.b32.xlu0 %v692, 24
      %v1151 = vpop.permute.xlu0 %1150
      %1152 = vrot.lane.b32.xlu0 %v694, 24
      %v1153 = vpop.permute.xlu0 %1152
      %1154 = vrot.lane.b32.xlu0 %v695, 24
      %v1155 = vpop.permute.xlu0 %1154
      %1156 = vrot.lane.b32.xlu0 %v697, 24
      %v1157 = vpop.permute.xlu0 %1156
      %1158 = vrot.lane.b32.xlu0 %v698, 24
      %v1159 = vpop.permute.xlu0 %1158
      %1160 = vrot.lane.b32.xlu0 %v700, 24
      %v1161 = vpop.permute.xlu0 %1160
      %1162 = vrot.lane.b32.xlu0 %v701, 24
      %v1163 = vpop.permute.xlu0 %1162
      %1164 = vrot.lane.b32.xlu0 %v703, 24
      %v1165 = vpop.permute.xlu0 %1164
      %1166 = vrot.lane.b32.xlu0 %v704, 24
      %v1167 = vpop.permute.xlu0 %1166
      %1168 = vrot.lane.b32.xlu0 %v706, 24
      %v1169 = vpop.permute.xlu0 %1168
      %1170 = vrot.lane.b32.xlu0 %v707, 24
      %v1171 = vpop.permute.xlu0 %1170
      %1172 = vrot.lane.b32.xlu0 %v709, 24
      %v1173 = vpop.permute.xlu0 %1172
      %1174 = vrot.lane.b32.xlu0 %v710, 24
      %v1175 = vpop.permute.xlu0 %1174
      %1176 = vrot.lane.b32.xlu0 %v712, 24
      %v1177 = vpop.permute.xlu0 %1176
      %1178 = vrot.lane.b32.xlu0 %v713, 24
      %v1179 = vpop.permute.xlu0 %1178
      %1180 = vrot.lane.b32.xlu0 %v715, 24
      %v1181 = vpop.permute.xlu0 %1180
      %1182 = vrot.lane.b32.xlu0 %v716, 24
      %v1183 = vpop.permute.xlu0 %1182
      %1184 = vrot.lane.b32.xlu0 %v718, 24
      %v1185 = vpop.permute.xlu0 %1184
      %1186 = vrot.lane.b32.xlu0 %v719, 24
      %v1187 = vpop.permute.xlu0 %1186
      %1188 = vrot.lane.b32.xlu0 %v721, 24
      %v1189 = vpop.permute.xlu0 %1188
      %1190 = vrot.lane.b32.xlu0 %v722, 24
      %v1191 = vpop.permute.xlu0 %1190
      %1192 = vrot.lane.b32.xlu0 %v724, 24
      %v1193 = vpop.permute.xlu0 %1192
      %1194 = vrot.lane.b32.xlu0 %v725, 24
      %v1195 = vpop.permute.xlu0 %1194
      %1196 = vrot.lane.b32.xlu0 %v727, 24
      %v1197 = vpop.permute.xlu0 %1196
      %1198 = vrot.lane.b32.xlu0 %v728, 24
      %v1199 = vpop.permute.xlu0 %1198
      %1200 = vrot.lane.b32.xlu0 %v730, 24
      %v1201 = vpop.permute.xlu0 %1200
      %1202 = vrot.lane.b32.xlu0 %v731, 24
      %v1203 = vpop.permute.xlu0 %1202
      %v1237 = vrot.slane %v730, 1
      %v1238 = vrot.slane %v731, 1
      %v1239 = vsel %vm784, %v1237, %v1238
      %v1240 = vrot.slane %v732, 1
      %v1241 = vsel %vm784, %v1238, %v1240
      %1242 = vrot.lane.b32.xlu0 %v792, 32
      %v1243 = vpop.permute.xlu0 %1242
      %1244 = vrot.lane.b32.xlu0 %v794, 32
      %v1245 = vpop.permute.xlu0 %1244
      %1246 = vrot.lane.b32.xlu0 %v797, 32
      %v1247 = vpop.permute.xlu0 %1246
      %1248 = vrot.lane.b32.xlu0 %v799, 32
      %v1249 = vpop.permute.xlu0 %1248
      %1250 = vrot.lane.b32.xlu0 %v802, 32
      %v1251 = vpop.permute.xlu0 %1250
      %1252 = vrot.lane.b32.xlu0 %v804, 32
      %v1253 = vpop.permute.xlu0 %1252
      %1254 = vrot.lane.b32.xlu0 %v807, 32
      %v1255 = vpop.permute.xlu0 %1254
      %1256 = vrot.lane.b32.xlu0 %v809, 32
      %v1257 = vpop.permute.xlu0 %1256
      %1258 = vrot.lane.b32.xlu0 %v812, 32
      %v1259 = vpop.permute.xlu0 %1258
      %1260 = vrot.lane.b32.xlu0 %v814, 32
      %v1261 = vpop.permute.xlu0 %1260
      %1262 = vrot.lane.b32.xlu0 %v817, 32
      %v1263 = vpop.permute.xlu0 %1262
      %1264 = vrot.lane.b32.xlu0 %v819, 32
      %v1265 = vpop.permute.xlu0 %1264
      %1266 = vrot.lane.b32.xlu0 %v822, 32
      %v1267 = vpop.permute.xlu0 %1266
      %1268 = vrot.lane.b32.xlu0 %v824, 32
      %v1269 = vpop.permute.xlu0 %1268
      %1270 = vrot.lane.b32.xlu0 %v827, 32
      %v1271 = vpop.permute.xlu0 %1270
      %1272 = vrot.lane.b32.xlu0 %v829, 32
      %v1273 = vpop.permute.xlu0 %1272
      %1274 = vrot.lane.b32.xlu0 %v832, 32
      %v1275 = vpop.permute.xlu0 %1274
      %1276 = vrot.lane.b32.xlu0 %v834, 32
      %v1277 = vpop.permute.xlu0 %1276
      %1278 = vrot.lane.b32.xlu0 %v837, 32
      %v1279 = vpop.permute.xlu0 %1278
      %1280 = vrot.lane.b32.xlu0 %v839, 32
      %v1281 = vpop.permute.xlu0 %1280
      %1282 = vrot.lane.b32.xlu0 %v842, 32
      %v1283 = vpop.permute.xlu0 %1282
      %1284 = vrot.lane.b32.xlu0 %v844, 32
      %v1285 = vpop.permute.xlu0 %1284
      %1286 = vrot.lane.b32.xlu0 %v847, 32
      %v1287 = vpop.permute.xlu0 %1286
      %1288 = vrot.lane.b32.xlu0 %v849, 32
      %v1289 = vpop.permute.xlu0 %1288
      %1290 = vrot.lane.b32.xlu0 %v852, 32
      %v1291 = vpop.permute.xlu0 %1290
      %1292 = vrot.lane.b32.xlu0 %v854, 32
      %v1293 = vpop.permute.xlu0 %1292
      %1294 = vrot.lane.b32.xlu0 %v857, 32
      %v1295 = vpop.permute.xlu0 %1294
      %1296 = vrot.lane.b32.xlu0 %v859, 32
      %v1297 = vpop.permute.xlu0 %1296
      %1298 = vrot.lane.b32.xlu0 %v862, 32
      %v1299 = vpop.permute.xlu0 %1298
      %1300 = vrot.lane.b32.xlu0 %v864, 32
      %v1301 = vpop.permute.xlu0 %1300
      %1302 = vrot.lane.b32.xlu0 %v1239, 32
      %v1303 = vpop.permute.xlu0 %1302
      %1304 = vrot.lane.b32.xlu0 %v1241, 32
      %v1305 = vpop.permute.xlu0 %1304
      %v1338 = vrot.slane %v730, 2
      %v1339 = vrot.slane %v731, 2
      %v1340 = vsel %vm961, %v1338, %v1339
      %v1341 = vrot.slane %v732, 2
      %v1342 = vsel %vm961, %v1339, %v1341
      %1343 = vrot.lane.b32.xlu0 %v969, 40
      %v1344 = vpop.permute.xlu0 %1343
      %1345 = vrot.lane.b32.xlu0 %v971, 40
      %v1346 = vpop.permute.xlu0 %1345
      %1347 = vrot.lane.b32.xlu0 %v974, 40
      %v1348 = vpop.permute.xlu0 %1347
      %1349 = vrot.lane.b32.xlu0 %v976, 40
      %v1350 = vpop.permute.xlu0 %1349
      %1351 = vrot.lane.b32.xlu0 %v979, 40
      %v1352 = vpop.permute.xlu0 %1351
      %1353 = vrot.lane.b32.xlu0 %v981, 40
      %v1354 = vpop.permute.xlu0 %1353
      %1355 = vrot.lane.b32.xlu0 %v984, 40
      %v1356 = vpop.permute.xlu0 %1355
      %1357 = vrot.lane.b32.xlu0 %v986, 40
      %v1358 = vpop.permute.xlu0 %1357
      %1359 = vrot.lane.b32.xlu0 %v989, 40
      %v1360 = vpop.permute.xlu0 %1359
      %1361 = vrot.lane.b32.xlu0 %v991, 40
      %v1362 = vpop.permute.xlu0 %1361
      %1363 = vrot.lane.b32.xlu0 %v994, 40
      %v1364 = vpop.permute.xlu0 %1363
      %1365 = vrot.lane.b32.xlu0 %v996, 40
      %v1366 = vpop.permute.xlu0 %1365
      %1367 = vrot.lane.b32.xlu0 %v999, 40
      %v1368 = vpop.permute.xlu0 %1367
      %1369 = vrot.lane.b32.xlu0 %v1001, 40
      %v1370 = vpop.permute.xlu0 %1369
      %1371 = vrot.lane.b32.xlu0 %v1004, 40
      %v1372 = vpop.permute.xlu0 %1371
      %1373 = vrot.lane.b32.xlu0 %v1006, 40
      %v1374 = vpop.permute.xlu0 %1373
      %1375 = vrot.lane.b32.xlu0 %v1009, 40
      %v1376 = vpop.permute.xlu0 %1375
      %1377 = vrot.lane.b32.xlu0 %v1011, 40
      %v1378 = vpop.permute.xlu0 %1377
      %1379 = vrot.lane.b32.xlu0 %v1014, 40
      %v1380 = vpop.permute.xlu0 %1379
      %1381 = vrot.lane.b32.xlu0 %v1016, 40
      %v1382 = vpop.permute.xlu0 %1381
      %1383 = vrot.lane.b32.xlu0 %v1019, 40
      %v1384 = vpop.permute.xlu0 %1383
      %1385 = vrot.lane.b32.xlu0 %v1021, 40
      %v1386 = vpop.permute.xlu0 %1385
      %1387 = vrot.lane.b32.xlu0 %v1024, 40
      %v1388 = vpop.permute.xlu0 %1387
      %1389 = vrot.lane.b32.xlu0 %v1026, 40
      %v1390 = vpop.permute.xlu0 %1389
      %1391 = vrot.lane.b32.xlu0 %v1029, 40
      %v1392 = vpop.permute.xlu0 %1391
      %1393 = vrot.lane.b32.xlu0 %v1031, 40
      %v1394 = vpop.permute.xlu0 %1393
      %1395 = vrot.lane.b32.xlu0 %v1034, 40
      %v1396 = vpop.permute.xlu0 %1395
      %1397 = vrot.lane.b32.xlu0 %v1036, 40
      %v1398 = vpop.permute.xlu0 %1397
      %1399 = vrot.lane.b32.xlu0 %v1039, 40
      %v1400 = vpop.permute.xlu0 %1399
      %1401 = vrot.lane.b32.xlu0 %v1041, 40
      %v1402 = vpop.permute.xlu0 %1401
      %1403 = vrot.lane.b32.xlu0 %v1340, 40
      %v1404 = vpop.permute.xlu0 %1403
      %1405 = vrot.lane.b32.xlu0 %v1342, 40
      %v1406 = vpop.permute.xlu0 %1405
      %1441 = vrot.lane.b32.xlu0 %v688, 48
      %v1442 = vpop.permute.xlu0 %1441
      %1443 = vrot.lane.b32.xlu0 %v689, 48
      %v1444 = vpop.permute.xlu0 %1443
      %1445 = vrot.lane.b32.xlu0 %v691, 48
      %v1446 = vpop.permute.xlu0 %1445
      %1447 = vrot.lane.b32.xlu0 %v692, 48
      %v1448 = vpop.permute.xlu0 %1447
      %1449 = vrot.lane.b32.xlu0 %v694, 48
      %v1450 = vpop.permute.xlu0 %1449
      %1451 = vrot.lane.b32.xlu0 %v695, 48
      %v1452 = vpop.permute.xlu0 %1451
      %1453 = vrot.lane.b32.xlu0 %v697, 48
      %v1454 = vpop.permute.xlu0 %1453
      %1455 = vrot.lane.b32.xlu0 %v698, 48
      %v1456 = vpop.permute.xlu0 %1455
      %1457 = vrot.lane.b32.xlu0 %v700, 48
      %v1458 = vpop.permute.xlu0 %1457
      %1459 = vrot.lane.b32.xlu0 %v701, 48
      %v1460 = vpop.permute.xlu0 %1459
      %1461 = vrot.lane.b32.xlu0 %v703, 48
      %v1462 = vpop.permute.xlu0 %1461
      %1463 = vrot.lane.b32.xlu0 %v704, 48
      %v1464 = vpop.permute.xlu0 %1463
      %1465 = vrot.lane.b32.xlu0 %v706, 48
      %v1466 = vpop.permute.xlu0 %1465
      %1467 = vrot.lane.b32.xlu0 %v707, 48
      %v1468 = vpop.permute.xlu0 %1467
      %1469 = vrot.lane.b32.xlu0 %v709, 48
      %v1470 = vpop.permute.xlu0 %1469
      %1471 = vrot.lane.b32.xlu0 %v710, 48
      %v1472 = vpop.permute.xlu0 %1471
      %1473 = vrot.lane.b32.xlu0 %v712, 48
      %v1474 = vpop.permute.xlu0 %1473
      %1475 = vrot.lane.b32.xlu0 %v713, 48
      %v1476 = vpop.permute.xlu0 %1475
      %1477 = vrot.lane.b32.xlu0 %v715, 48
      %v1478 = vpop.permute.xlu0 %1477
      %1479 = vrot.lane.b32.xlu0 %v716, 48
      %v1480 = vpop.permute.xlu0 %1479
      %1481 = vrot.lane.b32.xlu0 %v718, 48
      %v1482 = vpop.permute.xlu0 %1481
      %1483 = vrot.lane.b32.xlu0 %v719, 48
      %v1484 = vpop.permute.xlu0 %1483
      %1485 = vrot.lane.b32.xlu0 %v721, 48
      %v1486 = vpop.permute.xlu0 %1485
      %1487 = vrot.lane.b32.xlu0 %v722, 48
      %v1488 = vpop.permute.xlu0 %1487
      %1489 = vrot.lane.b32.xlu0 %v724, 48
      %v1490 = vpop.permute.xlu0 %1489
      %1491 = vrot.lane.b32.xlu0 %v725, 48
      %v1492 = vpop.permute.xlu0 %1491
      %1493 = vrot.lane.b32.xlu0 %v727, 48
      %v1494 = vpop.permute.xlu0 %1493
      %1495 = vrot.lane.b32.xlu0 %v728, 48
      %v1496 = vpop.permute.xlu0 %1495
      %1497 = vrot.lane.b32.xlu0 %v730, 48
      %v1498 = vpop.permute.xlu0 %1497
      %1499 = vrot.lane.b32.xlu0 %v731, 48
      %v1500 = vpop.permute.xlu0 %1499
      %1501 = vrot.lane.b32.xlu0 %v733, 48
      %v1502 = vpop.permute.xlu0 %1501
      %1503 = vrot.lane.b32.xlu0 %v734, 48
      %v1504 = vpop.permute.xlu0 %1503
      %v1538 = vrot.slane %v733, 1
      %v1539 = vrot.slane %v734, 1
      %v1540 = vsel %vm784, %v1538, %v1539
      %v1541 = vrot.slane %v735, 1
      %v1542 = vsel %vm784, %v1539, %v1541
      %1543 = vrot.lane.b32.xlu0 %v797, 56
      %v1544 = vpop.permute.xlu0 %1543
      %1545 = vrot.lane.b32.xlu0 %v799, 56
      %v1546 = vpop.permute.xlu0 %1545
      %1547 = vrot.lane.b32.xlu0 %v802, 56
      %v1548 = vpop.permute.xlu0 %1547
      %1549 = vrot.lane.b32.xlu0 %v804, 56
      %v1550 = vpop.permute.xlu0 %1549
      %1551 = vrot.lane.b32.xlu0 %v807, 56
      %v1552 = vpop.permute.xlu0 %1551
      %1553 = vrot.lane.b32.xlu0 %v809, 56
      %v1554 = vpop.permute.xlu0 %1553
      %1555 = vrot.lane.b32.xlu0 %v812, 56
      %v1556 = vpop.permute.xlu0 %1555
      %1557 = vrot.lane.b32.xlu0 %v814, 56
      %v1558 = vpop.permute.xlu0 %1557
      %1559 = vrot.lane.b32.xlu0 %v817, 56
      %v1560 = vpop.permute.xlu0 %1559
      %1561 = vrot.lane.b32.xlu0 %v819, 56
      %v1562 = vpop.permute.xlu0 %1561
      %1563 = vrot.lane.b32.xlu0 %v822, 56
      %v1564 = vpop.permute.xlu0 %1563
      %1565 = vrot.lane.b32.xlu0 %v824, 56
      %v1566 = vpop.permute.xlu0 %1565
      %1567 = vrot.lane.b32.xlu0 %v827, 56
      %v1568 = vpop.permute.xlu0 %1567
      %1569 = vrot.lane.b32.xlu0 %v829, 56
      %v1570 = vpop.permute.xlu0 %1569
      %1571 = vrot.lane.b32.xlu0 %v832, 56
      %v1572 = vpop.permute.xlu0 %1571
      %1573 = vrot.lane.b32.xlu0 %v834, 56
      %v1574 = vpop.permute.xlu0 %1573
      %1575 = vrot.lane.b32.xlu0 %v837, 56
      %v1576 = vpop.permute.xlu0 %1575
      %1577 = vrot.lane.b32.xlu0 %v839, 56
      %v1578 = vpop.permute.xlu0 %1577
      %1579 = vrot.lane.b32.xlu0 %v842, 56
      %v1580 = vpop.permute.xlu0 %1579
      %1581 = vrot.lane.b32.xlu0 %v844, 56
      %v1582 = vpop.permute.xlu0 %1581
      %1583 = vrot.lane.b32.xlu0 %v847, 56
      %v1584 = vpop.permute.xlu0 %1583
      %1585 = vrot.lane.b32.xlu0 %v849, 56
      %v1586 = vpop.permute.xlu0 %1585
      %1587 = vrot.lane.b32.xlu0 %v852, 56
      %v1588 = vpop.permute.xlu0 %1587
      %1589 = vrot.lane.b32.xlu0 %v854, 56
      %v1590 = vpop.permute.xlu0 %1589
      %1591 = vrot.lane.b32.xlu0 %v857, 56
      %v1592 = vpop.permute.xlu0 %1591
      %1593 = vrot.lane.b32.xlu0 %v859, 56
      %v1594 = vpop.permute.xlu0 %1593
      %1595 = vrot.lane.b32.xlu0 %v862, 56
      %v1596 = vpop.permute.xlu0 %1595
      %1597 = vrot.lane.b32.xlu0 %v864, 56
      %v1598 = vpop.permute.xlu0 %1597
      %1599 = vrot.lane.b32.xlu0 %v1239, 56
      %v1600 = vpop.permute.xlu0 %1599
      %1601 = vrot.lane.b32.xlu0 %v1241, 56
      %v1602 = vpop.permute.xlu0 %1601
      %1603 = vrot.lane.b32.xlu0 %v1540, 56
      %v1604 = vpop.permute.xlu0 %1603
      %1605 = vrot.lane.b32.xlu0 %v1542, 56
      %v1606 = vpop.permute.xlu0 %1605
      %v1639 = vrot.slane %v733, 2
      %v1640 = vrot.slane %v734, 2
      %v1641 = vsel %vm961, %v1639, %v1640
      %v1642 = vrot.slane %v735, 2
      %v1643 = vsel %vm961, %v1640, %v1642
      %1644 = vrot.lane.b32.xlu0 %v974, 64
      %v1645 = vpop.permute.xlu0 %1644
      %1646 = vrot.lane.b32.xlu0 %v976, 64
      %v1647 = vpop.permute.xlu0 %1646
      %1648 = vrot.lane.b32.xlu0 %v979, 64
      %v1649 = vpop.permute.xlu0 %1648
      %1650 = vrot.lane.b32.xlu0 %v981, 64
      %v1651 = vpop.permute.xlu0 %1650
      %1652 = vrot.lane.b32.xlu0 %v984, 64
      %v1653 = vpop.permute.xlu0 %1652
      %1654 = vrot.lane.b32.xlu0 %v986, 64
      %v1655 = vpop.permute.xlu0 %1654
      %1656 = vrot.lane.b32.xlu0 %v989, 64
      %v1657 = vpop.permute.xlu0 %1656
      %1658 = vrot.lane.b32.xlu0 %v991, 64
      %v1659 = vpop.permute.xlu0 %1658
      %1660 = vrot.lane.b32.xlu0 %v994, 64
      %v1661 = vpop.permute.xlu0 %1660
      %1662 = vrot.lane.b32.xlu0 %v996, 64
      %v1663 = vpop.permute.xlu0 %1662
      %1664 = vrot.lane.b32.xlu0 %v999, 64
      %v1665 = vpop.permute.xlu0 %1664
      %1666 = vrot.lane.b32.xlu0 %v1001, 64
      %v1667 = vpop.permute.xlu0 %1666
      %1668 = vrot.lane.b32.xlu0 %v1004, 64
      %v1669 = vpop.permute.xlu0 %1668
      %1670 = vrot.lane.b32.xlu0 %v1006, 64
      %v1671 = vpop.permute.xlu0 %1670
      %1672 = vrot.lane.b32.xlu0 %v1009, 64
      %v1673 = vpop.permute.xlu0 %1672
      %1674 = vrot.lane.b32.xlu0 %v1011, 64
      %v1675 = vpop.permute.xlu0 %1674
      %1676 = vrot.lane.b32.xlu0 %v1014, 64
      %v1677 = vpop.permute.xlu0 %1676
      %1678 = vrot.lane.b32.xlu0 %v1016, 64
      %v1679 = vpop.permute.xlu0 %1678
      %1680 = vrot.lane.b32.xlu0 %v1019, 64
      %v1681 = vpop.permute.xlu0 %1680
      %1682 = vrot.lane.b32.xlu0 %v1021, 64
      %v1683 = vpop.permute.xlu0 %1682
      %1684 = vrot.lane.b32.xlu0 %v1024, 64
      %v1685 = vpop.permute.xlu0 %1684
      %1686 = vrot.lane.b32.xlu0 %v1026, 64
      %v1687 = vpop.permute.xlu0 %1686
      %1688 = vrot.lane.b32.xlu0 %v1029, 64
      %v1689 = vpop.permute.xlu0 %1688
      %1690 = vrot.lane.b32.xlu0 %v1031, 64
      %v1691 = vpop.permute.xlu0 %1690
      %1692 = vrot.lane.b32.xlu0 %v1034, 64
      %v1693 = vpop.permute.xlu0 %1692
      %1694 = vrot.lane.b32.xlu0 %v1036, 64
      %v1695 = vpop.permute.xlu0 %1694
      %1696 = vrot.lane.b32.xlu0 %v1039, 64
      %v1697 = vpop.permute.xlu0 %1696
      %1698 = vrot.lane.b32.xlu0 %v1041, 64
      %v1699 = vpop.permute.xlu0 %1698
      %1700 = vrot.lane.b32.xlu0 %v1340, 64
      %v1701 = vpop.permute.xlu0 %1700
      %1702 = vrot.lane.b32.xlu0 %v1342, 64
      %v1703 = vpop.permute.xlu0 %1702
      %1704 = vrot.lane.b32.xlu0 %v1641, 64
      %v1705 = vpop.permute.xlu0 %1704
      %1706 = vrot.lane.b32.xlu0 %v1643, 64
      %v1707 = vpop.permute.xlu0 %1706
      %vm1740 = vcmask 64512
      %v1741 = vsel %vm1740, %v682, %v866
      %v1742 = vsel %vm1740, %v683, %v868
      %v1743 = vsel %vm1740, %v685, %v870
      %v1744 = vsel %vm1740, %v686, %v872
      %v1745 = vsel %vm1740, %v688, %v874
      %v1746 = vsel %vm1740, %v689, %v876
      %v1747 = vsel %vm1740, %v691, %v878
      %v1748 = vsel %vm1740, %v692, %v880
      %v1749 = vsel %vm1740, %v694, %v882
      %v1750 = vsel %vm1740, %v695, %v884
      %v1751 = vsel %vm1740, %v697, %v886
      %v1752 = vsel %vm1740, %v698, %v888
      %v1753 = vsel %vm1740, %v700, %v890
      %v1754 = vsel %vm1740, %v701, %v892
      %v1755 = vsel %vm1740, %v703, %v894
      %v1756 = vsel %vm1740, %v704, %v896
      %v1757 = vsel %vm1740, %v706, %v898
      %v1758 = vsel %vm1740, %v707, %v900
      %v1759 = vsel %vm1740, %v709, %v902
      %v1760 = vsel %vm1740, %v710, %v904
      %v1761 = vsel %vm1740, %v712, %v906
      %v1762 = vsel %vm1740, %v713, %v908
      %v1763 = vsel %vm1740, %v715, %v910
      %v1764 = vsel %vm1740, %v716, %v912
      %v1765 = vsel %vm1740, %v718, %v914
      %v1766 = vsel %vm1740, %v719, %v916
      %v1767 = vsel %vm1740, %v721, %v918
      %v1768 = vsel %vm1740, %v722, %v920
      %v1769 = vsel %vm1740, %v724, %v922
      %v1770 = vsel %vm1740, %v725, %v924
      %v1771 = vsel %vm1740, %v727, %v926
      %v1772 = vsel %vm1740, %v728, %v928
      %vm1773 = vcmask 130048
      %v1774 = vsel %vm1773, %v1741, %v1043
      %v1775 = vsel %vm1773, %v1742, %v1045
      %v1776 = vsel %vm1773, %v1743, %v1047
      %v1777 = vsel %vm1773, %v1744, %v1049
      %v1778 = vsel %vm1773, %v1745, %v1051
      %v1779 = vsel %vm1773, %v1746, %v1053
      %v1780 = vsel %vm1773, %v1747, %v1055
      %v1781 = vsel %vm1773, %v1748, %v1057
      %v1782 = vsel %vm1773, %v1749, %v1059
      %v1783 = vsel %vm1773, %v1750, %v1061
      %v1784 = vsel %vm1773, %v1751, %v1063
      %v1785 = vsel %vm1773, %v1752, %v1065
      %v1786 = vsel %vm1773, %v1753, %v1067
      %v1787 = vsel %vm1773, %v1754, %v1069
      %v1788 = vsel %vm1773, %v1755, %v1071
      %v1789 = vsel %vm1773, %v1756, %v1073
      %v1790 = vsel %vm1773, %v1757, %v1075
      %v1791 = vsel %vm1773, %v1758, %v1077
      %v1792 = vsel %vm1773, %v1759, %v1079
      %v1793 = vsel %vm1773, %v1760, %v1081
      %v1794 = vsel %vm1773, %v1761, %v1083
      %v1795 = vsel %vm1773, %v1762, %v1085
      %v1796 = vsel %vm1773, %v1763, %v1087
      %v1797 = vsel %vm1773, %v1764, %v1089
      %v1798 = vsel %vm1773, %v1765, %v1091
      %v1799 = vsel %vm1773, %v1766, %v1093
      %v1800 = vsel %vm1773, %v1767, %v1095
      %v1801 = vsel %vm1773, %v1768, %v1097
      %v1802 = vsel %vm1773, %v1769, %v1099
      %v1803 = vsel %vm1773, %v1770, %v1101
      %v1804 = vsel %vm1773, %v1771, %v1103
      %v1805 = vsel %vm1773, %v1772, %v1105
      %vm1806 = vcmask 195584
      %v1807 = vsel %vm1806, %v1774, %v1141
      %v1808 = vsel %vm1806, %v1775, %v1143
      %v1809 = vsel %vm1806, %v1776, %v1145
      %v1810 = vsel %vm1806, %v1777, %v1147
      %v1811 = vsel %vm1806, %v1778, %v1149
      %v1812 = vsel %vm1806, %v1779, %v1151
      %v1813 = vsel %vm1806, %v1780, %v1153
      %v1814 = vsel %vm1806, %v1781, %v1155
      %v1815 = vsel %vm1806, %v1782, %v1157
      %v1816 = vsel %vm1806, %v1783, %v1159
      %v1817 = vsel %vm1806, %v1784, %v1161
      %v1818 = vsel %vm1806, %v1785, %v1163
      %v1819 = vsel %vm1806, %v1786, %v1165
      %v1820 = vsel %vm1806, %v1787, %v1167
      %v1821 = vsel %vm1806, %v1788, %v1169
      %v1822 = vsel %vm1806, %v1789, %v1171
      %v1823 = vsel %vm1806, %v1790, %v1173
      %v1824 = vsel %vm1806, %v1791, %v1175
      %v1825 = vsel %vm1806, %v1792, %v1177
      %v1826 = vsel %vm1806, %v1793, %v1179
      %v1827 = vsel %vm1806, %v1794, %v1181
      %v1828 = vsel %vm1806, %v1795, %v1183
      %v1829 = vsel %vm1806, %v1796, %v1185
      %v1830 = vsel %vm1806, %v1797, %v1187
      %v1831 = vsel %vm1806, %v1798, %v1189
      %v1832 = vsel %vm1806, %v1799, %v1191
      %v1833 = vsel %vm1806, %v1800, %v1193
      %v1834 = vsel %vm1806, %v1801, %v1195
      %v1835 = vsel %vm1806, %v1802, %v1197
      %v1836 = vsel %vm1806, %v1803, %v1199
      %v1837 = vsel %vm1806, %v1804, %v1201
      %v1838 = vsel %vm1806, %v1805, %v1203
      %vm1839 = vcmask 261120
      %v1840 = vsel %vm1839, %v1807, %v1243
      %v1841 = vsel %vm1839, %v1808, %v1245
      %v1842 = vsel %vm1839, %v1809, %v1247
      %v1843 = vsel %vm1839, %v1810, %v1249
      %v1844 = vsel %vm1839, %v1811, %v1251
      %v1845 = vsel %vm1839, %v1812, %v1253
      %v1846 = vsel %vm1839, %v1813, %v1255
      %v1847 = vsel %vm1839, %v1814, %v1257
      %v1848 = vsel %vm1839, %v1815, %v1259
      %v1849 = vsel %vm1839, %v1816, %v1261
      %v1850 = vsel %vm1839, %v1817, %v1263
      %v1851 = vsel %vm1839, %v1818, %v1265
      %v1852 = vsel %vm1839, %v1819, %v1267
      %v1853 = vsel %vm1839, %v1820, %v1269
      %v1854 = vsel %vm1839, %v1821, %v1271
      %v1855 = vsel %vm1839, %v1822, %v1273
      %v1856 = vsel %vm1839, %v1823, %v1275
      %v1857 = vsel %vm1839, %v1824, %v1277
      %v1858 = vsel %vm1839, %v1825, %v1279
      %v1859 = vsel %vm1839, %v1826, %v1281
      %v1860 = vsel %vm1839, %v1827, %v1283
      %v1861 = vsel %vm1839, %v1828, %v1285
      %v1862 = vsel %vm1839, %v1829, %v1287
      %v1863 = vsel %vm1839, %v1830, %v1289
      %v1864 = vsel %vm1839, %v1831, %v1291
      %v1865 = vsel %vm1839, %v1832, %v1293
      %v1866 = vsel %vm1839, %v1833, %v1295
      %v1867 = vsel %vm1839, %v1834, %v1297
      %v1868 = vsel %vm1839, %v1835, %v1299
      %v1869 = vsel %vm1839, %v1836, %v1301
      %v1870 = vsel %vm1839, %v1837, %v1303
      %v1871 = vsel %vm1839, %v1838, %v1305
      %vm1872 = vcmask 326656
      %v1873 = vsel %vm1872, %v1840, %v1344
      %v1874 = vsel %vm1872, %v1841, %v1346
      %v1875 = vsel %vm1872, %v1842, %v1348
      %v1876 = vsel %vm1872, %v1843, %v1350
      %v1877 = vsel %vm1872, %v1844, %v1352
      %v1878 = vsel %vm1872, %v1845, %v1354
      %v1879 = vsel %vm1872, %v1846, %v1356
      %v1880 = vsel %vm1872, %v1847, %v1358
      %v1881 = vsel %vm1872, %v1848, %v1360
      %v1882 = vsel %vm1872, %v1849, %v1362
      %v1883 = vsel %vm1872, %v1850, %v1364
      %v1884 = vsel %vm1872, %v1851, %v1366
      %v1885 = vsel %vm1872, %v1852, %v1368
      %v1886 = vsel %vm1872, %v1853, %v1370
      %v1887 = vsel %vm1872, %v1854, %v1372
      %v1888 = vsel %vm1872, %v1855, %v1374
      %v1889 = vsel %vm1872, %v1856, %v1376
      %v1890 = vsel %vm1872, %v1857, %v1378
      %v1891 = vsel %vm1872, %v1858, %v1380
      %v1892 = vsel %vm1872, %v1859, %v1382
      %v1893 = vsel %vm1872, %v1860, %v1384
      %v1894 = vsel %vm1872, %v1861, %v1386
      %v1895 = vsel %vm1872, %v1862, %v1388
      %v1896 = vsel %vm1872, %v1863, %v1390
      %v1897 = vsel %vm1872, %v1864, %v1392
      %v1898 = vsel %vm1872, %v1865, %v1394
      %v1899 = vsel %vm1872, %v1866, %v1396
      %v1900 = vsel %vm1872, %v1867, %v1398
      %v1901 = vsel %vm1872, %v1868, %v1400
      %v1902 = vsel %vm1872, %v1869, %v1402
      %v1903 = vsel %vm1872, %v1870, %v1404
      %v1904 = vsel %vm1872, %v1871, %v1406
      %vm1905 = vcmask 392192
      %v1906 = vsel %vm1905, %v1873, %v1442
      %v1907 = vsel %vm1905, %v1874, %v1444
      %v1908 = vsel %vm1905, %v1875, %v1446
      %v1909 = vsel %vm1905, %v1876, %v1448
      %v1910 = vsel %vm1905, %v1877, %v1450
      %v1911 = vsel %vm1905, %v1878, %v1452
      %v1912 = vsel %vm1905, %v1879, %v1454
      %v1913 = vsel %vm1905, %v1880, %v1456
      %v1914 = vsel %vm1905, %v1881, %v1458
      %v1915 = vsel %vm1905, %v1882, %v1460
      %v1916 = vsel %vm1905, %v1883, %v1462
      %v1917 = vsel %vm1905, %v1884, %v1464
      %v1918 = vsel %vm1905, %v1885, %v1466
      %v1919 = vsel %vm1905, %v1886, %v1468
      %v1920 = vsel %vm1905, %v1887, %v1470
      %v1921 = vsel %vm1905, %v1888, %v1472
      %v1922 = vsel %vm1905, %v1889, %v1474
      %v1923 = vsel %vm1905, %v1890, %v1476
      %v1924 = vsel %vm1905, %v1891, %v1478
      %v1925 = vsel %vm1905, %v1892, %v1480
      %v1926 = vsel %vm1905, %v1893, %v1482
      %v1927 = vsel %vm1905, %v1894, %v1484
      %v1928 = vsel %vm1905, %v1895, %v1486
      %v1929 = vsel %vm1905, %v1896, %v1488
      %v1930 = vsel %vm1905, %v1897, %v1490
      %v1931 = vsel %vm1905, %v1898, %v1492
      %v1932 = vsel %vm1905, %v1899, %v1494
      %v1933 = vsel %vm1905, %v1900, %v1496
      %v1934 = vsel %vm1905, %v1901, %v1498
      %v1935 = vsel %vm1905, %v1902, %v1500
      %v1936 = vsel %vm1905, %v1903, %v1502
      %v1937 = vsel %vm1905, %v1904, %v1504
      %vm1938 = vcmask 457728
      %v1939 = vsel %vm1938, %v1906, %v1544
      %v1940 = vsel %vm1938, %v1907, %v1546
      %v1941 = vsel %vm1938, %v1908, %v1548
      %v1942 = vsel %vm1938, %v1909, %v1550
      %v1943 = vsel %vm1938, %v1910, %v1552
      %v1944 = vsel %vm1938, %v1911, %v1554
      %v1945 = vsel %vm1938, %v1912, %v1556
      %v1946 = vsel %vm1938, %v1913, %v1558
      %v1947 = vsel %vm1938, %v1914, %v1560
      %v1948 = vsel %vm1938, %v1915, %v1562
      %v1949 = vsel %vm1938, %v1916, %v1564
      %v1950 = vsel %vm1938, %v1917, %v1566
      %v1951 = vsel %vm1938, %v1918, %v1568
      %v1952 = vsel %vm1938, %v1919, %v1570
      %v1953 = vsel %vm1938, %v1920, %v1572
      %v1954 = vsel %vm1938, %v1921, %v1574
      %v1955 = vsel %vm1938, %v1922, %v1576
      %v1956 = vsel %vm1938, %v1923, %v1578
      %v1957 = vsel %vm1938, %v1924, %v1580
      %v1958 = vsel %vm1938, %v1925, %v1582
      %v1959 = vsel %vm1938, %v1926, %v1584
      %v1960 = vsel %vm1938, %v1927, %v1586
      %v1961 = vsel %vm1938, %v1928, %v1588
      %v1962 = vsel %vm1938, %v1929, %v1590
      %v1963 = vsel %vm1938, %v1930, %v1592
      %v1964 = vsel %vm1938, %v1931, %v1594
      %v1965 = vsel %vm1938, %v1932, %v1596
      %v1966 = vsel %vm1938, %v1933, %v1598
      %v1967 = vsel %vm1938, %v1934, %v1600
      %v1968 = vsel %vm1938, %v1935, %v1602
      %v1969 = vsel %vm1938, %v1936, %v1604
      %v1970 = vsel %vm1938, %v1937, %v1606
      %vm1971 = vcmask 523264
      %v1972 = vsel %vm1971, %v1939, %v1645
      %v1973 = vsel %vm1971, %v1940, %v1647
      %v1974 = vsel %vm1971, %v1941, %v1649
      %v1975 = vsel %vm1971, %v1942, %v1651
      %v1976 = vsel %vm1971, %v1943, %v1653
      %v1977 = vsel %vm1971, %v1944, %v1655
      %v1978 = vsel %vm1971, %v1945, %v1657
      %v1979 = vsel %vm1971, %v1946, %v1659
      %v1980 = vsel %vm1971, %v1947, %v1661
      %v1981 = vsel %vm1971, %v1948, %v1663
      %v1982 = vsel %vm1971, %v1949, %v1665
      %v1983 = vsel %vm1971, %v1950, %v1667
      %v1984 = vsel %vm1971, %v1951, %v1669
      %v1985 = vsel %vm1971, %v1952, %v1671
      %v1986 = vsel %vm1971, %v1953, %v1673
      %v1987 = vsel %vm1971, %v1954, %v1675
      %v1988 = vsel %vm1971, %v1955, %v1677
      %v1989 = vsel %vm1971, %v1956, %v1679
      %v1990 = vsel %vm1971, %v1957, %v1681
      %v1991 = vsel %vm1971, %v1958, %v1683
      %v1992 = vsel %vm1971, %v1959, %v1685
      %v1993 = vsel %vm1971, %v1960, %v1687
      %v1994 = vsel %vm1971, %v1961, %v1689
      %v1995 = vsel %vm1971, %v1962, %v1691
      %v1996 = vsel %vm1971, %v1963, %v1693
      %v1997 = vsel %vm1971, %v1964, %v1695
      %v1998 = vsel %vm1971, %v1965, %v1697
      %v1999 = vsel %vm1971, %v1966, %v1699
      %v2000 = vsel %vm1971, %v1967, %v1701
      %v2001 = vsel %vm1971, %v1968, %v1703
      %v2002 = vsel %vm1971, %v1969, %v1705
      %v2003 = vsel %vm1971, %v1970, %v1707
      %v2004 = vpack.c.bf16 %v1973, %v1972
      %v2005 = vpack.c.bf16 %v1975, %v1974
      %v2006 = vpack.c.bf16 %v1977, %v1976
      %v2007 = vpack.c.bf16 %v1979, %v1978
      %v2008 = vpack.c.bf16 %v1981, %v1980
      %v2009 = vpack.c.bf16 %v1983, %v1982
      %v2010 = vpack.c.bf16 %v1985, %v1984
      %v2011 = vpack.c.bf16 %v1987, %v1986
      %v2012 = vpack.c.bf16 %v1989, %v1988
      %v2013 = vpack.c.bf16 %v1991, %v1990
      %v2014 = vpack.c.bf16 %v1993, %v1992
      %v2015 = vpack.c.bf16 %v1995, %v1994
      %v2016 = vpack.c.bf16 %v1997, %v1996
      %v2017 = vpack.c.bf16 %v1999, %v1998
      %v2018 = vpack.c.bf16 %v2001, %v2000
      %v2019 = vpack.c.bf16 %v2003, %v2002
      %v2020 = vld [vmem:[%s1] sm:$0xf]
      %v2021 = vld [vmem:[%s1 + $0x4] sm:$0xf]
      %v2022 = vld [vmem:[%s1 + $0x8] sm:$0xf]
      %v2023 = vld [vmem:[%s1 + $0xc] sm:$0xf]
      %v2024 = vld [vmem:[%s1 + $0x10] sm:$0xf]
      %v2025 = vld [vmem:[%s1 + $0x14] sm:$0xf]
      %v2026 = vld [vmem:[%s1 + $0x18] sm:$0xf]
      %v2027 = vld [vmem:[%s1 + $0x1c] sm:$0xf]
      %v2028 = vld [vmem:[%s1 + $0x20] sm:$0xf]
      %v2029 = vld [vmem:[%s2] sm:$0x1]
      %v2031 = vlaneseq
      %v2032 = vshrl.u32 %v2031, 7
      %v2033 = vsub.s32 0, %v2032
      %v2034 = vrot.slane %v2029, %v2033
      %v2045 = vunpack.c.l.b16 %v2020
      %v2046 = vunpack.c.l.b16 %v2021
      %v2047 = vunpack.c.l.b16 %v2022
      %v2048 = vunpack.c.l.b16 %v2023
      %v2049 = vunpack.c.l.b16 %v2024
      %v2050 = vunpack.c.l.b16 %v2025
      %v2051 = vunpack.c.l.b16 %v2026
      %v2052 = vunpack.c.l.b16 %v2027
      %v2053 = vunpack.c.l.b16 %v2028
      %v2054 = vpack.c.b16 %v2046, %v2045
      %v2055 = vpack.c.b16 %v2048, %v2047
      %v2056 = vpack.c.b16 %v2050, %v2049
      %v2057 = vpack.c.b16 %v2052, %v2051
      %v2058 = vpack.c.b16 %v2053, %v2053
      %vm2063 = vcmask 588800
      %v2065 = vsel %vm2063, %v2004, 0
      %v2068 = vsel %vm2063, %v2005, 0
      %v2071 = vsel %vm2063, %v2006, 0
      %v2074 = vsel %vm2063, %v2007, 0
      %v2077 = vsel %vm2063, %v2008, 0
      %v2080 = vsel %vm2063, %v2009, 0
      %v2083 = vsel %vm2063, %v2010, 0
      %v2086 = vsel %vm2063, %v2011, 0
      %v2089 = vsel %vm2063, %v2012, 0
      %v2092 = vsel %vm2063, %v2013, 0
      %v2095 = vsel %vm2063, %v2014, 0
      %v2098 = vsel %vm2063, %v2015, 0
      %v2101 = vsel %vm2063, %v2016, 0
      %v2104 = vsel %vm2063, %v2017, 0
      %v2107 = vsel %vm2063, %v2018, 0
      %v2110 = vsel %vm2063, %v2019, 0
      %vm2112 = vcmask 1043456
      %v2114 = vsel %vm2112, %v2058, 0
      %2116 = vmatprep.subr.bf16.mxu0 0
      %2117 = vmatpush1.bf16.msra.mxu0 0
      %2118 = vmatprep.subr.bf16.mxu0 0
      %2119 = vmatpush1.bf16.msra.mxu0 0
      %2120 = vmatprep.subr.bf16.mxu0 0
      %2121 = vmatpush1.bf16.msra.mxu0 0
      %2122 = vmatprep.subr.bf16.mxu0 0
      %2123 = vmatpush1.bf16.msra.mxu0 %v2114
      %2124 = vmatprep.subr.bf16.mxu0 0
      %2125 = vmatpush1.bf16.msra.mxu0 %v2057
      %2126 = vmatprep.subr.bf16.mxu0 0
      %2127 = vmatpush1.bf16.msra.mxu0 %v2056
      %2128 = vmatprep.subr.bf16.mxu0 0
      %2129 = vmatpush1.bf16.msra.mxu0 %v2055
      %2130 = vmatprep.subr.bf16.mxu0 0
      %2131 = vmatpush1.bf16.msra.mxu0 %v2054
      %2132 = vmatprep.subr.bf16.mxu0 0
      %2133 = vmatpush2.bf16.msra.mxu0 0
      %2134 = vmatprep.subr.bf16.mxu0 0
      %2135 = vmatpush2.bf16.msra.mxu0 0
      %2136 = vmatprep.subr.bf16.mxu0 0
      %2137 = vmatpush2.bf16.msra.mxu0 0
      %2138 = vmatprep.subr.bf16.mxu0 0
      %2139 = vmatpush2.bf16.msra.mxu0 0
      %2140 = vmatprep.subr.bf16.mxu0 0
      %2141 = vmatpush2.bf16.msra.mxu0 0
      %2142 = vmatprep.subr.bf16.mxu0 0
      %2143 = vmatpush2.bf16.msra.mxu0 0
      %2144 = vmatprep.subr.bf16.mxu0 0
      %2145 = vmatpush2.bf16.msra.mxu0 0
      %2146 = vmatprep.subr.bf16.mxu0 0
      %2147 = vmatpush2.bf16.msra.mxu0 0
      %2148 = vmatprep.mubr.bf16.mxu0 0
      %2149 = vmatmul.mubr.bf16.gmra.mxu0 %v2065
      %v2150 = vpop.f32.mrf.mxu0
      %v2151 = vadd.f32 %v2034, %v2150
      %v2152 = vpop.f32.mrf.mxu0
      %v2153 = vpop.f32.mrf.mxu0
      %v2154 = vadd.f32 %v2034, %v2153
      %v2155 = vpop.f32.mrf.mxu0
      %2156 = vmatprep.mubr.bf16.mxu0 0
      %2157 = vmatmul.mubr.bf16.gmra.mxu0 %v2068
      %v2158 = vpop.f32.mrf.mxu0
      %v2159 = vadd.f32 %v2034, %v2158
      %v2160 = vpop.f32.mrf.mxu0
      %v2161 = vpop.f32.mrf.mxu0
      %v2162 = vadd.f32 %v2034, %v2161
      %v2163 = vpop.f32.mrf.mxu0
      %2164 = vmatprep.mubr.bf16.mxu0 0
      %2165 = vmatmul.mubr.bf16.gmra.mxu0 %v2071
      %v2166 = vpop.f32.mrf.mxu0
      %v2167 = vadd.f32 %v2034, %v2166
      %v2168 = vpop.f32.mrf.mxu0
      %v2169 = vpop.f32.mrf.mxu0
      %v2170 = vadd.f32 %v2034, %v2169
      %v2171 = vpop.f32.mrf.mxu0
      %2172 = vmatprep.mubr.bf16.mxu0 0
      %2173 = vmatmul.mubr.bf16.gmra.mxu0 %v2074
      %v2174 = vpop.f32.mrf.mxu0
      %v2175 = vadd.f32 %v2034, %v2174
      %v2176 = vpop.f32.mrf.mxu0
      %v2177 = vpop.f32.mrf.mxu0
      %v2178 = vadd.f32 %v2034, %v2177
      %v2179 = vpop.f32.mrf.mxu0
      %2180 = vmatprep.mubr.bf16.mxu0 0
      %2181 = vmatmul.mubr.bf16.gmra.mxu0 %v2077
      %v2182 = vpop.f32.mrf.mxu0
      %v2183 = vadd.f32 %v2034, %v2182
      %v2184 = vpop.f32.mrf.mxu0
      %v2185 = vpop.f32.mrf.mxu0
      %v2186 = vadd.f32 %v2034, %v2185
      %v2187 = vpop.f32.mrf.mxu0
      %2188 = vmatprep.mubr.bf16.mxu0 0
      %2189 = vmatmul.mubr.bf16.gmra.mxu0 %v2080
      %v2190 = vpop.f32.mrf.mxu0
      %v2191 = vadd.f32 %v2034, %v2190
      %v2192 = vpop.f32.mrf.mxu0
      %v2193 = vpop.f32.mrf.mxu0
      %v2194 = vadd.f32 %v2034, %v2193
      %v2195 = vpop.f32.mrf.mxu0
      %2196 = vmatprep.mubr.bf16.mxu0 0
      %2197 = vmatmul.mubr.bf16.gmra.mxu0 %v2083
      %v2198 = vpop.f32.mrf.mxu0
      %v2199 = vadd.f32 %v2034, %v2198
      %v2200 = vpop.f32.mrf.mxu0
      %v2201 = vpop.f32.mrf.mxu0
      %v2202 = vadd.f32 %v2034, %v2201
      %v2203 = vpop.f32.mrf.mxu0
      %2204 = vmatprep.mubr.bf16.mxu0 0
      %2205 = vmatmul.mubr.bf16.gmra.mxu0 %v2086
      %v2206 = vpop.f32.mrf.mxu0
      %v2207 = vadd.f32 %v2034, %v2206
      %v2208 = vpop.f32.mrf.mxu0
      %v2209 = vpop.f32.mrf.mxu0
      %v2210 = vadd.f32 %v2034, %v2209
      %v2211 = vpop.f32.mrf.mxu0
      %2212 = vmatprep.mubr.bf16.mxu0 0
      %2213 = vmatmul.mubr.bf16.gmra.mxu0 %v2089
      %v2214 = vpop.f32.mrf.mxu0
      %v2215 = vadd.f32 %v2034, %v2214
      %v2216 = vpop.f32.mrf.mxu0
      %v2217 = vpop.f32.mrf.mxu0
      %v2218 = vadd.f32 %v2034, %v2217
      %v2219 = vpop.f32.mrf.mxu0
      %2220 = vmatprep.mubr.bf16.mxu0 0
      %2221 = vmatmul.mubr.bf16.gmra.mxu0 %v2092
      %v2222 = vpop.f32.mrf.mxu0
      %v2223 = vadd.f32 %v2034, %v2222
      %v2224 = vpop.f32.mrf.mxu0
      %v2225 = vpop.f32.mrf.mxu0
      %v2226 = vadd.f32 %v2034, %v2225
      %v2227 = vpop.f32.mrf.mxu0
      %2228 = vmatprep.mubr.bf16.mxu0 0
      %2229 = vmatmul.mubr.bf16.gmra.mxu0 %v2095
      %v2230 = vpop.f32.mrf.mxu0
      %v2231 = vadd.f32 %v2034, %v2230
      %v2232 = vpop.f32.mrf.mxu0
      %v2233 = vpop.f32.mrf.mxu0
      %v2234 = vadd.f32 %v2034, %v2233
      %v2235 = vpop.f32.mrf.mxu0
      %2236 = vmatprep.mubr.bf16.mxu0 0
      %2237 = vmatmul.mubr.bf16.gmra.mxu0 %v2098
      %v2238 = vpop.f32.mrf.mxu0
      %v2239 = vadd.f32 %v2034, %v2238
      %v2240 = vpop.f32.mrf.mxu0
      %v2241 = vpop.f32.mrf.mxu0
      %v2242 = vadd.f32 %v2034, %v2241
      %v2243 = vpop.f32.mrf.mxu0
      %2244 = vmatprep.mubr.bf16.mxu0 0
      %2245 = vmatmul.mubr.bf16.gmra.mxu0 %v2101
      %v2246 = vpop.f32.mrf.mxu0
      %v2247 = vadd.f32 %v2034, %v2246
      %v2248 = vpop.f32.mrf.mxu0
      %v2249 = vpop.f32.mrf.mxu0
      %v2250 = vadd.f32 %v2034, %v2249
      %v2251 = vpop.f32.mrf.mxu0
      %2252 = vmatprep.mubr.bf16.mxu0 0
      %2253 = vmatmul.mubr.bf16.gmra.mxu0 %v2104
      %v2254 = vpop.f32.mrf.mxu0
      %v2255 = vadd.f32 %v2034, %v2254
      %v2256 = vpop.f32.mrf.mxu0
      %v2257 = vpop.f32.mrf.mxu0
      %v2258 = vadd.f32 %v2034, %v2257
      %v2259 = vpop.f32.mrf.mxu0
      %2260 = vmatprep.mubr.bf16.mxu0 0
      %2261 = vmatmul.mubr.bf16.gmra.mxu0 %v2107
      %v2262 = vpop.f32.mrf.mxu0
      %v2263 = vadd.f32 %v2034, %v2262
      %v2264 = vpop.f32.mrf.mxu0
      %v2265 = vpop.f32.mrf.mxu0
      %v2266 = vadd.f32 %v2034, %v2265
      %v2267 = vpop.f32.mrf.mxu0
      %2268 = vmatprep.mubr.bf16.mxu0 0
      %2269 = vmatmul.mubr.bf16.gmra.mxu0 %v2110
      %v2270 = vpop.f32.mrf.mxu0
      %v2271 = vadd.f32 %v2034, %v2270
      %v2272 = vpop.f32.mrf.mxu0
      %v2273 = vpop.f32.mrf.mxu0
      %v2274 = vadd.f32 %v2034, %v2273
      %v2275 = vpop.f32.mrf.mxu0
      %2276 = vdwg.mxu0
      %v2277 = vmax.f32 %v2151, 0.0
      %v2278 = vmax.f32 %v2154, 0.0
      %v2279 = vmax.f32 %v2159, 0.0
      %v2280 = vmax.f32 %v2162, 0.0
      %v2281 = vmax.f32 %v2167, 0.0
      %v2282 = vmax.f32 %v2170, 0.0
      %v2283 = vmax.f32 %v2175, 0.0
      %v2284 = vmax.f32 %v2178, 0.0
      %v2285 = vmax.f32 %v2183, 0.0
      %v2286 = vmax.f32 %v2186, 0.0
      %v2287 = vmax.f32 %v2191, 0.0
      %v2288 = vmax.f32 %v2194, 0.0
      %v2289 = vmax.f32 %v2199, 0.0
      %v2290 = vmax.f32 %v2202, 0.0
      %v2291 = vmax.f32 %v2207, 0.0
      %v2292 = vmax.f32 %v2210, 0.0
      %v2293 = vmax.f32 %v2215, 0.0
      %v2294 = vmax.f32 %v2218, 0.0
      %v2295 = vmax.f32 %v2223, 0.0
      %v2296 = vmax.f32 %v2226, 0.0
      %v2297 = vmax.f32 %v2231, 0.0
      %v2298 = vmax.f32 %v2234, 0.0
      %v2299 = vmax.f32 %v2239, 0.0
      %v2300 = vmax.f32 %v2242, 0.0
      %v2301 = vmax.f32 %v2247, 0.0
      %v2302 = vmax.f32 %v2250, 0.0
      %v2303 = vmax.f32 %v2255, 0.0
      %v2304 = vmax.f32 %v2258, 0.0
      %v2305 = vmax.f32 %v2263, 0.0
      %v2306 = vmax.f32 %v2266, 0.0
      %v2307 = vmax.f32 %v2271, 0.0
      %v2308 = vmax.f32 %v2274, 0.0
      %v2309 = vld [vmem:[%s402] sm:$0x1]
      %v2310 = vsel %vm1740, %v2277, 0.0
      %v2311 = vsel %vm1740, %v2278, 0.0
      %v2312 = vadd.f32 %v2310, %v2311
      %v2313 = vsel %vm1740, %v2279, 0.0
      %v2314 = vadd.f32 %v2312, %v2313
      %v2315 = vsel %vm1740, %v2280, 0.0
      %v2316 = vadd.f32 %v2314, %v2315
      %v2317 = vsel %vm1740, %v2281, 0.0
      %v2318 = vadd.f32 %v2316, %v2317
      %v2319 = vsel %vm1740, %v2282, 0.0
      %v2320 = vadd.f32 %v2318, %v2319
      %v2321 = vsel %vm1740, %v2283, 0.0
      %v2322 = vadd.f32 %v2320, %v2321
      %v2323 = vsel %vm1740, %v2284, 0.0
      %v2324 = vadd.f32 %v2322, %v2323
      %v2325 = vsel %vm1740, %v2285, 0.0
      %v2326 = vadd.f32 %v2324, %v2325
      %v2327 = vsel %vm1740, %v2286, 0.0
      %v2328 = vadd.f32 %v2326, %v2327
      %v2329 = vsel %vm1740, %v2287, 0.0
      %v2330 = vadd.f32 %v2328, %v2329
      %v2331 = vsel %vm1740, %v2288, 0.0
      %v2332 = vadd.f32 %v2330, %v2331
      %v2333 = vsel %vm1740, %v2289, 0.0
      %v2334 = vadd.f32 %v2332, %v2333
      %v2335 = vsel %vm1740, %v2290, 0.0
      %v2336 = vadd.f32 %v2334, %v2335
      %v2337 = vsel %vm1740, %v2291, 0.0
      %v2338 = vadd.f32 %v2336, %v2337
      %v2339 = vsel %vm1740, %v2292, 0.0
      %v2340 = vadd.f32 %v2338, %v2339
      %v2341 = vsel %vm1740, %v2293, 0.0
      %v2342 = vadd.f32 %v2340, %v2341
      %v2343 = vsel %vm1740, %v2294, 0.0
      %v2344 = vadd.f32 %v2342, %v2343
      %v2345 = vsel %vm1740, %v2295, 0.0
      %v2346 = vadd.f32 %v2344, %v2345
      %v2347 = vsel %vm1740, %v2296, 0.0
      %v2348 = vadd.f32 %v2346, %v2347
      %v2349 = vsel %vm1740, %v2297, 0.0
      %v2350 = vadd.f32 %v2348, %v2349
      %v2351 = vsel %vm1740, %v2298, 0.0
      %v2352 = vadd.f32 %v2350, %v2351
      %v2353 = vsel %vm1740, %v2299, 0.0
      %v2354 = vadd.f32 %v2352, %v2353
      %v2355 = vsel %vm1740, %v2300, 0.0
      %v2356 = vadd.f32 %v2354, %v2355
      %v2357 = vsel %vm1740, %v2301, 0.0
      %v2358 = vadd.f32 %v2356, %v2357
      %v2359 = vsel %vm1740, %v2302, 0.0
      %v2360 = vadd.f32 %v2358, %v2359
      %v2361 = vsel %vm1740, %v2303, 0.0
      %v2362 = vadd.f32 %v2360, %v2361
      %v2363 = vsel %vm1740, %v2304, 0.0
      %v2364 = vadd.f32 %v2362, %v2363
      %v2365 = vsel %vm1740, %v2305, 0.0
      %v2366 = vadd.f32 %v2364, %v2365
      %v2367 = vsel %vm1740, %v2306, 0.0
      %v2368 = vadd.f32 %v2366, %v2367
      %v2369 = vsel %vm1740, %v2307, 0.0
      %v2370 = vadd.f32 %v2368, %v2369
      %v2371 = vsel %vm1740, %v2308, 0.0
      %v2372 = vadd.f32 %v2370, %v2371
      %v2373 = vrot.slane %v2372, 4
      %v2374 = vadd.f32 %v2372, %v2373
      %v2375 = vrot.slane %v2374, 2
      %v2376 = vadd.f32 %v2374, %v2375
      %v2377 = vrot.slane %v2376, 1
      %v2378 = vadd.f32 %v2376, %v2377
      %v2379 = vadd.f32 %v2309, %v2378
      %vm2380 = vcmask 57344
      %2381 = vst.msk [vmem:[%s402] sm:$0x1] %vm2380, %v2379
      %v2382 = vld [vmem:[%s405] sm:$0x1]
      %v2383 = vmul.f32 %v2277, %v2277
      %v2384 = vmul.f32 %v2278, %v2278
      %v2385 = vmul.f32 %v2279, %v2279
      %v2386 = vmul.f32 %v2280, %v2280
      %v2387 = vmul.f32 %v2281, %v2281
      %v2388 = vmul.f32 %v2282, %v2282
      %v2389 = vmul.f32 %v2283, %v2283
      %v2390 = vmul.f32 %v2284, %v2284
      %v2391 = vmul.f32 %v2285, %v2285
      %v2392 = vmul.f32 %v2286, %v2286
      %v2393 = vmul.f32 %v2287, %v2287
      %v2394 = vmul.f32 %v2288, %v2288
      %v2395 = vmul.f32 %v2289, %v2289
      %v2396 = vmul.f32 %v2290, %v2290
      %v2397 = vmul.f32 %v2291, %v2291
      %v2398 = vmul.f32 %v2292, %v2292
      %v2399 = vmul.f32 %v2293, %v2293
      %v2400 = vmul.f32 %v2294, %v2294
      %v2401 = vmul.f32 %v2295, %v2295
      %v2402 = vmul.f32 %v2296, %v2296
      %v2403 = vmul.f32 %v2297, %v2297
      %v2404 = vmul.f32 %v2298, %v2298
      %v2405 = vmul.f32 %v2299, %v2299
      %v2406 = vmul.f32 %v2300, %v2300
      %v2407 = vmul.f32 %v2301, %v2301
      %v2408 = vmul.f32 %v2302, %v2302
      %v2409 = vmul.f32 %v2303, %v2303
      %v2410 = vmul.f32 %v2304, %v2304
      %v2411 = vmul.f32 %v2305, %v2305
      %v2412 = vmul.f32 %v2306, %v2306
      %v2413 = vmul.f32 %v2307, %v2307
      %v2414 = vmul.f32 %v2308, %v2308
      %v2415 = vsel %vm1740, %v2383, 0.0
      %v2416 = vsel %vm1740, %v2384, 0.0
      %v2417 = vadd.f32 %v2415, %v2416
      %v2418 = vsel %vm1740, %v2385, 0.0
      %v2419 = vadd.f32 %v2417, %v2418
      %v2420 = vsel %vm1740, %v2386, 0.0
      %v2421 = vadd.f32 %v2419, %v2420
      %v2422 = vsel %vm1740, %v2387, 0.0
      %v2423 = vadd.f32 %v2421, %v2422
      %v2424 = vsel %vm1740, %v2388, 0.0
      %v2425 = vadd.f32 %v2423, %v2424
      %v2426 = vsel %vm1740, %v2389, 0.0
      %v2427 = vadd.f32 %v2425, %v2426
      %v2428 = vsel %vm1740, %v2390, 0.0
      %v2429 = vadd.f32 %v2427, %v2428
      %v2430 = vsel %vm1740, %v2391, 0.0
      %v2431 = vadd.f32 %v2429, %v2430
      %v2432 = vsel %vm1740, %v2392, 0.0
      %v2433 = vadd.f32 %v2431, %v2432
      %v2434 = vsel %vm1740, %v2393, 0.0
      %v2435 = vadd.f32 %v2433, %v2434
      %v2436 = vsel %vm1740, %v2394, 0.0
      %v2437 = vadd.f32 %v2435, %v2436
      %v2438 = vsel %vm1740, %v2395, 0.0
      %v2439 = vadd.f32 %v2437, %v2438
      %v2440 = vsel %vm1740, %v2396, 0.0
      %v2441 = vadd.f32 %v2439, %v2440
      %v2442 = vsel %vm1740, %v2397, 0.0
      %v2443 = vadd.f32 %v2441, %v2442
      %v2444 = vsel %vm1740, %v2398, 0.0
      %v2445 = vadd.f32 %v2443, %v2444
      %v2446 = vsel %vm1740, %v2399, 0.0
      %v2447 = vadd.f32 %v2445, %v2446
      %v2448 = vsel %vm1740, %v2400, 0.0
      %v2449 = vadd.f32 %v2447, %v2448
      %v2450 = vsel %vm1740, %v2401, 0.0
      %v2451 = vadd.f32 %v2449, %v2450
      %v2452 = vsel %vm1740, %v2402, 0.0
      %v2453 = vadd.f32 %v2451, %v2452
      %v2454 = vsel %vm1740, %v2403, 0.0
      %v2455 = vadd.f32 %v2453, %v2454
      %v2456 = vsel %vm1740, %v2404, 0.0
      %v2457 = vadd.f32 %v2455, %v2456
      %v2458 = vsel %vm1740, %v2405, 0.0
      %v2459 = vadd.f32 %v2457, %v2458
      %v2460 = vsel %vm1740, %v2406, 0.0
      %v2461 = vadd.f32 %v2459, %v2460
      %v2462 = vsel %vm1740, %v2407, 0.0
      %v2463 = vadd.f32 %v2461, %v2462
      %v2464 = vsel %vm1740, %v2408, 0.0
      %v2465 = vadd.f32 %v2463, %v2464
      %v2466 = vsel %vm1740, %v2409, 0.0
      %v2467 = vadd.f32 %v2465, %v2466
      %v2468 = vsel %vm1740, %v2410, 0.0
      %v2469 = vadd.f32 %v2467, %v2468
      %v2470 = vsel %vm1740, %v2411, 0.0
      %v2471 = vadd.f32 %v2469, %v2470
      %v2472 = vsel %vm1740, %v2412, 0.0
      %v2473 = vadd.f32 %v2471, %v2472
      %v2474 = vsel %vm1740, %v2413, 0.0
      %v2475 = vadd.f32 %v2473, %v2474
      %v2476 = vsel %vm1740, %v2414, 0.0
      %v2477 = vadd.f32 %v2475, %v2476
      %v2478 = vrot.slane %v2477, 4
      %v2479 = vadd.f32 %v2477, %v2478
      %v2480 = vrot.slane %v2479, 2
      %v2481 = vadd.f32 %v2479, %v2480
      %v2482 = vrot.slane %v2481, 1
      %v2483 = vadd.f32 %v2481, %v2482
      %v2484 = vadd.f32 %v2382, %v2483
      %2485 = vst.msk [vmem:[%s405] sm:$0x1] %vm2380, %v2484
      %v2486 = vld [vmem:[%s391] sm:$0xff]
      %v2487 = vld [vmem:[%s391 + $0x8] sm:$0xff]
      %v2488 = vld [vmem:[%s391 + $0x10] sm:$0xff]
      %v2489 = vld [vmem:[%s391 + $0x18] sm:$0xff]
      %v2490 = vld [vmem:[%s391 + $0x20] sm:$0xff]
      %v2491 = vld [vmem:[%s391 + $0x28] sm:$0xff]
      %v2492 = vld [vmem:[%s391 + $0x30] sm:$0xff]
      %v2493 = vld [vmem:[%s391 + $0x38] sm:$0xff]
      %v2494 = vld [vmem:[%s391 + $0x40] sm:$0xff]
      %v2495 = vld [vmem:[%s391 + $0x48] sm:$0xff]
      %v2496 = vld [vmem:[%s391 + $0x50] sm:$0xff]
      %v2497 = vld [vmem:[%s391 + $0x58] sm:$0xff]
      %v2498 = vld [vmem:[%s391 + $0x60] sm:$0xff]
      %v2499 = vld [vmem:[%s391 + $0x68] sm:$0xff]
      %v2500 = vld [vmem:[%s391 + $0x70] sm:$0xff]
      %v2501 = vld [vmem:[%s391 + $0x78] sm:$0xff]
      %v2502 = vld [vmem:[%s391 + $0x80] sm:$0xff]
      %v2503 = vld [vmem:[%s391 + $0x88] sm:$0xff]
      %v2504 = vld [vmem:[%s391 + $0x90] sm:$0xff]
      %v2505 = vld [vmem:[%s391 + $0x98] sm:$0xff]
      %v2506 = vld [vmem:[%s391 + $0xa0] sm:$0xff]
      %v2507 = vld [vmem:[%s391 + $0xa8] sm:$0xff]
      %v2508 = vld [vmem:[%s391 + $0xb0] sm:$0xff]
      %v2509 = vld [vmem:[%s391 + $0xb8] sm:$0xff]
      %v2510 = vld [vmem:[%s391 + $0xc0] sm:$0xff]
      %v2511 = vld [vmem:[%s391 + $0xc8] sm:$0xff]
      %v2512 = vld [vmem:[%s391 + $0xd0] sm:$0xff]
      %v2513 = vld [vmem:[%s391 + $0xd8] sm:$0xff]
      %v2514 = vld [vmem:[%s391 + $0xe0] sm:$0xff]
      %v2515 = vld [vmem:[%s391 + $0xe8] sm:$0xff]
      %v2516 = vld [vmem:[%s391 + $0xf0] sm:$0xff]
      %v2517 = vld [vmem:[%s391 + $0xf8] sm:$0xff]
      %v2518 = vld [vmem:[%s408] sm:$0x1]
      %v2519 = vmul.f32 %v2486, %v2277
      %v2520 = vmul.f32 %v2487, %v2278
      %v2521 = vmul.f32 %v2488, %v2279
      %v2522 = vmul.f32 %v2489, %v2280
      %v2523 = vmul.f32 %v2490, %v2281
      %v2524 = vmul.f32 %v2491, %v2282
      %v2525 = vmul.f32 %v2492, %v2283
      %v2526 = vmul.f32 %v2493, %v2284
      %v2527 = vmul.f32 %v2494, %v2285
      %v2528 = vmul.f32 %v2495, %v2286
      %v2529 = vmul.f32 %v2496, %v2287
      %v2530 = vmul.f32 %v2497, %v2288
      %v2531 = vmul.f32 %v2498, %v2289
      %v2532 = vmul.f32 %v2499, %v2290
      %v2533 = vmul.f32 %v2500, %v2291
      %v2534 = vmul.f32 %v2501, %v2292
      %v2535 = vmul.f32 %v2502, %v2293
      %v2536 = vmul.f32 %v2503, %v2294
      %v2537 = vmul.f32 %v2504, %v2295
      %v2538 = vmul.f32 %v2505, %v2296
      %v2539 = vmul.f32 %v2506, %v2297
      %v2540 = vmul.f32 %v2507, %v2298
      %v2541 = vmul.f32 %v2508, %v2299
      %v2542 = vmul.f32 %v2509, %v2300
      %v2543 = vmul.f32 %v2510, %v2301
      %v2544 = vmul.f32 %v2511, %v2302
      %v2545 = vmul.f32 %v2512, %v2303
      %v2546 = vmul.f32 %v2513, %v2304
      %v2547 = vmul.f32 %v2514, %v2305
      %v2548 = vmul.f32 %v2515, %v2306
      %v2549 = vmul.f32 %v2516, %v2307
      %v2550 = vmul.f32 %v2517, %v2308
      %v2551 = vsel %vm1740, %v2519, 0.0
      %v2552 = vsel %vm1740, %v2520, 0.0
      %v2553 = vadd.f32 %v2551, %v2552
      %v2554 = vsel %vm1740, %v2521, 0.0
      %v2555 = vadd.f32 %v2553, %v2554
      %v2556 = vsel %vm1740, %v2522, 0.0
      %v2557 = vadd.f32 %v2555, %v2556
      %v2558 = vsel %vm1740, %v2523, 0.0
      %v2559 = vadd.f32 %v2557, %v2558
      %v2560 = vsel %vm1740, %v2524, 0.0
      %v2561 = vadd.f32 %v2559, %v2560
      %v2562 = vsel %vm1740, %v2525, 0.0
      %v2563 = vadd.f32 %v2561, %v2562
      %v2564 = vsel %vm1740, %v2526, 0.0
      %v2565 = vadd.f32 %v2563, %v2564
      %v2566 = vsel %vm1740, %v2527, 0.0
      %v2567 = vadd.f32 %v2565, %v2566
      %v2568 = vsel %vm1740, %v2528, 0.0
      %v2569 = vadd.f32 %v2567, %v2568
      %v2570 = vsel %vm1740, %v2529, 0.0
      %v2571 = vadd.f32 %v2569, %v2570
      %v2572 = vsel %vm1740, %v2530, 0.0
      %v2573 = vadd.f32 %v2571, %v2572
      %v2574 = vsel %vm1740, %v2531, 0.0
      %v2575 = vadd.f32 %v2573, %v2574
      %v2576 = vsel %vm1740, %v2532, 0.0
      %v2577 = vadd.f32 %v2575, %v2576
      %v2578 = vsel %vm1740, %v2533, 0.0
      %v2579 = vadd.f32 %v2577, %v2578
      %v2580 = vsel %vm1740, %v2534, 0.0
      %v2581 = vadd.f32 %v2579, %v2580
      %v2582 = vsel %vm1740, %v2535, 0.0
      %v2583 = vadd.f32 %v2581, %v2582
      %v2584 = vsel %vm1740, %v2536, 0.0
      %v2585 = vadd.f32 %v2583, %v2584
      %v2586 = vsel %vm1740, %v2537, 0.0
      %v2587 = vadd.f32 %v2585, %v2586
      %v2588 = vsel %vm1740, %v2538, 0.0
      %v2589 = vadd.f32 %v2587, %v2588
      %v2590 = vsel %vm1740, %v2539, 0.0
      %v2591 = vadd.f32 %v2589, %v2590
      %v2592 = vsel %vm1740, %v2540, 0.0
      %v2593 = vadd.f32 %v2591, %v2592
      %v2594 = vsel %vm1740, %v2541, 0.0
      %v2595 = vadd.f32 %v2593, %v2594
      %v2596 = vsel %vm1740, %v2542, 0.0
      %v2597 = vadd.f32 %v2595, %v2596
      %v2598 = vsel %vm1740, %v2543, 0.0
      %v2599 = vadd.f32 %v2597, %v2598
      %v2600 = vsel %vm1740, %v2544, 0.0
      %v2601 = vadd.f32 %v2599, %v2600
      %v2602 = vsel %vm1740, %v2545, 0.0
      %v2603 = vadd.f32 %v2601, %v2602
      %v2604 = vsel %vm1740, %v2546, 0.0
      %v2605 = vadd.f32 %v2603, %v2604
      %v2606 = vsel %vm1740, %v2547, 0.0
      %v2607 = vadd.f32 %v2605, %v2606
      %v2608 = vsel %vm1740, %v2548, 0.0
      %v2609 = vadd.f32 %v2607, %v2608
      %v2610 = vsel %vm1740, %v2549, 0.0
      %v2611 = vadd.f32 %v2609, %v2610
      %v2612 = vsel %vm1740, %v2550, 0.0
      %v2613 = vadd.f32 %v2611, %v2612
      %v2614 = vrot.slane %v2613, 4
      %v2615 = vadd.f32 %v2613, %v2614
      %v2616 = vrot.slane %v2615, 2
      %v2617 = vadd.f32 %v2615, %v2616
      %v2618 = vrot.slane %v2617, 1
      %v2619 = vadd.f32 %v2617, %v2618
      %v2620 = vadd.f32 %v2518, %v2619
      %2621 = vst.msk [vmem:[%s408] sm:$0x1] %vm2380, %v2620
      %2622 = vst.msk [vmem:[%s398] sm:$0xff] %vm1740, %v2277
      %2623 = vst.msk [vmem:[%s398 + $0x8] sm:$0xff] %vm1740, %v2278
      %2624 = vst.msk [vmem:[%s398 + $0x10] sm:$0xff] %vm1740, %v2279
      %2625 = vst.msk [vmem:[%s398 + $0x18] sm:$0xff] %vm1740, %v2280
      %2626 = vst.msk [vmem:[%s398 + $0x20] sm:$0xff] %vm1740, %v2281
      %2627 = vst.msk [vmem:[%s398 + $0x28] sm:$0xff] %vm1740, %v2282
      %2628 = vst.msk [vmem:[%s398 + $0x30] sm:$0xff] %vm1740, %v2283
      %2629 = vst.msk [vmem:[%s398 + $0x38] sm:$0xff] %vm1740, %v2284
      %2630 = vst.msk [vmem:[%s398 + $0x40] sm:$0xff] %vm1740, %v2285
      %2631 = vst.msk [vmem:[%s398 + $0x48] sm:$0xff] %vm1740, %v2286
      %2632 = vst.msk [vmem:[%s398 + $0x50] sm:$0xff] %vm1740, %v2287
      %2633 = vst.msk [vmem:[%s398 + $0x58] sm:$0xff] %vm1740, %v2288
      %2634 = vst.msk [vmem:[%s398 + $0x60] sm:$0xff] %vm1740, %v2289
      %2635 = vst.msk [vmem:[%s398 + $0x68] sm:$0xff] %vm1740, %v2290
      %2636 = vst.msk [vmem:[%s398 + $0x70] sm:$0xff] %vm1740, %v2291
      %2637 = vst.msk [vmem:[%s398 + $0x78] sm:$0xff] %vm1740, %v2292
      %2638 = vst.msk [vmem:[%s398 + $0x80] sm:$0xff] %vm1740, %v2293
      %2639 = vst.msk [vmem:[%s398 + $0x88] sm:$0xff] %vm1740, %v2294
      %2640 = vst.msk [vmem:[%s398 + $0x90] sm:$0xff] %vm1740, %v2295
      %2641 = vst.msk [vmem:[%s398 + $0x98] sm:$0xff] %vm1740, %v2296
      %2642 = vst.msk [vmem:[%s398 + $0xa0] sm:$0xff] %vm1740, %v2297
      %2643 = vst.msk [vmem:[%s398 + $0xa8] sm:$0xff] %vm1740, %v2298
      %2644 = vst.msk [vmem:[%s398 + $0xb0] sm:$0xff] %vm1740, %v2299
      %2645 = vst.msk [vmem:[%s398 + $0xb8] sm:$0xff] %vm1740, %v2300
      %2646 = vst.msk [vmem:[%s398 + $0xc0] sm:$0xff] %vm1740, %v2301
      %2647 = vst.msk [vmem:[%s398 + $0xc8] sm:$0xff] %vm1740, %v2302
      %2648 = vst.msk [vmem:[%s398 + $0xd0] sm:$0xff] %vm1740, %v2303
      %2649 = vst.msk [vmem:[%s398 + $0xd8] sm:$0xff] %vm1740, %v2304
      %2650 = vst.msk [vmem:[%s398 + $0xe0] sm:$0xff] %vm1740, %v2305
      %2651 = vst.msk [vmem:[%s398 + $0xe8] sm:$0xff] %vm1740, %v2306
      %2652 = vst.msk [vmem:[%s398 + $0xf0] sm:$0xff] %vm1740, %v2307
      %2653 = vst.msk [vmem:[%s398 + $0xf8] sm:$0xff] %vm1740, %v2308
      %s2654 = sadd.s32 %s25, %s26
      %p2655 = scmp.lt.s32.totalorder %s2654, 1
      %s2656 = scalar_select %p2655, %s2654, 1
      %s2657 = smul.addr %s2656, 32
      %s2658 = smul.addr %s2657, 8
      %s2659 = scalar_lea.vmem %s6, %s2658
      %p2660 = scmp.lt.s32.totalorder %s25, 1
      %s2661 = scalar_select %p2660, %s25, 1
      %s2662 = scalar_lea.vmem %s7, %s2661
      %p2663 = scmp.lt.s32.totalorder %s25, 1
      %s2664 = scalar_select %p2663, %s25, 1
      %s2665 = scalar_lea.vmem %s8, %s2664
      %p2666 = scmp.lt.s32.totalorder %s25, 1
      %s2667 = scalar_select %p2666, %s25, 1
      %s2668 = scalar_lea.vmem %s9, %s2667
      // Predicated region
      $region49: #{residual_block_forward.6} parent=43 // pred_check
        %p2669 = pneg %p193
      $region50: #{residual_block_forward.6} parent=43 // pred_check_branch
        %2671 = sbr.rel (%p2669) target = $region52
      $region51: #{residual_block_forward.6} parent=43 // pred_region
        %s2672 = sadd.s32 %s25, %s26
      $region52: #{residual_block_forward.6} parent=43 // pred_fallthru
        _
      // Predicated region
      $region53: #{residual_block_forward.6} parent=43 // pred_check
        %p2673 = pneg %p219
      $region54: #{residual_block_forward.6} parent=43 // pred_check_branch
        %2675 = sbr.rel (%p2673) target = $region56
      $region55: #{residual_block_forward.6} parent=43 // pred_region
        _
      $region56: #{residual_block_forward.6} parent=43 // pred_fallthru
        _
      // Predicated region
      $region57: #{residual_block_forward.6} parent=43 // pred_check
        %p2676 = pneg %p245
      $region58: #{residual_block_forward.6} parent=43 // pred_check_branch
        %2678 = sbr.rel (%p2676) target = $region60
      $region59: #{residual_block_forward.6} parent=43 // pred_region
        _
      $region60: #{residual_block_forward.6} parent=43 // pred_fallthru
        _
      // Predicated region
      $region61: #{residual_block_forward.6} parent=43 // pred_check
        %p2679 = pneg %p271
      $region62: #{residual_block_forward.6} parent=43 // pred_check_branch
        %2681 = sbr.rel (%p2679) target = $region64
      $region63: #{residual_block_forward.6} parent=43 // pred_region
        _
      $region64: #{residual_block_forward.6} parent=43 // pred_fallthru
        _
    $region44: #{residual_block_forward.6} parent=5 // pred_fallthru
      _
    %p2682 = scmp.le.s32.totalorder 2, %s16
    // Predicated region
    $region65: #{residual_block_forward.6} parent=5 // pred_check
      %p2683 = pneg %p2682
    $region66: #{residual_block_forward.6} parent=5 // pred_check_branch
      %2685 = sbr.rel (%p2683) target = $region68
    $region67: #{residual_block_forward.6} parent=5 // pred_region
      %s2686 = ssub.s32 %s16, 2
      // Predicated region
      $region69: #{residual_block_forward.6} parent=67 // pred_check
        %p2687 = pneg %p199
      $region70: #{residual_block_forward.6} parent=67 // pred_check_branch
        %2689 = sbr.rel (%p2687) target = $region72
      $region71: #{residual_block_forward.6} parent=67 // pred_region
        %s2690 = sadd.s32 %s27, %s28
        %p2691 = scmp.lt.s32.totalorder %s2690, 1
        %s2692 = scalar_select %p2691, %s2690, 1
        %s2693 = smul.addr %s2692, 32
        %s2694 = smul.addr %s2693, 8
        %s2695 = scalar_lea.vmem %s6, %s2694
      $region72: #{residual_block_forward.6} parent=67 // pred_fallthru
        _
      // Predicated region
      $region73: #{residual_block_forward.6} parent=67 // pred_check
        %p2696 = pneg %p225
      $region74: #{residual_block_forward.6} parent=67 // pred_check_branch
        %2698 = sbr.rel (%p2696) target = $region76
      $region75: #{residual_block_forward.6} parent=67 // pred_region
        %p2699 = scmp.lt.s32.totalorder %s27, 1
        %s2700 = scalar_select %p2699, %s27, 1
        %s2701 = scalar_lea.vmem %s7, %s2700
      $region76: #{residual_block_forward.6} parent=67 // pred_fallthru
        _
      // Predicated region
      $region77: #{residual_block_forward.6} parent=67 // pred_check
        %p2702 = pneg %p251
      $region78: #{residual_block_forward.6} parent=67 // pred_check_branch
        %2704 = sbr.rel (%p2702) target = $region80
      $region79: #{residual_block_forward.6} parent=67 // pred_region
        %p2705 = scmp.lt.s32.totalorder %s27, 1
        %s2706 = scalar_select %p2705, %s27, 1
        %s2707 = scalar_lea.vmem %s8, %s2706
      $region80: #{residual_block_forward.6} parent=67 // pred_fallthru
        _
      // Predicated region
      $region81: #{residual_block_forward.6} parent=67 // pred_check
        %p2708 = pneg %p277
      $region82: #{residual_block_forward.6} parent=67 // pred_check_branch
        %2710 = sbr.rel (%p2708) target = $region84
      $region83: #{residual_block_forward.6} parent=67 // pred_region
        %p2711 = scmp.lt.s32.totalorder %s27, 1
        %s2712 = scalar_select %p2711, %s27, 1
        %s2713 = scalar_lea.vmem %s9, %s2712
      $region84: #{residual_block_forward.6} parent=67 // pred_fallthru
        _
    $region68: #{residual_block_forward.6} parent=5 // pred_fallthru
      _
  $region6: #{residual_block_forward.6} parent=0 // loop_footer
    %s20 = sadd.s32 1, %s16
  $region7: #{residual_block_forward.6} parent=0 // loop_footer_branch
    %15 = sbr.rel target = $region3
  $region8: #{residual_block_forward.6} parent=0 // loop_exit
    _

</llo_original>
